<compile_context>
chip_gen: v7x
topology: tpu7x:2x2x1
jax: 0.10.0
libtpu: 0.0.40
codegen_flags: <defaults>
</compile_context>

<pallas_src>
import math

import jax
import jax.numpy as jnp
from jax.experimental import pallas as pl
from jax.experimental.pallas import tpu as pltpu


# ----------------------------------------------------------------------------
# Constant-matrix builders (run once, outside the hot path).
# ----------------------------------------------------------------------------

def _interp_matrix(n_in, n_out):
    """(n_out, n_in) bilinear align_corners=True interpolation matrix."""
    if n_in == 1:
        return jnp.ones((n_out, 1), jnp.float32)
    src = jnp.arange(n_out, dtype=jnp.float32) * ((n_in - 1) / (n_out - 1))
    i0 = jnp.clip(jnp.floor(src).astype(jnp.int32), 0, n_in - 1)
    i1 = jnp.minimum(i0 + 1, n_in - 1)
    w1 = src - i0.astype(jnp.float32)
    w0 = 1.0 - w1
    return (w0[:, None] * jax.nn.one_hot(i0, n_in, dtype=jnp.float32)
            + w1[:, None] * jax.nn.one_hot(i1, n_in, dtype=jnp.float32))


def _interp_cols(u, c):
    """Expand a W-interp matrix u (Wout, Win) to lane form (Win*C, Wout*C)."""
    n_out, n_in = u.shape
    t = jnp.einsum("vw,cd->wcvd", u, jnp.eye(c, dtype=jnp.float32))
    return t.reshape(n_in * c, n_out * c)


def _conv_band(w_hwio, w_sp, pad):
    """Banded lane matrices for a stride-1 same-size conv.

    Returns m of shape (KH, w_sp*Cin, w_sp*Cout) such that with x H-padded by
    `pad` rows and flattened to (H + 2*pad, w_sp*Cin),
        out[i, :] = sum_kh x_pad[i + kh, :] @ m[kh]
    equals the conv output (the W zero-padding is folded into the bands).
    """
    kh_, kw_, cin, cout = w_hwio.shape
    jj = jnp.arange(w_sp)[:, None]              # input spatial column
    j = jnp.arange(w_sp)[None, :]               # output spatial column
    kw = jj - j + pad
    valid = ((kw >= 0) & (kw < kw_)).astype(w_hwio.dtype)
    kw_safe = jnp.clip(kw, 0, kw_ - 1)
    band = w_hwio[:, kw_safe, :, :] * valid[None, :, :, None, None]
    band = jnp.transpose(band, (0, 1, 3, 2, 4))  # (KH, jj, Cin, j, Cout)
    return band.reshape(kh_, w_sp * cin, w_sp * cout)


def _pool_row_sel(n_in):
    """(2, n_in//2, n_in): even / odd row selectors for 2x2 max pooling."""
    eye = jnp.eye(n_in, dtype=jnp.float32)
    return jnp.stack([eye[0::2, :], eye[1::2, :]])


def _pool_col_sel(w_sp, c):
    """(2, w_sp*c, (w_sp//2)*c): even / odd column-block (w) selectors."""
    w_out = w_sp // 2
    wo = jnp.arange(w_out)[:, None]
    cc = jnp.arange(c)[None, :]
    cols = (wo * c + cc).reshape(-1)
    rows_e = (2 * wo * c + cc).reshape(-1)
    rows_o = ((2 * wo + 1) * c + cc).reshape(-1)
    base = jnp.zeros((w_sp * c, w_out * c), jnp.float32)
    return jnp.stack([base.at[rows_e, cols].set(1.0),
                      base.at[rows_o, cols].set(1.0)])


# ----------------------------------------------------------------------------
# Parameters (PyTorch layouts / init).
# ----------------------------------------------------------------------------

def init_ded1_params(key, ch):
    """nn.Conv2d-style init for DED1(ch); conv weights stored OIHW."""
    ks = jax.random.split(key, 8)

    def conv(kw_key, kb_key, cout, cin, k):
        bound = 1.0 / math.sqrt(cin * k * k)
        w = jax.random.uniform(kw_key, (cout, cin, k, k), jnp.float32, -bound, bound)
        b = jax.random.uniform(kb_key, (cout,), jnp.float32, -bound, bound)
        return w, b

    w5, b5 = conv(ks[0], ks[1], ch, ch, 5)          # upConv   Conv2d(ch, ch, 5, 1, 2)
    w1, b1 = conv(ks[2], ks[3], ch, 2 * ch, 1)      # downConv Conv2d(2ch, ch, 1, 1, 0)
    w3, b3 = conv(ks[4], ks[5], ch, ch, 3)          # downConv Conv2d(ch, ch, 3, 1, 1)
    wf, bf = conv(ks[6], ks[7], ch, 3 * ch, 3)      # final    Conv2d(3ch, ch, 3, 1, 1)
    return dict(w5=w5, b5=b5, w1=w1, b1=b1, w3=w3, b3=b3, wf=wf, bf=bf,
                gamma=jnp.ones((ch,), jnp.float32),     # GroupNorm affine
                beta=jnp.zeros((ch,), jnp.float32))


# ----------------------------------------------------------------------------
# Factory: precompute constants, define the fused kernel, return jitted forward.
# ----------------------------------------------------------------------------

def build_ded1_forward(params, height, width):
    c = int(params["b5"].shape[0])
    h, w = int(height), int(width)
    assert h % 2 == 0 and w % 2 == 0, "DED1 needs even spatial dims (2x2 pools)"
    groups = c // 4
    assert groups >= 1 and c % groups == 0, "mirrors nn.GroupNorm(ch // 4, ch)"

    wc = w * c
    nb = max(1, 128 // wc)          # batch elements packed along the lane axis
    L1 = nb * wc                    # lanes of an (H, W, C) slab (nb-major)
    L2 = 2 * L1                     # lanes of the 2x-upsampled slab
    Lh = L1 // 2                    # lanes of the 2x-pooled slab
    h2, hh = 2 * h, h // 2

    f32, bf16 = jnp.float32, jnp.bfloat16

    # ---- base (single-sample) constant matrices ----------------------------
    def hwio(w_oihw):
        return jnp.transpose(w_oihw, (2, 3, 1, 0)).astype(f32)

    cw5, cw1, cw3, cwf = (hwio(params["w5"]), hwio(params["w1"]),
                          hwio(params["w3"]), hwio(params["wf"]))

    eye_nb = jnp.eye(nb, dtype=f32)

    def pack_lane(m):                       # block-diagonal over packed samples
        return jnp.kron(eye_nb, m)

    def tile_lane(v, w_sp):                 # per-channel vector -> lane row
        return jnp.tile(v.astype(f32), (nb * w_sp,)).reshape(1, -1)

    # upConv: upsample -> 5x5 conv (pad 2) -> 2x2 maxpool
    uy1 = _interp_matrix(h, h2)                                        # (2H, H)
    ux1t = pack_lane(_interp_cols(_interp_matrix(w, 2 * w), c))        # (L1, L2)
    m5s = jnp.concatenate(
        [pack_lane(b) for b in _conv_band(cw5, 2 * w, pad=2)], axis=0)  # (5*L2, L2)
    b5 = tile_lane(params["b5"], 2 * w)                                # (1, L2)
    p1r = _pool_row_sel(h2)                                            # (2, H, 2H)
    p1c = jnp.stack([pack_lane(m) for m in _pool_col_sel(2 * w, c)])   # (2, L2, L1)
    # downConv: 1x1 conv on cat([x, f1]) -> pool -> 3x3 conv -> upsample
    m1s = jnp.concatenate(
        [pack_lane(_conv_band(cw1[:, :, :c, :], w, pad=0)[0]),
         pack_lane(_conv_band(cw1[:, :, c:, :], w, pad=0)[0])], axis=0)  # (2L1, L1)
    b1 = tile_lane(params["b1"], w)
    p2r = _pool_row_sel(h)                                             # (2, H/2, H)
    p2c = jnp.stack([pack_lane(m) for m in _pool_col_sel(w, c)])       # (2, L1, Lh)
    m3s = jnp.concatenate(
        [pack_lane(b) for b in _conv_band(cw3, w // 2, pad=1)], axis=0)  # (3Lh, Lh)
    b3 = tile_lane(params["b3"], w // 2)
    uy2 = _interp_matrix(hh, h)                                        # (H, H/2)
    ux2t = pack_lane(_interp_cols(_interp_matrix(w // 2, w), c))       # (Lh, L1)
    # final: 3x3 conv on cat([f0, f1, f2]) -> GroupNorm -> ReLU
    mfs = jnp.concatenate(
        [pack_lane(_conv_band(cwf[:, :, p * c:(p + 1) * c, :], w, pad=1)[k])
         for p in range(3) for k in range(3)], axis=0)                 # (9L1, L1)
    bfb = tile_lane(params["bf"], w)
    grp = jnp.tile(jnp.repeat(jnp.arange(groups), c // groups), (w,))
    gavg = pack_lane((grp[:, None] == grp[None, :]).astype(f32)
                     / float(h * w * (c // groups)))                   # (L1, L1)
    gaff = jnp.concatenate([tile_lane(params["gamma"], w),
                            tile_lane(params["beta"], w)], axis=0)     # (2, L1)

    # ---- pack the lane-space constants into 3 bf16 buffers ------------------
    # (fewer DMA streams; per-entry row offsets padded to 16 so every in-kernel
    #  static slice stays aligned to the bf16 (16, 128) tile grid)
    def make_pack(entries):
        offs, chunks, row = {}, [], 0
        for name, a in entries:
            r, lanes = a.shape
            rp = -(-r // 16) * 16
            chunks.append(jnp.zeros((rp, lanes), f32).at[:r, :].set(a))
            offs[name] = (row, r)
            row += rp
        return jnp.concatenate(chunks, axis=0).astype(bf16), offs

    packA, offA = make_pack([("ux1t", ux1t), ("m5s", m5s), ("b5", b5)])
    packB, offB = make_pack([("p1c0", p1c[0]), ("p1c1", p1c[1]), ("m1s", m1s),
                             ("b1", b1), ("ux2t", ux2t), ("mfs", mfs),
                             ("bf", bfb), ("gavg", gavg), ("gaff", gaff)])
    packC, offC = make_pack([("p2c0", p2c[0]), ("p2c1", p2c[1]),
                             ("m3s", m3s), ("b3", b3)])
    consts = (uy1, uy2, p1r, p2r, packA, packB, packC)

    # ---- the fused kernel: one grid step == nb lane-packed batch elements ---
    def kernel(x_ref, uy1_ref, uy2_ref, p1r_ref, p2r_ref,
               pA_ref, pB_ref, pC_ref, o_ref, st5, st3, stf):

        def A(name):
            o, r = offA[name]
            return pA_ref[o:o + r, :]

        def B(name):
            o, r = offB[name]
            return pB_ref[o:o + r, :]

        def C(name):
            o, r = offC[name]
            return pC_ref[o:o + r, :]

        def mm(a, b):  # MXU matmul: bf16 operands, f32 accumulate
            return jnp.dot(a.astype(bf16), b.astype(bf16),
                           preferred_element_type=f32)

        def fill_tap(ref, q, lanes, src, d, rows):
            # ref[:, q*lanes:(q+1)*lanes] = src shifted by d rows; zero-fill
            # only the 1-2 halo rows (static slices, every grid step).
            c0 = q * lanes
            if d < 0:
                ref[0:-d, c0:c0 + lanes] = jnp.zeros((-d, lanes), f32)
                ref[-d:rows, c0:c0 + lanes] = src[0:rows + d]
            elif d > 0:
                ref[0:rows - d, c0:c0 + lanes] = src[d:rows]
                ref[rows - d:rows, c0:c0 + lanes] = jnp.zeros((d, lanes), f32)
            else:
                ref[:, c0:c0 + lanes] = src

        x = x_ref[0]                                          # f0: (H, L1) f32

        # --- upConv: bilinear 2x upsample == row- & lane-interp matmuls ------
        xu = mm(mm(uy1_ref[...], x), A("ux1t"))               # (2H, L2)
        # 5x5 conv (pad 2): one (2H, 5*L2) @ (5*L2, L2) stacked MXU matmul
        for kh in range(5):
            fill_tap(st5, kh, L2, xu, kh - 2, h2)
        c1 = mm(st5[...], A("m5s")) + A("b5")
        # 2x2 max pool via tiny 0/1 selector matmuls
        hm1 = jnp.maximum(mm(p1r_ref[0], c1), mm(p1r_ref[1], c1))
        f1 = jnp.maximum(mm(hm1, B("p1c0")), mm(hm1, B("p1c1")))   # (H, L1)

        # --- downConv --------------------------------------------------------
        # 1x1 conv on cat([x, f1], C): weights stacked along K, no concat in HBM
        d0 = mm(jnp.concatenate([x, f1], axis=1), B("m1s")) + B("b1")
        hm2 = jnp.maximum(mm(p2r_ref[0], d0), mm(p2r_ref[1], d0))
        d2 = jnp.maximum(mm(hm2, C("p2c0")), mm(hm2, C("p2c1")))   # (H/2, Lh)
        for kh in range(3):                                        # 3x3 conv
            fill_tap(st3, kh, Lh, d2, kh - 1, hh)
        d3 = mm(st3[...], C("m3s")) + C("b3")
        f2 = mm(mm(uy2_ref[...], d3), B("ux2t"))                   # (H, L1)

        # --- final: 3x3 conv on cat([f0, f1, f2]) as one 9-tap stacked matmul
        for p, part in enumerate((x, f1, f2)):
            for kh in range(3):
                fill_tap(stf, 3 * p + kh, L1, part, kh - 1, h)
        y = mm(stf[...], B("mfs")) + B("bf")                       # (H, L1)

        # --- GroupNorm(ch//4, ch) + ReLU: row sums first, one tiny matmul ----
        s1 = jnp.sum(y, axis=0, keepdims=True)
        s2 = jnp.sum(y * y, axis=0, keepdims=True)
        stats = mm(jnp.concatenate([s1, s2], axis=0), B("gavg"))   # (2, L1)
        mean_l = stats[0:1, :]
        var_l = stats[1:2, :] - mean_l * mean_l
        inv_l = jax.lax.rsqrt(var_l + 1e-5)
        ga = B("gaff").astype(f32)
        o_ref[0] = jnp.maximum((y - mean_l) * inv_l * ga[0:1, :] + ga[1:2, :],
                               0.0)

    def const_spec(a):
        nd = a.ndim
        return pl.BlockSpec(a.shape, lambda i, _nd=nd: (0,) * _nd)

    @jax.jit
    def forward(x_nchw):
        n = x_nchw.shape[0]
        assert x_nchw.shape[1:] == (c, h, w), x_nchw.shape
        n_pad = -(-n // nb) * nb
        x_nhwc = jnp.transpose(x_nchw, (0, 2, 3, 1)).astype(f32)
        if n_pad != n:                               # pad batch to multiple of nb
            x_nhwc = jnp.concatenate(
                [x_nhwc, jnp.zeros((n_pad - n, h, w, c), f32)], axis=0)
        g = n_pad // nb
        # NCHW -> lane-packed slab (g, H, nb*W*C): layout plumbing, done once.
        x_pack = (x_nhwc.reshape(g, nb, h, wc)
                  .transpose(0, 2, 1, 3).reshape(g, h, L1))

        out = pl.pallas_call(
            kernel,
            out_shape=jax.ShapeDtypeStruct((g, h, L1), f32),
            grid=(g,),
            in_specs=[pl.BlockSpec((1, h, L1), lambda i: (i, 0, 0))]
                     + [const_spec(a) for a in consts],
            out_specs=pl.BlockSpec((1, h, L1), lambda i: (i, 0, 0)),
            scratch_shapes=[
                pltpu.VMEM((h2, 5 * L2), f32),   # 5x5-conv kh-stacked rows
                pltpu.VMEM((hh, 3 * Lh), f32),   # 3x3-conv kh-stacked rows
                pltpu.VMEM((h, 9 * L1), f32),    # final-conv (part, kh) stack
            ],
            compiler_params=pltpu.CompilerParams(
                dimension_semantics=("parallel",),
                vmem_limit_bytes=32 * 1024 * 1024),
        )(x_pack, *consts)

        out = (out.reshape(g, h, nb, w, c).transpose(0, 2, 1, 3, 4)
               .reshape(n_pad, h, w, c)[:n])
        return jnp.transpose(out, (0, 3, 1, 2))

    return forward


# ----------------------------------------------------------------------------
# Pure-JAX reference (mirrors the PyTorch module op-by-op) for validation.
# ----------------------------------------------------------------------------

def _ref_upsample2x(x):
    n, h, w, c = x.shape

    def coords(n_in, n_out):
        src = jnp.arange(n_out, dtype=jnp.float32) * ((n_in - 1) / (n_out - 1))
        i0 = jnp.clip(jnp.floor(src).astype(jnp.int32), 0, n_in - 1)
        i1 = jnp.minimum(i0 + 1, n_in - 1)
        return i0, i1, src - i0.astype(jnp.float32)

    y0, y1, wy = coords(h, 2 * h)
    x0, x1, wx = coords(w, 2 * w)
    wy = wy[None, :, None, None]
    wx = wx[None, None, :, None]
    top = x[:, y0][:, :, x0] * (1 - wx) + x[:, y0][:, :, x1] * wx
    bot = x[:, y1][:, :, x0] * (1 - wx) + x[:, y1][:, :, x1] * wx
    return top * (1 - wy) + bot * wy


def _ref_conv(x, w_oihw, b, pad):
    w_hwio = jnp.transpose(w_oihw, (2, 3, 1, 0))
    y = jax.lax.conv_general_dilated(
        x, w_hwio, window_strides=(1, 1), padding=[(pad, pad), (pad, pad)],
        dimension_numbers=("NHWC", "HWIO", "NHWC"))
    return y + b[None, None, None, :]


def _ref_pool(x):
    n, h, w, c = x.shape
    return jnp.max(x.reshape(n, h // 2, 2, w // 2, 2, c), axis=(2, 4))


@jax.jit
def ded1_reference(params, x_nchw):
    x = jnp.transpose(x_nchw, (0, 2, 3, 1))
    f0 = x
    f1 = _ref_pool(_ref_conv(_ref_upsample2x(x), params["w5"], params["b5"], 2))
    f2 = jnp.concatenate([x, f1], axis=-1)
    f2 = _ref_conv(f2, params["w1"], params["b1"], 0)
    f2 = _ref_pool(f2)
    f2 = _ref_conv(f2, params["w3"], params["b3"], 1)
    f2 = _ref_upsample2x(f2)
    f = jnp.concatenate([f0, f1, f2], axis=-1)
    y = _ref_conv(f, params["wf"], params["bf"], 1)
    n, h, w, c = y.shape
    g = c // 4
    yg = y.reshape(n, h, w, g, c // g)
    mean = jnp.mean(yg, axis=(1, 2, 4), keepdims=True)
    var = jnp.mean(jnp.square(yg - mean), axis=(1, 2, 4), keepdims=True)
    yn = ((yg - mean) / jnp.sqrt(var + 1e-5)).reshape(n, h, w, c)
    out = jnp.maximum(yn * params["gamma"] + params["beta"], 0.0)
    return jnp.transpose(out, (0, 3, 1, 2))


# ----------------------------------------------------------------------------

if __name__ == "__main__":
    key = jax.random.PRNGKey(0)
    k_par, k_x = jax.random.split(key)

    batch, ch, height, width = 2, 4, 16, 16
    params = init_ded1_params(k_par, ch)
    x = jax.random.normal(k_x, (batch, ch, height, width), jnp.float32)  # NCHW

    ded1_forward = build_ded1_forward(params, height, width)  # one-time prep
    out = ded1_forward(x)
    jax.block_until_ready(out)
    assert out.shape == (batch, ch, height, width), out.shape

    # Validate against a straightforward JAX composition of the PyTorch ops.
    # Tolerance covers explicit bf16 MXU operands on the kernel side (per the
    # v6e/v7x perf guidance) vs the default-precision f32 reference, compounded
    # through ~10 chained matmuls and the GroupNorm rescale; logic bugs would
    # produce O(1) errors.
    ref = ded1_reference(params, x)
    err = float(jnp.max(jnp.abs(out - ref)))
    assert err < 1e-1, f"max abs error vs reference: {err}"

    print("KERNEL_OK")
</pallas_src>

<mosaic_0001>
module attributes {stable_mosaic.version = 11 : i64} {
  func.func @kernel(%arg0: i32, %arg1: memref<1x16x128xf32, #tpu.memory_space<vmem>>, %arg2: memref<32x16xf32, #tpu.memory_space<vmem>>, %arg3: memref<16x8xf32, #tpu.memory_space<vmem>>, %arg4: memref<2x16x32xf32, #tpu.memory_space<vmem>>, %arg5: memref<2x8x16xf32, #tpu.memory_space<vmem>>, %arg6: memref<1424x256xbf16, #tpu.memory_space<vmem>>, %arg7: memref<2160x128xbf16, #tpu.memory_space<vmem>>, %arg8: memref<464x64xbf16, #tpu.memory_space<vmem>>, %arg9: memref<1x16x128xf32, #tpu.memory_space<vmem>>, %arg10: memref<32x1280xf32, #tpu.memory_space<vmem>>, %arg11: memref<8x192xf32, #tpu.memory_space<vmem>>, %arg12: memref<16x1152xf32, #tpu.memory_space<vmem>>) attributes {dimension_semantics = [#tpu.dimension_semantics<parallel>], iteration_bounds = array<i64: 1>, scalar_prefetch = 0 : i64, scratch_operands = 3 : i64, tpu.core_type = #tpu.core_type<tc>, window_params = [{transform_indices = @transform_0, window_bounds = array<i64: 1, 16, 128>}, {pipeline_mode = #tpu.pipeline_mode<synchronous>, transform_indices = @transform_1, window_bounds = array<i64: 32, 16>}, {pipeline_mode = #tpu.pipeline_mode<synchronous>, transform_indices = @transform_2, window_bounds = array<i64: 16, 8>}, {pipeline_mode = #tpu.pipeline_mode<synchronous>, transform_indices = @transform_3, window_bounds = array<i64: 2, 16, 32>}, {pipeline_mode = #tpu.pipeline_mode<synchronous>, transform_indices = @transform_4, window_bounds = array<i64: 2, 8, 16>}, {pipeline_mode = #tpu.pipeline_mode<synchronous>, transform_indices = @transform_5, window_bounds = array<i64: 1424, 256>}, {pipeline_mode = #tpu.pipeline_mode<synchronous>, transform_indices = @transform_6, window_bounds = array<i64: 2160, 128>}, {pipeline_mode = #tpu.pipeline_mode<synchronous>, transform_indices = @transform_7, window_bounds = array<i64: 464, 64>}, {transform_indices = @transform_8, window_bounds = array<i64: 1, 16, 128>}]} {
    %c0 = arith.constant 0 : index
    %c0_0 = arith.constant 0 : index
    %c0_1 = arith.constant 0 : index
    %0 = vector.load %arg1[%c0, %c0_0, %c0_1] : memref<1x16x128xf32, #tpu.memory_space<vmem>>, vector<1x16x128xf32>
    %1 = vector.shape_cast %0 : vector<1x16x128xf32> to vector<16x128xf32>
    %c0_2 = arith.constant 0 : index
    %c0_3 = arith.constant 0 : index
    %2 = vector.load %arg2[%c0_2, %c0_3] : memref<32x16xf32, #tpu.memory_space<vmem>>, vector<32x16xf32>
    %3 = arith.truncf %2 : vector<32x16xf32> to vector<32x16xbf16>
    %4 = arith.truncf %1 : vector<16x128xf32> to vector<16x128xbf16>
    %cst = arith.constant dense<0.000000e+00> : vector<32x128xf32>
    %5 = tpu.matmul %3, %4, %cst {dimension_numbers = #tpu.dot_dimension_numbers<[1], [0], [0], [1], [0, 0, 1, 1], [], []>} : vector<32x16xbf16>, vector<16x128xbf16>, vector<32x128xf32> -> vector<32x128xf32>
    %c0_4 = arith.constant 0 : index
    %c0_5 = arith.constant 0 : index
    %6 = vector.load %arg6[%c0_4, %c0_5] : memref<1424x256xbf16, #tpu.memory_space<vmem>>, vector<128x256xbf16>
    %7 = arith.truncf %5 : vector<32x128xf32> to vector<32x128xbf16>
    %cst_6 = arith.constant dense<0.000000e+00> : vector<32x256xf32>
    %8 = tpu.matmul %7, %6, %cst_6 {dimension_numbers = #tpu.dot_dimension_numbers<[1], [0], [0], [1], [0, 0, 1, 1], [], []>} : vector<32x128xbf16>, vector<128x256xbf16>, vector<32x256xf32> -> vector<32x256xf32>
    %cst_7 = arith.constant 0.000000e+00 : f32
    %9 = vector.broadcast %cst_7 : f32 to vector<2x256xf32>
    %c0_8 = arith.constant 0 : index
    %c0_9 = arith.constant 0 : index
    %10 = vector.load %arg10[%c0_8, %c0_9] : memref<32x1280xf32, #tpu.memory_space<vmem>>, vector<2x256xf32>
    tpu.vector_store %arg10[%c0_8, %c0_9], %9 {strides = array<i32>} : memref<32x1280xf32, #tpu.memory_space<vmem>>, vector<2x256xf32>,
    %11 = vector.extract_strided_slice %8 {offsets = [0, 0], sizes = [30, 256], strides = [1, 1]} : vector<32x256xf32> to vector<30x256xf32>
    %c2 = arith.constant 2 : index
    %c0_10 = arith.constant 0 : index
    %12 = vector.load %arg10[%c2, %c0_10] : memref<32x1280xf32, #tpu.memory_space<vmem>>, vector<30x256xf32>
    tpu.vector_store %arg10[%c2, %c0_10], %11 {strides = array<i32>} : memref<32x1280xf32, #tpu.memory_space<vmem>>, vector<30x256xf32>,
    %cst_11 = arith.constant 0.000000e+00 : f32
    %13 = vector.broadcast %cst_11 : f32 to vector<1x256xf32>
    %c0_12 = arith.constant 0 : index
    %c256 = arith.constant 256 : index
    %14 = vector.load %arg10[%c0_12, %c256] : memref<32x1280xf32, #tpu.memory_space<vmem>>, vector<1x256xf32>
    tpu.vector_store %arg10[%c0_12, %c256], %13 {strides = array<i32>} : memref<32x1280xf32, #tpu.memory_space<vmem>>, vector<1x256xf32>,
    %15 = vector.extract_strided_slice %8 {offsets = [0, 0], sizes = [31, 256], strides = [1, 1]} : vector<32x256xf32> to vector<31x256xf32>
    %c1 = arith.constant 1 : index
    %c256_13 = arith.constant 256 : index
    %16 = vector.load %arg10[%c1, %c256_13] : memref<32x1280xf32, #tpu.memory_space<vmem>>, vector<31x256xf32>
    tpu.vector_store %arg10[%c1, %c256_13], %15 {strides = array<i32>} : memref<32x1280xf32, #tpu.memory_space<vmem>>, vector<31x256xf32>,
    %c0_14 = arith.constant 0 : index
    %c512 = arith.constant 512 : index
    %17 = vector.load %arg10[%c0_14, %c512] : memref<32x1280xf32, #tpu.memory_space<vmem>>, vector<32x256xf32>
    tpu.vector_store %arg10[%c0_14, %c512], %8 {strides = array<i32>} : memref<32x1280xf32, #tpu.memory_space<vmem>>, vector<32x256xf32>,
    %18 = vector.extract_strided_slice %8 {offsets = [1, 0], sizes = [31, 256], strides = [1, 1]} : vector<32x256xf32> to vector<31x256xf32>
    %c0_15 = arith.constant 0 : index
    %c768 = arith.constant 768 : index
    %19 = vector.load %arg10[%c0_15, %c768] : memref<32x1280xf32, #tpu.memory_space<vmem>>, vector<31x256xf32>
    tpu.vector_store %arg10[%c0_15, %c768], %18 {strides = array<i32>} : memref<32x1280xf32, #tpu.memory_space<vmem>>, vector<31x256xf32>,
    %cst_16 = arith.constant 0.000000e+00 : f32
    %20 = vector.broadcast %cst_16 : f32 to vector<1x256xf32>
    %c31 = arith.constant 31 : index
    %c768_17 = arith.constant 768 : index
    %21 = vector.load %arg10[%c31, %c768_17] : memref<32x1280xf32, #tpu.memory_space<vmem>>, vector<1x256xf32>
    tpu.vector_store %arg10[%c31, %c768_17], %20 {strides = array<i32>} : memref<32x1280xf32, #tpu.memory_space<vmem>>, vector<1x256xf32>,
    %22 = vector.extract_strided_slice %8 {offsets = [2, 0], sizes = [30, 256], strides = [1, 1]} : vector<32x256xf32> to vector<30x256xf32>
    %c0_18 = arith.constant 0 : index
    %c1024 = arith.constant 1024 : index
    %23 = vector.load %arg10[%c0_18, %c1024] : memref<32x1280xf32, #tpu.memory_space<vmem>>, vector<30x256xf32>
    tpu.vector_store %arg10[%c0_18, %c1024], %22 {strides = array<i32>} : memref<32x1280xf32, #tpu.memory_space<vmem>>, vector<30x256xf32>,
    %cst_19 = arith.constant 0.000000e+00 : f32
    %24 = vector.broadcast %cst_19 : f32 to vector<2x256xf32>
    %c30 = arith.constant 30 : index
    %c1024_20 = arith.constant 1024 : index
    %25 = vector.load %arg10[%c30, %c1024_20] : memref<32x1280xf32, #tpu.memory_space<vmem>>, vector<2x256xf32>
    tpu.vector_store %arg10[%c30, %c1024_20], %24 {strides = array<i32>} : memref<32x1280xf32, #tpu.memory_space<vmem>>, vector<2x256xf32>,
    %c0_21 = arith.constant 0 : index
    %c0_22 = arith.constant 0 : index
    %26 = vector.load %arg10[%c0_21, %c0_22] : memref<32x1280xf32, #tpu.memory_space<vmem>>, vector<32x1280xf32>
    %c128 = arith.constant 128 : index
    %c0_23 = arith.constant 0 : index
    %27 = vector.load %arg6[%c128, %c0_23] : memref<1424x256xbf16, #tpu.memory_space<vmem>>, vector<1280x256xbf16>
    %28 = arith.truncf %26 : vector<32x1280xf32> to vector<32x1280xbf16>
    %cst_24 = arith.constant dense<0.000000e+00> : vector<32x256xf32>
    %29 = tpu.matmul %28, %27, %cst_24 {dimension_numbers = #tpu.dot_dimension_numbers<[1], [0], [0], [1], [0, 0, 1, 1], [], []>} : vector<32x1280xbf16>, vector<1280x256xbf16>, vector<32x256xf32> -> vector<32x256xf32>
    %c1408 = arith.constant 1408 : index
    %c0_25 = arith.constant 0 : index
    %30 = vector.load %arg6[%c1408, %c0_25] : memref<1424x256xbf16, #tpu.memory_space<vmem>>, vector<1x256xbf16>
    %31 = arith.extf %30 : vector<1x256xbf16> to vector<1x256xf32>
    %32 = vector.broadcast %31 : vector<1x256xf32> to vector<32x256xf32>
    %33 = arith.addf %29, %32 : vector<32x256xf32>
    %c0_26 = arith.constant 0 : index
    %c0_27 = arith.constant 0 : index
    %c0_28 = arith.constant 0 : index
    %34 = vector.load %arg4[%c0_26, %c0_27, %c0_28] : memref<2x16x32xf32, #tpu.memory_space<vmem>>, vector<1x16x32xf32>
    %35 = vector.shape_cast %34 : vector<1x16x32xf32> to vector<16x32xf32>
    %36 = arith.truncf %35 : vector<16x32xf32> to vector<16x32xbf16>
    %37 = arith.truncf %33 : vector<32x256xf32> to vector<32x256xbf16>
    %cst_29 = arith.constant dense<0.000000e+00> : vector<16x256xf32>
    %38 = tpu.matmul %36, %37, %cst_29 {dimension_numbers = #tpu.dot_dimension_numbers<[1], [0], [0], [1], [0, 0, 1, 1], [], []>} : vector<16x32xbf16>, vector<32x256xbf16>, vector<16x256xf32> -> vector<16x256xf32>
    %c1_30 = arith.constant 1 : index
    %c0_31 = arith.constant 0 : index
    %c0_32 = arith.constant 0 : index
    %39 = vector.load %arg4[%c1_30, %c0_31, %c0_32] : memref<2x16x32xf32, #tpu.memory_space<vmem>>, vector<1x16x32xf32>
    %40 = vector.shape_cast %39 : vector<1x16x32xf32> to vector<16x32xf32>
    %41 = arith.truncf %40 : vector<16x32xf32> to vector<16x32xbf16>
    %42 = arith.truncf %33 : vector<32x256xf32> to vector<32x256xbf16>
    %cst_33 = arith.constant dense<0.000000e+00> : vector<16x256xf32>
    %43 = tpu.matmul %41, %42, %cst_33 {dimension_numbers = #tpu.dot_dimension_numbers<[1], [0], [0], [1], [0, 0, 1, 1], [], []>} : vector<16x32xbf16>, vector<32x256xbf16>, vector<16x256xf32> -> vector<16x256xf32>
    %44 = arith.maximumf %38, %43 : vector<16x256xf32>
    %c0_34 = arith.constant 0 : index
    %c0_35 = arith.constant 0 : index
    %45 = vector.load %arg7[%c0_34, %c0_35] : memref<2160x128xbf16, #tpu.memory_space<vmem>>, vector<256x128xbf16>
    %46 = arith.truncf %44 : vector<16x256xf32> to vector<16x256xbf16>
    %cst_36 = arith.constant dense<0.000000e+00> : vector<16x128xf32>
    %47 = tpu.matmul %46, %45, %cst_36 {dimension_numbers = #tpu.dot_dimension_numbers<[1], [0], [0], [1], [0, 0, 1, 1], [], []>} : vector<16x256xbf16>, vector<256x128xbf16>, vector<16x128xf32> -> vector<16x128xf32>
    %c256_37 = arith.constant 256 : index
    %c0_38 = arith.constant 0 : index
    %48 = vector.load %arg7[%c256_37, %c0_38] : memref<2160x128xbf16, #tpu.memory_space<vmem>>, vector<256x128xbf16>
    %49 = arith.truncf %44 : vector<16x256xf32> to vector<16x256xbf16>
    %cst_39 = arith.constant dense<0.000000e+00> : vector<16x128xf32>
    %50 = tpu.matmul %49, %48, %cst_39 {dimension_numbers = #tpu.dot_dimension_numbers<[1], [0], [0], [1], [0, 0, 1, 1], [], []>} : vector<16x256xbf16>, vector<256x128xbf16>, vector<16x128xf32> -> vector<16x128xf32>
    %51 = arith.maximumf %47, %50 : vector<16x128xf32>
    %52 = tpu.concatenate %1, %51 in 1 : vector<16x128xf32>, vector<16x128xf32> -> vector<16x256xf32>
    %c512_40 = arith.constant 512 : index
    %c0_41 = arith.constant 0 : index
    %53 = vector.load %arg7[%c512_40, %c0_41] : memref<2160x128xbf16, #tpu.memory_space<vmem>>, vector<256x128xbf16>
    %54 = arith.truncf %52 : vector<16x256xf32> to vector<16x256xbf16>
    %cst_42 = arith.constant dense<0.000000e+00> : vector<16x128xf32>
    %55 = tpu.matmul %54, %53, %cst_42 {dimension_numbers = #tpu.dot_dimension_numbers<[1], [0], [0], [1], [0, 0, 1, 1], [], []>} : vector<16x256xbf16>, vector<256x128xbf16>, vector<16x128xf32> -> vector<16x128xf32>
    %c768_43 = arith.constant 768 : index
    %c0_44 = arith.constant 0 : index
    %56 = vector.load %arg7[%c768_43, %c0_44] : memref<2160x128xbf16, #tpu.memory_space<vmem>>, vector<1x128xbf16>
    %57 = arith.extf %56 : vector<1x128xbf16> to vector<1x128xf32>
    %58 = vector.broadcast %57 : vector<1x128xf32> to vector<16x128xf32>
    %59 = arith.addf %55, %58 : vector<16x128xf32>
    %c0_45 = arith.constant 0 : index
    %c0_46 = arith.constant 0 : index
    %c0_47 = arith.constant 0 : index
    %60 = vector.load %arg5[%c0_45, %c0_46, %c0_47] : memref<2x8x16xf32, #tpu.memory_space<vmem>>, vector<1x8x16xf32>
    %61 = vector.shape_cast %60 : vector<1x8x16xf32> to vector<8x16xf32>
    %62 = arith.truncf %61 : vector<8x16xf32> to vector<8x16xbf16>
    %63 = arith.truncf %59 : vector<16x128xf32> to vector<16x128xbf16>
    %cst_48 = arith.constant dense<0.000000e+00> : vector<8x128xf32>
    %64 = tpu.matmul %62, %63, %cst_48 {dimension_numbers = #tpu.dot_dimension_numbers<[1], [0], [0], [1], [0, 0, 1, 1], [], []>} : vector<8x16xbf16>, vector<16x128xbf16>, vector<8x128xf32> -> vector<8x128xf32>
    %c1_49 = arith.constant 1 : index
    %c0_50 = arith.constant 0 : index
    %c0_51 = arith.constant 0 : index
    %65 = vector.load %arg5[%c1_49, %c0_50, %c0_51] : memref<2x8x16xf32, #tpu.memory_space<vmem>>, vector<1x8x16xf32>
    %66 = vector.shape_cast %65 : vector<1x8x16xf32> to vector<8x16xf32>
    %67 = arith.truncf %66 : vector<8x16xf32> to vector<8x16xbf16>
    %68 = arith.truncf %59 : vector<16x128xf32> to vector<16x128xbf16>
    %cst_52 = arith.constant dense<0.000000e+00> : vector<8x128xf32>
    %69 = tpu.matmul %67, %68, %cst_52 {dimension_numbers = #tpu.dot_dimension_numbers<[1], [0], [0], [1], [0, 0, 1, 1], [], []>} : vector<8x16xbf16>, vector<16x128xbf16>, vector<8x128xf32> -> vector<8x128xf32>
    %70 = arith.maximumf %64, %69 : vector<8x128xf32>
    %c0_53 = arith.constant 0 : index
    %c0_54 = arith.constant 0 : index
    %71 = vector.load %arg8[%c0_53, %c0_54] : memref<464x64xbf16, #tpu.memory_space<vmem>>, vector<128x64xbf16>
    %72 = arith.truncf %70 : vector<8x128xf32> to vector<8x128xbf16>
    %cst_55 = arith.constant dense<0.000000e+00> : vector<8x64xf32>
    %73 = tpu.matmul %72, %71, %cst_55 {dimension_numbers = #tpu.dot_dimension_numbers<[1], [0], [0], [1], [0, 0, 1, 1], [], []>} : vector<8x128xbf16>, vector<128x64xbf16>, vector<8x64xf32> -> vector<8x64xf32>
    %c128_56 = arith.constant 128 : index
    %c0_57 = arith.constant 0 : index
    %74 = vector.load %arg8[%c128_56, %c0_57] : memref<464x64xbf16, #tpu.memory_space<vmem>>, vector<128x64xbf16>
    %75 = arith.truncf %70 : vector<8x128xf32> to vector<8x128xbf16>
    %cst_58 = arith.constant dense<0.000000e+00> : vector<8x64xf32>
    %76 = tpu.matmul %75, %74, %cst_58 {dimension_numbers = #tpu.dot_dimension_numbers<[1], [0], [0], [1], [0, 0, 1, 1], [], []>} : vector<8x128xbf16>, vector<128x64xbf16>, vector<8x64xf32> -> vector<8x64xf32>
    %77 = arith.maximumf %73, %76 : vector<8x64xf32>
    %cst_59 = arith.constant 0.000000e+00 : f32
    %78 = vector.broadcast %cst_59 : f32 to vector<1x64xf32>
    %c0_60 = arith.constant 0 : index
    %c0_61 = arith.constant 0 : index
    %79 = vector.load %arg11[%c0_60, %c0_61] : memref<8x192xf32, #tpu.memory_space<vmem>>, vector<1x64xf32>
    tpu.vector_store %arg11[%c0_60, %c0_61], %78 {strides = array<i32>} : memref<8x192xf32, #tpu.memory_space<vmem>>, vector<1x64xf32>,
    %80 = vector.extract_strided_slice %77 {offsets = [0, 0], sizes = [7, 64], strides = [1, 1]} : vector<8x64xf32> to vector<7x64xf32>
    %c1_62 = arith.constant 1 : index
    %c0_63 = arith.constant 0 : index
    %81 = vector.load %arg11[%c1_62, %c0_63] : memref<8x192xf32, #tpu.memory_space<vmem>>, vector<7x64xf32>
    tpu.vector_store %arg11[%c1_62, %c0_63], %80 {strides = array<i32>} : memref<8x192xf32, #tpu.memory_space<vmem>>, vector<7x64xf32>,
    %c0_64 = arith.constant 0 : index
    %c64 = arith.constant 64 : index
    %82 = vector.load %arg11[%c0_64, %c64] : memref<8x192xf32, #tpu.memory_space<vmem>>, vector<8x64xf32>
    tpu.vector_store %arg11[%c0_64, %c64], %77 {strides = array<i32>} : memref<8x192xf32, #tpu.memory_space<vmem>>, vector<8x64xf32>,
    %83 = vector.extract_strided_slice %77 {offsets = [1, 0], sizes = [7, 64], strides = [1, 1]} : vector<8x64xf32> to vector<7x64xf32>
    %c0_65 = arith.constant 0 : index
    %c128_66 = arith.constant 128 : index
    %84 = vector.load %arg11[%c0_65, %c128_66] : memref<8x192xf32, #tpu.memory_space<vmem>>, vector<7x64xf32>
    tpu.vector_store %arg11[%c0_65, %c128_66], %83 {strides = array<i32>} : memref<8x192xf32, #tpu.memory_space<vmem>>, vector<7x64xf32>,
    %cst_67 = arith.constant 0.000000e+00 : f32
    %85 = vector.broadcast %cst_67 : f32 to vector<1x64xf32>
    %c7 = arith.constant 7 : index
    %c128_68 = arith.constant 128 : index
    %86 = vector.load %arg11[%c7, %c128_68] : memref<8x192xf32, #tpu.memory_space<vmem>>, vector<1x64xf32>
    tpu.vector_store %arg11[%c7, %c128_68], %85 {strides = array<i32>} : memref<8x192xf32, #tpu.memory_space<vmem>>, vector<1x64xf32>,
    %c0_69 = arith.constant 0 : index
    %c0_70 = arith.constant 0 : index
    %87 = vector.load %arg11[%c0_69, %c0_70] : memref<8x192xf32, #tpu.memory_space<vmem>>, vector<8x192xf32>
    %c256_71 = arith.constant 256 : index
    %c0_72 = arith.constant 0 : index
    %88 = vector.load %arg8[%c256_71, %c0_72] : memref<464x64xbf16, #tpu.memory_space<vmem>>, vector<192x64xbf16>
    %89 = arith.truncf %87 : vector<8x192xf32> to vector<8x192xbf16>
    %cst_73 = arith.constant dense<0.000000e+00> : vector<8x64xf32>
    %90 = tpu.matmul %89, %88, %cst_73 {dimension_numbers = #tpu.dot_dimension_numbers<[1], [0], [0], [1], [0, 0, 1, 1], [], []>} : vector<8x192xbf16>, vector<192x64xbf16>, vector<8x64xf32> -> vector<8x64xf32>
    %c448 = arith.constant 448 : index
    %c0_74 = arith.constant 0 : index
    %91 = vector.load %arg8[%c448, %c0_74] : memref<464x64xbf16, #tpu.memory_space<vmem>>, vector<1x64xbf16>
    %92 = arith.extf %91 : vector<1x64xbf16> to vector<1x64xf32>
    %93 = vector.broadcast %92 : vector<1x64xf32> to vector<8x64xf32>
    %94 = arith.addf %90, %93 : vector<8x64xf32>
    %c0_75 = arith.constant 0 : index
    %c0_76 = arith.constant 0 : index
    %95 = vector.load %arg3[%c0_75, %c0_76] : memref<16x8xf32, #tpu.memory_space<vmem>>, vector<16x8xf32>
    %96 = arith.truncf %95 : vector<16x8xf32> to vector<16x8xbf16>
    %97 = arith.truncf %94 : vector<8x64xf32> to vector<8x64xbf16>
    %cst_77 = arith.constant dense<0.000000e+00> : vector<16x64xf32>
    %98 = tpu.matmul %96, %97, %cst_77 {dimension_numbers = #tpu.dot_dimension_numbers<[1], [0], [0], [1], [0, 0, 1, 1], [], []>} : vector<16x8xbf16>, vector<8x64xbf16>, vector<16x64xf32> -> vector<16x64xf32>
    %c784 = arith.constant 784 : index
    %c0_78 = arith.constant 0 : index
    %99 = vector.load %arg7[%c784, %c0_78] : memref<2160x128xbf16, #tpu.memory_space<vmem>>, vector<64x128xbf16>
    %100 = arith.truncf %98 : vector<16x64xf32> to vector<16x64xbf16>
    %cst_79 = arith.constant dense<0.000000e+00> : vector<16x128xf32>
    %101 = tpu.matmul %100, %99, %cst_79 {dimension_numbers = #tpu.dot_dimension_numbers<[1], [0], [0], [1], [0, 0, 1, 1], [], []>} : vector<16x64xbf16>, vector<64x128xbf16>, vector<16x128xf32> -> vector<16x128xf32>
    %cst_80 = arith.constant 0.000000e+00 : f32
    %102 = vector.broadcast %cst_80 : f32 to vector<1x128xf32>
    %c0_81 = arith.constant 0 : index
    %c0_82 = arith.constant 0 : index
    %103 = vector.load %arg12[%c0_81, %c0_82] : memref<16x1152xf32, #tpu.memory_space<vmem>>, vector<1x128xf32>
    tpu.vector_store %arg12[%c0_81, %c0_82], %102 {strides = array<i32>} : memref<16x1152xf32, #tpu.memory_space<vmem>>, vector<1x128xf32>,
    %104 = vector.extract_strided_slice %1 {offsets = [0, 0], sizes = [15, 128], strides = [1, 1]} : vector<16x128xf32> to vector<15x128xf32>
    %c1_83 = arith.constant 1 : index
    %c0_84 = arith.constant 0 : index
    %105 = vector.load %arg12[%c1_83, %c0_84] : memref<16x1152xf32, #tpu.memory_space<vmem>>, vector<15x128xf32>
    tpu.vector_store %arg12[%c1_83, %c0_84], %104 {strides = array<i32>} : memref<16x1152xf32, #tpu.memory_space<vmem>>, vector<15x128xf32>,
    %c0_85 = arith.constant 0 : index
    %c128_86 = arith.constant 128 : index
    %106 = vector.load %arg12[%c0_85, %c128_86] : memref<16x1152xf32, #tpu.memory_space<vmem>>, vector<16x128xf32>
    tpu.vector_store %arg12[%c0_85, %c128_86], %1 {strides = array<i32>} : memref<16x1152xf32, #tpu.memory_space<vmem>>, vector<16x128xf32>,
    %107 = vector.extract_strided_slice %1 {offsets = [1, 0], sizes = [15, 128], strides = [1, 1]} : vector<16x128xf32> to vector<15x128xf32>
    %c0_87 = arith.constant 0 : index
    %c256_88 = arith.constant 256 : index
    %108 = vector.load %arg12[%c0_87, %c256_88] : memref<16x1152xf32, #tpu.memory_space<vmem>>, vector<15x128xf32>
    tpu.vector_store %arg12[%c0_87, %c256_88], %107 {strides = array<i32>} : memref<16x1152xf32, #tpu.memory_space<vmem>>, vector<15x128xf32>,
    %cst_89 = arith.constant 0.000000e+00 : f32
    %109 = vector.broadcast %cst_89 : f32 to vector<1x128xf32>
    %c15 = arith.constant 15 : index
    %c256_90 = arith.constant 256 : index
    %110 = vector.load %arg12[%c15, %c256_90] : memref<16x1152xf32, #tpu.memory_space<vmem>>, vector<1x128xf32>
    tpu.vector_store %arg12[%c15, %c256_90], %109 {strides = array<i32>} : memref<16x1152xf32, #tpu.memory_space<vmem>>, vector<1x128xf32>,
    %cst_91 = arith.constant 0.000000e+00 : f32
    %111 = vector.broadcast %cst_91 : f32 to vector<1x128xf32>
    %c0_92 = arith.constant 0 : index
    %c384 = arith.constant 384 : index
    %112 = vector.load %arg12[%c0_92, %c384] : memref<16x1152xf32, #tpu.memory_space<vmem>>, vector<1x128xf32>
    tpu.vector_store %arg12[%c0_92, %c384], %111 {strides = array<i32>} : memref<16x1152xf32, #tpu.memory_space<vmem>>, vector<1x128xf32>,
    %113 = vector.extract_strided_slice %51 {offsets = [0, 0], sizes = [15, 128], strides = [1, 1]} : vector<16x128xf32> to vector<15x128xf32>
    %c1_93 = arith.constant 1 : index
    %c384_94 = arith.constant 384 : index
    %114 = vector.load %arg12[%c1_93, %c384_94] : memref<16x1152xf32, #tpu.memory_space<vmem>>, vector<15x128xf32>
    tpu.vector_store %arg12[%c1_93, %c384_94], %113 {strides = array<i32>} : memref<16x1152xf32, #tpu.memory_space<vmem>>, vector<15x128xf32>,
    %c0_95 = arith.constant 0 : index
    %c512_96 = arith.constant 512 : index
    %115 = vector.load %arg12[%c0_95, %c512_96] : memref<16x1152xf32, #tpu.memory_space<vmem>>, vector<16x128xf32>
    tpu.vector_store %arg12[%c0_95, %c512_96], %51 {strides = array<i32>} : memref<16x1152xf32, #tpu.memory_space<vmem>>, vector<16x128xf32>,
    %116 = vector.extract_strided_slice %51 {offsets = [1, 0], sizes = [15, 128], strides = [1, 1]} : vector<16x128xf32> to vector<15x128xf32>
    %c0_97 = arith.constant 0 : index
    %c640 = arith.constant 640 : index
    %117 = vector.load %arg12[%c0_97, %c640] : memref<16x1152xf32, #tpu.memory_space<vmem>>, vector<15x128xf32>
    tpu.vector_store %arg12[%c0_97, %c640], %116 {strides = array<i32>} : memref<16x1152xf32, #tpu.memory_space<vmem>>, vector<15x128xf32>,
    %cst_98 = arith.constant 0.000000e+00 : f32
    %118 = vector.broadcast %cst_98 : f32 to vector<1x128xf32>
    %c15_99 = arith.constant 15 : index
    %c640_100 = arith.constant 640 : index
    %119 = vector.load %arg12[%c15_99, %c640_100] : memref<16x1152xf32, #tpu.memory_space<vmem>>, vector<1x128xf32>
    tpu.vector_store %arg12[%c15_99, %c640_100], %118 {strides = array<i32>} : memref<16x1152xf32, #tpu.memory_space<vmem>>, vector<1x128xf32>,
    %cst_101 = arith.constant 0.000000e+00 : f32
    %120 = vector.broadcast %cst_101 : f32 to vector<1x128xf32>
    %c0_102 = arith.constant 0 : index
    %c768_103 = arith.constant 768 : index
    %121 = vector.load %arg12[%c0_102, %c768_103] : memref<16x1152xf32, #tpu.memory_space<vmem>>, vector<1x128xf32>
    tpu.vector_store %arg12[%c0_102, %c768_103], %120 {strides = array<i32>} : memref<16x1152xf32, #tpu.memory_space<vmem>>, vector<1x128xf32>,
    %122 = vector.extract_strided_slice %101 {offsets = [0, 0], sizes = [15, 128], strides = [1, 1]} : vector<16x128xf32> to vector<15x128xf32>
    %c1_104 = arith.constant 1 : index
    %c768_105 = arith.constant 768 : index
    %123 = vector.load %arg12[%c1_104, %c768_105] : memref<16x1152xf32, #tpu.memory_space<vmem>>, vector<15x128xf32>
    tpu.vector_store %arg12[%c1_104, %c768_105], %122 {strides = array<i32>} : memref<16x1152xf32, #tpu.memory_space<vmem>>, vector<15x128xf32>,
    %c0_106 = arith.constant 0 : index
    %c896 = arith.constant 896 : index
    %124 = vector.load %arg12[%c0_106, %c896] : memref<16x1152xf32, #tpu.memory_space<vmem>>, vector<16x128xf32>
    tpu.vector_store %arg12[%c0_106, %c896], %101 {strides = array<i32>} : memref<16x1152xf32, #tpu.memory_space<vmem>>, vector<16x128xf32>,
    %125 = vector.extract_strided_slice %101 {offsets = [1, 0], sizes = [15, 128], strides = [1, 1]} : vector<16x128xf32> to vector<15x128xf32>
    %c0_107 = arith.constant 0 : index
    %c1024_108 = arith.constant 1024 : index
    %126 = vector.load %arg12[%c0_107, %c1024_108] : memref<16x1152xf32, #tpu.memory_space<vmem>>, vector<15x128xf32>
    tpu.vector_store %arg12[%c0_107, %c1024_108], %125 {strides = array<i32>} : memref<16x1152xf32, #tpu.memory_space<vmem>>, vector<15x128xf32>,
    %cst_109 = arith.constant 0.000000e+00 : f32
    %127 = vector.broadcast %cst_109 : f32 to vector<1x128xf32>
    %c15_110 = arith.constant 15 : index
    %c1024_111 = arith.constant 1024 : index
    %128 = vector.load %arg12[%c15_110, %c1024_111] : memref<16x1152xf32, #tpu.memory_space<vmem>>, vector<1x128xf32>
    tpu.vector_store %arg12[%c15_110, %c1024_111], %127 {strides = array<i32>} : memref<16x1152xf32, #tpu.memory_space<vmem>>, vector<1x128xf32>,
    %c0_112 = arith.constant 0 : index
    %c0_113 = arith.constant 0 : index
    %129 = vector.load %arg12[%c0_112, %c0_113] : memref<16x1152xf32, #tpu.memory_space<vmem>>, vector<16x1152xf32>
    %c848 = arith.constant 848 : index
    %c0_114 = arith.constant 0 : index
    %130 = vector.load %arg7[%c848, %c0_114] : memref<2160x128xbf16, #tpu.memory_space<vmem>>, vector<1152x128xbf16>
    %131 = arith.truncf %129 : vector<16x1152xf32> to vector<16x1152xbf16>
    %cst_115 = arith.constant dense<0.000000e+00> : vector<16x128xf32>
    %132 = tpu.matmul %131, %130, %cst_115 {dimension_numbers = #tpu.dot_dimension_numbers<[1], [0], [0], [1], [0, 0, 1, 1], [], []>} : vector<16x1152xbf16>, vector<1152x128xbf16>, vector<16x128xf32> -> vector<16x128xf32>
    %c2000 = arith.constant 2000 : index
    %c0_116 = arith.constant 0 : index
    %133 = vector.load %arg7[%c2000, %c0_116] : memref<2160x128xbf16, #tpu.memory_space<vmem>>, vector<1x128xbf16>
    %134 = arith.extf %133 : vector<1x128xbf16> to vector<1x128xf32>
    %135 = vector.broadcast %134 : vector<1x128xf32> to vector<16x128xf32>
    %136 = arith.addf %132, %135 : vector<16x128xf32>
    %cst_117 = arith.constant dense<0.000000e+00> : vector<128xf32>
    %137 = vector.multi_reduction <add>, %136, %cst_117 [0] : vector<16x128xf32> to vector<128xf32>
    %138 = vector.shape_cast %137 : vector<128xf32> to vector<1x128xf32>
    %139 = arith.mulf %136, %136 : vector<16x128xf32>
    %cst_118 = arith.constant dense<0.000000e+00> : vector<128xf32>
    %140 = vector.multi_reduction <add>, %139, %cst_118 [0] : vector<16x128xf32> to vector<128xf32>
    %141 = vector.shape_cast %140 : vector<128xf32> to vector<1x128xf32>
    %142 = tpu.concatenate %138, %141 in 0 : vector<1x128xf32>, vector<1x128xf32> -> vector<2x128xf32>
    %c2016 = arith.constant 2016 : index
    %c0_119 = arith.constant 0 : index
    %143 = vector.load %arg7[%c2016, %c0_119] : memref<2160x128xbf16, #tpu.memory_space<vmem>>, vector<128x128xbf16>
    %144 = arith.truncf %142 : vector<2x128xf32> to vector<2x128xbf16>
    %cst_120 = arith.constant dense<0.000000e+00> : vector<2x128xf32>
    %145 = tpu.matmul %144, %143, %cst_120 {dimension_numbers = #tpu.dot_dimension_numbers<[1], [0], [0], [1], [0, 0, 1, 1], [], []>} : vector<2x128xbf16>, vector<128x128xbf16>, vector<2x128xf32> -> vector<2x128xf32>
    %146 = vector.extract_strided_slice %145 {offsets = [0, 0], sizes = [1, 128], strides = [1, 1]} : vector<2x128xf32> to vector<1x128xf32>
    %147 = vector.extract_strided_slice %145 {offsets = [1, 0], sizes = [1, 128], strides = [1, 1]} : vector<2x128xf32> to vector<1x128xf32>
    %148 = arith.mulf %146, %146 : vector<1x128xf32>
    %149 = arith.subf %147, %148 : vector<1x128xf32>
    %cst_121 = arith.constant 9.99999974E-6 : f32
    %150 = vector.broadcast %cst_121 : f32 to vector<1x128xf32>
    %151 = arith.addf %149, %150 : vector<1x128xf32>
    %152 = math.rsqrt %151 : vector<1x128xf32>
    %c2144 = arith.constant 2144 : index
    %c0_122 = arith.constant 0 : index
    %153 = vector.load %arg7[%c2144, %c0_122] : memref<2160x128xbf16, #tpu.memory_space<vmem>>, vector<2x128xbf16>
    %154 = arith.extf %153 : vector<2x128xbf16> to vector<2x128xf32>
    %155 = vector.broadcast %146 : vector<1x128xf32> to vector<16x128xf32>
    %156 = arith.subf %136, %155 : vector<16x128xf32>
    %157 = vector.broadcast %152 : vector<1x128xf32> to vector<16x128xf32>
    %158 = arith.mulf %156, %157 : vector<16x128xf32>
    %159 = vector.extract_strided_slice %154 {offsets = [0, 0], sizes = [1, 128], strides = [1, 1]} : vector<2x128xf32> to vector<1x128xf32>
    %160 = vector.broadcast %159 : vector<1x128xf32> to vector<16x128xf32>
    %161 = arith.mulf %158, %160 : vector<16x128xf32>
    %162 = vector.extract_strided_slice %154 {offsets = [1, 0], sizes = [1, 128], strides = [1, 1]} : vector<2x128xf32> to vector<1x128xf32>
    %163 = vector.broadcast %162 : vector<1x128xf32> to vector<16x128xf32>
    %164 = arith.addf %161, %163 : vector<16x128xf32>
    %cst_123 = arith.constant 0.000000e+00 : f32
    %165 = vector.broadcast %cst_123 : f32 to vector<16x128xf32>
    %166 = arith.maximumf %164, %165 : vector<16x128xf32>
    %c0_124 = arith.constant 0 : index
    %c0_125 = arith.constant 0 : index
    %c0_126 = arith.constant 0 : index
    %167 = vector.load %arg9[%c0_124, %c0_125, %c0_126] : memref<1x16x128xf32, #tpu.memory_space<vmem>>, vector<1x16x128xf32>
    %168 = vector.shape_cast %167 : vector<1x16x128xf32> to vector<16x128xf32>
    %169 = vector.shape_cast %166 : vector<16x128xf32> to vector<1x16x128xf32>
    tpu.vector_store %arg9[%c0_124, %c0_125, %c0_126], %169 {strides = array<i32>} : memref<1x16x128xf32, #tpu.memory_space<vmem>>, vector<1x16x128xf32>,
    return
  }
  func.func @transform_0(%arg0: i32) -> (i32, i32, i32) {
    %c0_i32 = arith.constant 0 : i32
    %c0_i32_0 = arith.constant 0 : i32
    %c0_i32_1 = arith.constant 0 : i32
    return %arg0, %c0_i32, %c0_i32_0 : i32, i32, i32
  }
  func.func @transform_1(%arg0: i32) -> (i32, i32) {
    %c0_i32 = arith.constant 0 : i32
    %c0_i32_0 = arith.constant 0 : i32
    %c0_i32_1 = arith.constant 0 : i32
    return %c0_i32, %c0_i32_0 : i32, i32
  }
  func.func @transform_2(%arg0: i32) -> (i32, i32) {
    %c0_i32 = arith.constant 0 : i32
    %c0_i32_0 = arith.constant 0 : i32
    %c0_i32_1 = arith.constant 0 : i32
    return %c0_i32, %c0_i32_0 : i32, i32
  }
  func.func @transform_3(%arg0: i32) -> (i32, i32, i32) {
    %c0_i32 = arith.constant 0 : i32
    %c0_i32_0 = arith.constant 0 : i32
    %c0_i32_1 = arith.constant 0 : i32
    %c0_i32_2 = arith.constant 0 : i32
    return %c0_i32, %c0_i32_0, %c0_i32_1 : i32, i32, i32
  }
  func.func @transform_4(%arg0: i32) -> (i32, i32, i32) {
    %c0_i32 = arith.constant 0 : i32
    %c0_i32_0 = arith.constant 0 : i32
    %c0_i32_1 = arith.constant 0 : i32
    %c0_i32_2 = arith.constant 0 : i32
    return %c0_i32, %c0_i32_0, %c0_i32_1 : i32, i32, i32
  }
  func.func @transform_5(%arg0: i32) -> (i32, i32) {
    %c0_i32 = arith.constant 0 : i32
    %c0_i32_0 = arith.constant 0 : i32
    %c0_i32_1 = arith.constant 0 : i32
    return %c0_i32, %c0_i32_0 : i32, i32
  }
  func.func @transform_6(%arg0: i32) -> (i32, i32) {
    %c0_i32 = arith.constant 0 : i32
    %c0_i32_0 = arith.constant 0 : i32
    %c0_i32_1 = arith.constant 0 : i32
    return %c0_i32, %c0_i32_0 : i32, i32
  }
  func.func @transform_7(%arg0: i32) -> (i32, i32) {
    %c0_i32 = arith.constant 0 : i32
    %c0_i32_0 = arith.constant 0 : i32
    %c0_i32_1 = arith.constant 0 : i32
    return %c0_i32, %c0_i32_0 : i32, i32
  }
  func.func @transform_8(%arg0: i32) -> (i32, i32, i32) {
    %c0_i32 = arith.constant 0 : i32
    %c0_i32_0 = arith.constant 0 : i32
    %c0_i32_1 = arith.constant 0 : i32
    return %arg0, %c0_i32, %c0_i32_0 : i32, i32, i32
  }
}

</mosaic_0001>

<llo_original>
// kernel: forward.1
$region0: #{forward.1}
  #allocation0 [shape = 'u32[]', space=smem, size = 0x4, offset = 0x4, fixed_abs, tag = 'smem constant byte address 0x4 - core index']
  #allocation1 [shape = 'u32[144,128]{1,0:T(1,128)}', space=vmem, size = 0x12000, scoped, tag = 'internal scratch']
  #allocation2 [shape = 'f32[32,1280]{1,0:T(8,128)}', space=vmem, size = 0x28000, scoped, tag = 'scratch operand']
  #allocation3 [shape = 'f32[8,192]{1,0:T(8,128)}', space=vmem, size = 0x2000, scoped, tag = 'scratch operand']
  #allocation4 [shape = 'f32[16,1152]{1,0:T(8,128)}', space=vmem, size = 0x12000, scoped, tag = 'scratch operand']
  %s0 = inlined_call_operand.vmem [shape: f32[1,16,128], index: 0, kind: input, shape index: {}]
  %s1 = inlined_call_operand.vmem [shape: f32[32,16], index: 1, kind: input, shape index: {}]
  %s2 = inlined_call_operand.vmem [shape: f32[16,8], index: 2, kind: input, shape index: {}]
  %s3 = inlined_call_operand.vmem [shape: f32[2,16,32], index: 3, kind: input, shape index: {}]
  %s4 = inlined_call_operand.vmem [shape: f32[2,8,16], index: 4, kind: input, shape index: {}]
  %s5 = inlined_call_operand.vmem [shape: bf16[1424,256], index: 5, kind: input, shape index: {}]
  %s6 = inlined_call_operand.vmem [shape: bf16[2160,128], index: 6, kind: input, shape index: {}]
  %s7 = inlined_call_operand.vmem [shape: bf16[464,64], index: 7, kind: input, shape index: {}]
  %s8 = inlined_call_operand.vmem [shape: f32[1,16,128], index: 8, kind: output, shape index: {}]
  %s9 = sld [smem:[#allocation0]]
  $region42: #{forward.1} parent=0
    _
  %s11 = ssub.s32 1, %s9
  %s12 = scalar_select 0, %s11, %s9
  // Predicated region
  $region2: #{forward.1} parent=0 // pred_check
    _
  $region3: #{forward.1} parent=0 // pred_check_branch
    %14 = sbr.rel (0) target = $region5
  $region4: #{forward.1} parent=0 // pred_region
    _
  $region5: #{forward.1} parent=0 // pred_fallthru
    _
  // Predicated region
  $region6: #{forward.1} parent=0 // pred_check
    _
  $region7: #{forward.1} parent=0 // pred_check_branch
    %16 = sbr.rel (0) target = $region9
  $region8: #{forward.1} parent=0 // pred_region
    _
  $region9: #{forward.1} parent=0 // pred_fallthru
    _
  // Predicated region
  $region10: #{forward.1} parent=0 // pred_check
    _
  $region11: #{forward.1} parent=0 // pred_check_branch
    %18 = sbr.rel (0) target = $region13
  $region12: #{forward.1} parent=0 // pred_region
    _
  $region13: #{forward.1} parent=0 // pred_fallthru
    _
  // Predicated region
  $region14: #{forward.1} parent=0 // pred_check
    _
  $region15: #{forward.1} parent=0 // pred_check_branch
    %20 = sbr.rel (0) target = $region17
  $region16: #{forward.1} parent=0 // pred_region
    _
  $region17: #{forward.1} parent=0 // pred_fallthru
    _
  // Predicated region
  $region18: #{forward.1} parent=0 // pred_check
    _
  $region19: #{forward.1} parent=0 // pred_check_branch
    %22 = sbr.rel (0) target = $region21
  $region20: #{forward.1} parent=0 // pred_region
    _
  $region21: #{forward.1} parent=0 // pred_fallthru
    _
  // Predicated region
  $region22: #{forward.1} parent=0 // pred_check
    _
  $region23: #{forward.1} parent=0 // pred_check_branch
    %24 = sbr.rel (0) target = $region25
  $region24: #{forward.1} parent=0 // pred_region
    _
  $region25: #{forward.1} parent=0 // pred_fallthru
    _
  // Predicated region
  $region26: #{forward.1} parent=0 // pred_check
    _
  $region27: #{forward.1} parent=0 // pred_check_branch
    %26 = sbr.rel (0) target = $region29
  $region28: #{forward.1} parent=0 // pred_region
    _
  $region29: #{forward.1} parent=0 // pred_fallthru
    _
  // Predicated region
  $region30: #{forward.1} parent=0 // pred_check
    _
  $region31: #{forward.1} parent=0 // pred_check_branch
    %28 = sbr.rel (0) target = $region33
  $region32: #{forward.1} parent=0 // pred_region
    _
  $region33: #{forward.1} parent=0 // pred_fallthru
    _
  %v30 = vld [vmem:[%s0] sm:$0xff]
  %v31 = vld [vmem:[%s0 + $0x8] sm:$0xff]
  %v32 = vld [vmem:[%s1] sm:$0xff]
  %v33 = vld [vmem:[%s1 + $0x8] sm:$0xff]
  %v34 = vld [vmem:[%s1 + $0x10] sm:$0xff]
  %v35 = vld [vmem:[%s1 + $0x18] sm:$0xff]
  %v36 = vpack.c.bf16 %v33, %v32
  %v37 = vpack.c.bf16 %v35, %v34
  %v38 = vpack.c.bf16 %v31, %v30
  %vm39 = vcmask 130048
  %v41 = vsel %vm39, %v36, 0
  %v44 = vsel %vm39, %v37, 0
  %46 = vmatprep.subr.bf16.mxu0 0
  %47 = vmatpush1.bf16.msra.mxu0 %v38
  %48 = vmatprep.subr.bf16.mxu0 0
  %49 = vmatpush1.bf16.msra.mxu0 0
  %50 = vmatprep.subr.bf16.mxu0 0
  %51 = vmatpush1.bf16.msra.mxu0 0
  %52 = vmatprep.subr.bf16.mxu0 0
  %53 = vmatpush1.bf16.msra.mxu0 0
  %54 = vmatprep.subr.bf16.mxu0 0
  %55 = vmatpush1.bf16.msra.mxu0 0
  %56 = vmatprep.subr.bf16.mxu0 0
  %57 = vmatpush1.bf16.msra.mxu0 0
  %58 = vmatprep.subr.bf16.mxu0 0
  %59 = vmatpush1.bf16.msra.mxu0 0
  %60 = vmatprep.subr.bf16.mxu0 0
  %61 = vmatpush1.bf16.msra.mxu0 0
  %62 = vmatprep.subr.bf16.mxu0 0
  %63 = vmatpush1.bf16.msra.mxu0 0
  %64 = vmatprep.subr.bf16.mxu0 0
  %65 = vmatpush1.bf16.msra.mxu0 0
  %66 = vmatprep.subr.bf16.mxu0 0
  %67 = vmatpush1.bf16.msra.mxu0 0
  %68 = vmatprep.subr.bf16.mxu0 0
  %69 = vmatpush1.bf16.msra.mxu0 0
  %70 = vmatprep.subr.bf16.mxu0 0
  %71 = vmatpush1.bf16.msra.mxu0 0
  %72 = vmatprep.subr.bf16.mxu0 0
  %73 = vmatpush1.bf16.msra.mxu0 0
  %74 = vmatprep.subr.bf16.mxu0 0
  %75 = vmatpush1.bf16.msra.mxu0 0
  %76 = vmatprep.subr.bf16.mxu0 0
  %77 = vmatpush1.bf16.msra.mxu0 0
  %78 = vmatprep.mubr.bf16.mxu0 0
  %79 = vmatmul.mubr.bf16.gmra.mrb[0].mxu0 %v41
  %v80 = vpop.f32.mrb[0].mxu0
  %v81 = vadd.f32 0.0, %v80
  %v82 = vpop.f32.mrb[0].mxu0
  %v83 = vpop.f32.mrb[0].mxu0
  %v84 = vadd.f32 0.0, %v83
  %v85 = vpop.f32.mrb[0].mxu0
  %86 = vmatprep.mubr.bf16.mxu0 0
  %87 = vmatmul.mubr.bf16.gmra.mrb[0].mxu0 %v44
  %v88 = vpop.f32.mrb[0].mxu0
  %v89 = vadd.f32 0.0, %v88
  %v90 = vpop.f32.mrb[0].mxu0
  %v91 = vpop.f32.mrb[0].mxu0
  %v92 = vadd.f32 0.0, %v91
  %v93 = vpop.f32.mrb[0].mxu0
  %94 = vdwg.mxu0
  %v95 = vld [vmem:[%s5] sm:$0xff]
  %v96 = vld [vmem:[%s5 + $0x8] sm:$0xff]
  %v97 = vld [vmem:[%s5 + $0x10] sm:$0xff]
  %v98 = vld [vmem:[%s5 + $0x18] sm:$0xff]
  %v99 = vld [vmem:[%s5 + $0x20] sm:$0xff]
  %v100 = vld [vmem:[%s5 + $0x28] sm:$0xff]
  %v101 = vld [vmem:[%s5 + $0x30] sm:$0xff]
  %v102 = vld [vmem:[%s5 + $0x38] sm:$0xff]
  %v103 = vld [vmem:[%s5 + $0x40] sm:$0xff]
  %v104 = vld [vmem:[%s5 + $0x48] sm:$0xff]
  %v105 = vld [vmem:[%s5 + $0x50] sm:$0xff]
  %v106 = vld [vmem:[%s5 + $0x58] sm:$0xff]
  %v107 = vld [vmem:[%s5 + $0x60] sm:$0xff]
  %v108 = vld [vmem:[%s5 + $0x68] sm:$0xff]
  %v109 = vld [vmem:[%s5 + $0x70] sm:$0xff]
  %v110 = vld [vmem:[%s5 + $0x78] sm:$0xff]
  %v111 = vpack.c.bf16 %v84, %v81
  %v112 = vpack.c.bf16 %v92, %v89
  %v129 = vunpack.c.l.b16 %v95
  %v130 = vunpack.c.h.b16 %v95
  %v131 = vunpack.c.l.b16 %v96
  %v132 = vunpack.c.h.b16 %v96
  %v133 = vunpack.c.l.b16 %v97
  %v134 = vunpack.c.h.b16 %v97
  %v135 = vunpack.c.l.b16 %v98
  %v136 = vunpack.c.h.b16 %v98
  %v137 = vunpack.c.l.b16 %v99
  %v138 = vunpack.c.h.b16 %v99
  %v139 = vunpack.c.l.b16 %v100
  %v140 = vunpack.c.h.b16 %v100
  %v141 = vunpack.c.l.b16 %v101
  %v142 = vunpack.c.h.b16 %v101
  %v143 = vunpack.c.l.b16 %v102
  %v144 = vunpack.c.h.b16 %v102
  %v145 = vunpack.c.l.b16 %v103
  %v146 = vunpack.c.h.b16 %v103
  %v147 = vunpack.c.l.b16 %v104
  %v148 = vunpack.c.h.b16 %v104
  %v149 = vunpack.c.l.b16 %v105
  %v150 = vunpack.c.h.b16 %v105
  %v151 = vunpack.c.l.b16 %v106
  %v152 = vunpack.c.h.b16 %v106
  %v153 = vunpack.c.l.b16 %v107
  %v154 = vunpack.c.h.b16 %v107
  %v155 = vunpack.c.l.b16 %v108
  %v156 = vunpack.c.h.b16 %v108
  %v157 = vunpack.c.l.b16 %v109
  %v158 = vunpack.c.h.b16 %v109
  %v159 = vunpack.c.l.b16 %v110
  %v160 = vunpack.c.h.b16 %v110
  %v161 = vpack.c.b16 %v131, %v129
  %v162 = vpack.c.b16 %v132, %v130
  %v163 = vpack.c.b16 %v135, %v133
  %v164 = vpack.c.b16 %v136, %v134
  %v165 = vpack.c.b16 %v139, %v137
  %v166 = vpack.c.b16 %v140, %v138
  %v167 = vpack.c.b16 %v143, %v141
  %v168 = vpack.c.b16 %v144, %v142
  %v169 = vpack.c.b16 %v147, %v145
  %v170 = vpack.c.b16 %v148, %v146
  %v171 = vpack.c.b16 %v151, %v149
  %v172 = vpack.c.b16 %v152, %v150
  %v173 = vpack.c.b16 %v155, %v153
  %v174 = vpack.c.b16 %v156, %v154
  %v175 = vpack.c.b16 %v159, %v157
  %v176 = vpack.c.b16 %v160, %v158
  %193 = vmatprep.subr.bf16.mxu0 %v162
  %194 = vmatpush1.bf16.msra.mxu0 %v161
  %195 = vmatprep.subr.bf16.mxu0 %v164
  %196 = vmatpush1.bf16.msra.mxu0 %v163
  %197 = vmatprep.subr.bf16.mxu0 %v166
  %198 = vmatpush1.bf16.msra.mxu0 %v165
  %199 = vmatprep.subr.bf16.mxu0 %v168
  %200 = vmatpush1.bf16.msra.mxu0 %v167
  %201 = vmatprep.subr.bf16.mxu0 %v170
  %202 = vmatpush1.bf16.msra.mxu0 %v169
  %203 = vmatprep.subr.bf16.mxu0 %v172
  %204 = vmatpush1.bf16.msra.mxu0 %v171
  %205 = vmatprep.subr.bf16.mxu0 %v174
  %206 = vmatpush1.bf16.msra.mxu0 %v173
  %207 = vmatprep.subr.bf16.mxu0 %v176
  %208 = vmatpush1.bf16.msra.mxu0 %v175
  %209 = vmatprep.subr.bf16.mxu0 0
  %210 = vmatpush1.bf16.msra.mxu0 0
  %211 = vmatprep.subr.bf16.mxu0 0
  %212 = vmatpush1.bf16.msra.mxu0 0
  %213 = vmatprep.subr.bf16.mxu0 0
  %214 = vmatpush1.bf16.msra.mxu0 0
  %215 = vmatprep.subr.bf16.mxu0 0
  %216 = vmatpush1.bf16.msra.mxu0 0
  %217 = vmatprep.subr.bf16.mxu0 0
  %218 = vmatpush1.bf16.msra.mxu0 0
  %219 = vmatprep.subr.bf16.mxu0 0
  %220 = vmatpush1.bf16.msra.mxu0 0
  %221 = vmatprep.subr.bf16.mxu0 0
  %222 = vmatpush1.bf16.msra.mxu0 0
  %223 = vmatprep.subr.bf16.mxu0 0
  %224 = vmatpush1.bf16.msra.mxu0 0
  %225 = vmatprep.mubr.bf16.mxu0 0
  %226 = vmatmul.mubr.bf16.gmra.mrb[0].mxu0 %v111
  %v227 = vpop.f32.mrb[0].mxu0
  %v228 = vadd.f32 0.0, %v227
  %v229 = vpop.f32.mrb[0].mxu0
  %v230 = vadd.f32 0.0, %v229
  %v231 = vpop.f32.mrb[0].mxu0
  %v232 = vadd.f32 0.0, %v231
  %v233 = vpop.f32.mrb[0].mxu0
  %v234 = vadd.f32 0.0, %v233
  %235 = vmatprep.mubr.bf16.mxu0 0
  %236 = vmatmul.mubr.bf16.gmra.mrb[0].mxu0 %v112
  %v237 = vpop.f32.mrb[0].mxu0
  %v238 = vadd.f32 0.0, %v237
  %v239 = vpop.f32.mrb[0].mxu0
  %v240 = vadd.f32 0.0, %v239
  %v241 = vpop.f32.mrb[0].mxu0
  %v242 = vadd.f32 0.0, %v241
  %v243 = vpop.f32.mrb[0].mxu0
  %v244 = vadd.f32 0.0, %v243
  %245 = vdwg.mxu0
  %246 = vst [vmem:[#allocation2] sm:$0x3] 0.0
  %247 = vst [vmem:[#allocation2 + $0x8] sm:$0x3] 0.0
  %vm256 = vcmask 1041408
  %v257 = vrot.slane %v228, 6
  %v258 = vrot.slane %v230, 6
  %v259 = vrot.slane %v232, 6
  %v260 = vsel %vm256, %v257, %v259
  %v261 = vrot.slane %v234, 6
  %v262 = vsel %vm256, %v258, %v261
  %v263 = vrot.slane %v238, 6
  %v264 = vsel %vm256, %v259, %v263
  %v265 = vrot.slane %v240, 6
  %v266 = vsel %vm256, %v261, %v265
  %v267 = vrot.slane %v242, 6
  %v268 = vsel %vm256, %v263, %v267
  %v269 = vrot.slane %v244, 6
  %v270 = vsel %vm256, %v265, %v269
  %279 = vst [vmem:[#allocation2] sm:$0xfc] %v257
  %280 = vst [vmem:[#allocation2 + $0x8] sm:$0xfc] %v258
  %281 = vst [vmem:[#allocation2 + $0x50] sm:$0xff] %v260
  %282 = vst [vmem:[#allocation2 + $0x58] sm:$0xff] %v262
  %283 = vst [vmem:[#allocation2 + $0xa0] sm:$0xff] %v264
  %284 = vst [vmem:[#allocation2 + $0xa8] sm:$0xff] %v266
  %285 = vst [vmem:[#allocation2 + $0xf0] sm:$0xff] %v268
  %286 = vst [vmem:[#allocation2 + $0xf8] sm:$0xff] %v270
  %v287 = vlaneseq
  %vm288 = vcmp.ge.s32.totalorder %v287, 0
  %vm289 = vcmp.lt.s32.totalorder %v287, 256
  %vm290 = vmand %vm288, %vm289
  %s291 = scalar_lea.vmem [#allocation2], 16
  %292 = vst.msk [vmem:[%s291] ss:$8 sm:$0x3] %vm290, 0.0
  %293 = vst.msk [vmem:[%s291] ss:$8 sm:$0x0] %vm290, 0.0
  %vm294 = vcmask 1040384
  %v295 = vrot.slane %v228, 7
  %v296 = vrot.slane %v230, 7
  %v297 = vrot.slane %v232, 7
  %v298 = vsel %vm294, %v295, %v297
  %v299 = vrot.slane %v234, 7
  %v300 = vsel %vm294, %v296, %v299
  %v301 = vrot.slane %v238, 7
  %v302 = vsel %vm294, %v297, %v301
  %v303 = vrot.slane %v240, 7
  %v304 = vsel %vm294, %v299, %v303
  %v305 = vrot.slane %v242, 7
  %v306 = vsel %vm294, %v301, %v305
  %v307 = vrot.slane %v244, 7
  %v308 = vsel %vm294, %v303, %v307
  %317 = vst [vmem:[#allocation2 + $0x10] sm:$0xfe] %v295
  %318 = vst [vmem:[#allocation2 + $0x18] sm:$0xfe] %v296
  %319 = vst [vmem:[#allocation2 + $0x60] sm:$0xff] %v298
  %320 = vst [vmem:[#allocation2 + $0x68] sm:$0xff] %v300
  %321 = vst [vmem:[#allocation2 + $0xb0] sm:$0xff] %v302
  %322 = vst [vmem:[#allocation2 + $0xb8] sm:$0xff] %v304
  %323 = vst [vmem:[#allocation2 + $0x100] sm:$0xff] %v306
  %324 = vst [vmem:[#allocation2 + $0x108] sm:$0xff] %v308
  %325 = vst [vmem:[#allocation2 + $0x20] sm:$0xff] %v228
  %326 = vst [vmem:[#allocation2 + $0x28] sm:$0xff] %v230
  %327 = vst [vmem:[#allocation2 + $0x70] sm:$0xff] %v232
  %328 = vst [vmem:[#allocation2 + $0x78] sm:$0xff] %v234
  %329 = vst [vmem:[#allocation2 + $0xc0] sm:$0xff] %v238
  %330 = vst [vmem:[#allocation2 + $0xc8] sm:$0xff] %v240
  %331 = vst [vmem:[#allocation2 + $0x110] sm:$0xff] %v242
  %332 = vst [vmem:[#allocation2 + $0x118] sm:$0xff] %v244
  %vm333 = vcmask 1046528
  %v334 = vrot.slane %v228, 1
  %v335 = vrot.slane %v232, 1
  %v336 = vsel %vm333, %v334, %v335
  %v337 = vrot.slane %v230, 1
  %v338 = vrot.slane %v234, 1
  %v339 = vsel %vm333, %v337, %v338
  %v340 = vrot.slane %v238, 1
  %v341 = vsel %vm333, %v335, %v340
  %v342 = vrot.slane %v240, 1
  %v343 = vsel %vm333, %v338, %v342
  %v344 = vrot.slane %v242, 1
  %v345 = vsel %vm333, %v340, %v344
  %v346 = vrot.slane %v244, 1
  %v347 = vsel %vm333, %v342, %v346
  %356 = vst [vmem:[#allocation2 + $0x30] sm:$0xff] %v336
  %357 = vst [vmem:[#allocation2 + $0x38] sm:$0xff] %v339
  %358 = vst [vmem:[#allocation2 + $0x80] sm:$0xff] %v341
  %359 = vst [vmem:[#allocation2 + $0x88] sm:$0xff] %v343
  %360 = vst [vmem:[#allocation2 + $0xd0] sm:$0xff] %v345
  %361 = vst [vmem:[#allocation2 + $0xd8] sm:$0xff] %v347
  %362 = vst [vmem:[#allocation2 + $0x120] sm:$0x7f] %v344
  %363 = vst [vmem:[#allocation2 + $0x128] sm:$0x7f] %v346
  %s364 = scalar_lea.vmem [#allocation2], 295
  %365 = vst.msk [vmem:[%s364] ss:$8 sm:$0x3] %vm290, 0.0
  %366 = vst.msk [vmem:[%s364] ss:$8 sm:$0x0] %vm290, 0.0
  %vm367 = vcmask 1045504
  %v368 = vrot.slane %v228, 2
  %v369 = vrot.slane %v232, 2
  %v370 = vsel %vm367, %v368, %v369
  %v371 = vrot.slane %v230, 2
  %v372 = vrot.slane %v234, 2
  %v373 = vsel %vm367, %v371, %v372
  %v374 = vrot.slane %v238, 2
  %v375 = vsel %vm367, %v369, %v374
  %v376 = vrot.slane %v240, 2
  %v377 = vsel %vm367, %v372, %v376
  %v378 = vrot.slane %v242, 2
  %v379 = vsel %vm367, %v374, %v378
  %v380 = vrot.slane %v244, 2
  %v381 = vsel %vm367, %v376, %v380
  %390 = vst [vmem:[#allocation2 + $0x40] sm:$0xff] %v370
  %391 = vst [vmem:[#allocation2 + $0x48] sm:$0xff] %v373
  %392 = vst [vmem:[#allocation2 + $0x90] sm:$0xff] %v375
  %393 = vst [vmem:[#allocation2 + $0x98] sm:$0xff] %v377
  %394 = vst [vmem:[#allocation2 + $0xe0] sm:$0xff] %v379
  %395 = vst [vmem:[#allocation2 + $0xe8] sm:$0xff] %v381
  %396 = vst [vmem:[#allocation2 + $0x130] sm:$0x3f] %v378
  %397 = vst [vmem:[#allocation2 + $0x138] sm:$0x3f] %v380
  %398 = vst [vmem:[#allocation2 + $0x130] sm:$0xc0] 0.0
  %399 = vst [vmem:[#allocation2 + $0x138] sm:$0xc0] 0.0
  %v400 = vld [vmem:[#allocation2] sm:$0xff]
  %v401 = vld [vmem:[#allocation2 + $0x8] sm:$0xff]
  %v402 = vld [vmem:[#allocation2 + $0x10] sm:$0xff]
  %v403 = vld [vmem:[#allocation2 + $0x18] sm:$0xff]
  %v404 = vld [vmem:[#allocation2 + $0x20] sm:$0xff]
  %v405 = vld [vmem:[#allocation2 + $0x28] sm:$0xff]
  %v406 = vld [vmem:[#allocation2 + $0x30] sm:$0xff]
  %v407 = vld [vmem:[#allocation2 + $0x38] sm:$0xff]
  %v408 = vld [vmem:[#allocation2 + $0x40] sm:$0xff]
  %v409 = vld [vmem:[#allocation2 + $0x48] sm:$0xff]
  %v410 = vld [vmem:[#allocation2 + $0x50] sm:$0xff]
  %v411 = vld [vmem:[#allocation2 + $0x58] sm:$0xff]
  %v412 = vld [vmem:[#allocation2 + $0x60] sm:$0xff]
  %v413 = vld [vmem:[#allocation2 + $0x68] sm:$0xff]
  %v414 = vld [vmem:[#allocation2 + $0x70] sm:$0xff]
  %v415 = vld [vmem:[#allocation2 + $0x78] sm:$0xff]
  %v416 = vld [vmem:[#allocation2 + $0x80] sm:$0xff]
  %v417 = vld [vmem:[#allocation2 + $0x88] sm:$0xff]
  %v418 = vld [vmem:[#allocation2 + $0x90] sm:$0xff]
  %v419 = vld [vmem:[#allocation2 + $0x98] sm:$0xff]
  %v420 = vld [vmem:[#allocation2 + $0xa0] sm:$0xff]
  %v421 = vld [vmem:[#allocation2 + $0xa8] sm:$0xff]
  %v422 = vld [vmem:[#allocation2 + $0xb0] sm:$0xff]
  %v423 = vld [vmem:[#allocation2 + $0xb8] sm:$0xff]
  %v424 = vld [vmem:[#allocation2 + $0xc0] sm:$0xff]
  %v425 = vld [vmem:[#allocation2 + $0xc8] sm:$0xff]
  %v426 = vld [vmem:[#allocation2 + $0xd0] sm:$0xff]
  %v427 = vld [vmem:[#allocation2 + $0xd8] sm:$0xff]
  %v428 = vld [vmem:[#allocation2 + $0xe0] sm:$0xff]
  %v429 = vld [vmem:[#allocation2 + $0xe8] sm:$0xff]
  %v430 = vld [vmem:[#allocation2 + $0xf0] sm:$0xff]
  %v431 = vld [vmem:[#allocation2 + $0xf8] sm:$0xff]
  %v432 = vld [vmem:[#allocation2 + $0x100] sm:$0xff]
  %v433 = vld [vmem:[#allocation2 + $0x108] sm:$0xff]
  %v434 = vld [vmem:[#allocation2 + $0x110] sm:$0xff]
  %v435 = vld [vmem:[#allocation2 + $0x118] sm:$0xff]
  %v436 = vld [vmem:[#allocation2 + $0x120] sm:$0xff]
  %v437 = vld [vmem:[#allocation2 + $0x128] sm:$0xff]
  %v438 = vld [vmem:[#allocation2 + $0x130] sm:$0xff]
  %v439 = vld [vmem:[#allocation2 + $0x138] sm:$0xff]
  %v440 = vld [vmem:[%s5 + $0x80] sm:$0xff]
  %v441 = vld [vmem:[%s5 + $0x88] sm:$0xff]
  %v442 = vld [vmem:[%s5 + $0x90] sm:$0xff]
  %v443 = vld [vmem:[%s5 + $0x98] sm:$0xff]
  %v444 = vld [vmem:[%s5 + $0xa0] sm:$0xff]
  %v445 = vld [vmem:[%s5 + $0xa8] sm:$0xff]
  %v446 = vld [vmem:[%s5 + $0xb0] sm:$0xff]
  %v447 = vld [vmem:[%s5 + $0xb8] sm:$0xff]
  %v448 = vld [vmem:[%s5 + $0xc0] sm:$0xff]
  %v449 = vld [vmem:[%s5 + $0xc8] sm:$0xff]
  %v450 = vld [vmem:[%s5 + $0xd0] sm:$0xff]
  %v451 = vld [vmem:[%s5 + $0xd8] sm:$0xff]
  %v452 = vld [vmem:[%s5 + $0xe0] sm:$0xff]
  %v453 = vld [vmem:[%s5 + $0xe8] sm:$0xff]
  %v454 = vld [vmem:[%s5 + $0xf0] sm:$0xff]
  %v455 = vld [vmem:[%s5 + $0xf8] sm:$0xff]
  %v456 = vld [vmem:[%s5 + $0x100] sm:$0xff]
  %v457 = vld [vmem:[%s5 + $0x108] sm:$0xff]
  %v458 = vld [vmem:[%s5 + $0x110] sm:$0xff]
  %v459 = vld [vmem:[%s5 + $0x118] sm:$0xff]
  %v460 = vld [vmem:[%s5 + $0x120] sm:$0xff]
  %v461 = vld [vmem:[%s5 + $0x128] sm:$0xff]
  %v462 = vld [vmem:[%s5 + $0x130] sm:$0xff]
  %v463 = vld [vmem:[%s5 + $0x138] sm:$0xff]
  %v464 = vld [vmem:[%s5 + $0x140] sm:$0xff]
  %v465 = vld [vmem:[%s5 + $0x148] sm:$0xff]
  %v466 = vld [vmem:[%s5 + $0x150] sm:$0xff]
  %v467 = vld [vmem:[%s5 + $0x158] sm:$0xff]
  %v468 = vld [vmem:[%s5 + $0x160] sm:$0xff]
  %v469 = vld [vmem:[%s5 + $0x168] sm:$0xff]
  %v470 = vld [vmem:[%s5 + $0x170] sm:$0xff]
  %v471 = vld [vmem:[%s5 + $0x178] sm:$0xff]
  %v472 = vld [vmem:[%s5 + $0x180] sm:$0xff]
  %v473 = vld [vmem:[%s5 + $0x188] sm:$0xff]
  %v474 = vld [vmem:[%s5 + $0x190] sm:$0xff]
  %v475 = vld [vmem:[%s5 + $0x198] sm:$0xff]
  %v476 = vld [vmem:[%s5 + $0x1a0] sm:$0xff]
  %v477 = vld [vmem:[%s5 + $0x1a8] sm:$0xff]
  %v478 = vld [vmem:[%s5 + $0x1b0] sm:$0xff]
  %v479 = vld [vmem:[%s5 + $0x1b8] sm:$0xff]
  %v480 = vld [vmem:[%s5 + $0x1c0] sm:$0xff]
  %v481 = vld [vmem:[%s5 + $0x1c8] sm:$0xff]
  %v482 = vld [vmem:[%s5 + $0x1d0] sm:$0xff]
  %v483 = vld [vmem:[%s5 + $0x1d8] sm:$0xff]
  %v484 = vld [vmem:[%s5 + $0x1e0] sm:$0xff]
  %v485 = vld [vmem:[%s5 + $0x1e8] sm:$0xff]
  %v486 = vld [vmem:[%s5 + $0x1f0] sm:$0xff]
  %v487 = vld [vmem:[%s5 + $0x1f8] sm:$0xff]
  %v488 = vld [vmem:[%s5 + $0x200] sm:$0xff]
  %v489 = vld [vmem:[%s5 + $0x208] sm:$0xff]
  %v490 = vld [vmem:[%s5 + $0x210] sm:$0xff]
  %v491 = vld [vmem:[%s5 + $0x218] sm:$0xff]
  %v492 = vld [vmem:[%s5 + $0x220] sm:$0xff]
  %v493 = vld [vmem:[%s5 + $0x228] sm:$0xff]
  %v494 = vld [vmem:[%s5 + $0x230] sm:$0xff]
  %v495 = vld [vmem:[%s5 + $0x238] sm:$0xff]
  %v496 = vld [vmem:[%s5 + $0x240] sm:$0xff]
  %v497 = vld [vmem:[%s5 + $0x248] sm:$0xff]
  %v498 = vld [vmem:[%s5 + $0x250] sm:$0xff]
  %v499 = vld [vmem:[%s5 + $0x258] sm:$0xff]
  %v500 = vld [vmem:[%s5 + $0x260] sm:$0xff]
  %v501 = vld [vmem:[%s5 + $0x268] sm:$0xff]
  %v502 = vld [vmem:[%s5 + $0x270] sm:$0xff]
  %v503 = vld [vmem:[%s5 + $0x278] sm:$0xff]
  %v504 = vld [vmem:[%s5 + $0x280] sm:$0xff]
  %v505 = vld [vmem:[%s5 + $0x288] sm:$0xff]
  %v506 = vld [vmem:[%s5 + $0x290] sm:$0xff]
  %v507 = vld [vmem:[%s5 + $0x298] sm:$0xff]
  %v508 = vld [vmem:[%s5 + $0x2a0] sm:$0xff]
  %v509 = vld [vmem:[%s5 + $0x2a8] sm:$0xff]
  %v510 = vld [vmem:[%s5 + $0x2b0] sm:$0xff]
  %v511 = vld [vmem:[%s5 + $0x2b8] sm:$0xff]
  %v512 = vld [vmem:[%s5 + $0x2c0] sm:$0xff]
  %v513 = vld [vmem:[%s5 + $0x2c8] sm:$0xff]
  %v514 = vld [vmem:[%s5 + $0x2d0] sm:$0xff]
  %v515 = vld [vmem:[%s5 + $0x2d8] sm:$0xff]
  %v516 = vld [vmem:[%s5 + $0x2e0] sm:$0xff]
  %v517 = vld [vmem:[%s5 + $0x2e8] sm:$0xff]
  %v518 = vld [vmem:[%s5 + $0x2f0] sm:$0xff]
  %v519 = vld [vmem:[%s5 + $0x2f8] sm:$0xff]
  %v520 = vld [vmem:[%s5 + $0x300] sm:$0xff]
  %v521 = vld [vmem:[%s5 + $0x308] sm:$0xff]
  %v522 = vld [vmem:[%s5 + $0x310] sm:$0xff]
  %v523 = vld [vmem:[%s5 + $0x318] sm:$0xff]
  %v524 = vld [vmem:[%s5 + $0x320] sm:$0xff]
  %v525 = vld [vmem:[%s5 + $0x328] sm:$0xff]
  %v526 = vld [vmem:[%s5 + $0x330] sm:$0xff]
  %v527 = vld [vmem:[%s5 + $0x338] sm:$0xff]
  %v528 = vld [vmem:[%s5 + $0x340] sm:$0xff]
  %v529 = vld [vmem:[%s5 + $0x348] sm:$0xff]
  %v530 = vld [vmem:[%s5 + $0x350] sm:$0xff]
  %v531 = vld [vmem:[%s5 + $0x358] sm:$0xff]
  %v532 = vld [vmem:[%s5 + $0x360] sm:$0xff]
  %v533 = vld [vmem:[%s5 + $0x368] sm:$0xff]
  %v534 = vld [vmem:[%s5 + $0x370] sm:$0xff]
  %v535 = vld [vmem:[%s5 + $0x378] sm:$0xff]
  %v536 = vld [vmem:[%s5 + $0x380] sm:$0xff]
  %v537 = vld [vmem:[%s5 + $0x388] sm:$0xff]
  %v538 = vld [vmem:[%s5 + $0x390] sm:$0xff]
  %v539 = vld [vmem:[%s5 + $0x398] sm:$0xff]
  %v540 = vld [vmem:[%s5 + $0x3a0] sm:$0xff]
  %v541 = vld [vmem:[%s5 + $0x3a8] sm:$0xff]
  %v542 = vld [vmem:[%s5 + $0x3b0] sm:$0xff]
  %v543 = vld [vmem:[%s5 + $0x3b8] sm:$0xff]
  %v544 = vld [vmem:[%s5 + $0x3c0] sm:$0xff]
  %v545 = vld [vmem:[%s5 + $0x3c8] sm:$0xff]
  %v546 = vld [vmem:[%s5 + $0x3d0] sm:$0xff]
  %v547 = vld [vmem:[%s5 + $0x3d8] sm:$0xff]
  %v548 = vld [vmem:[%s5 + $0x3e0] sm:$0xff]
  %v549 = vld [vmem:[%s5 + $0x3e8] sm:$0xff]
  %v550 = vld [vmem:[%s5 + $0x3f0] sm:$0xff]
  %v551 = vld [vmem:[%s5 + $0x3f8] sm:$0xff]
  %v552 = vld [vmem:[%s5 + $0x400] sm:$0xff]
  %v553 = vld [vmem:[%s5 + $0x408] sm:$0xff]
  %v554 = vld [vmem:[%s5 + $0x410] sm:$0xff]
  %v555 = vld [vmem:[%s5 + $0x418] sm:$0xff]
  %v556 = vld [vmem:[%s5 + $0x420] sm:$0xff]
  %v557 = vld [vmem:[%s5 + $0x428] sm:$0xff]
  %v558 = vld [vmem:[%s5 + $0x430] sm:$0xff]
  %v559 = vld [vmem:[%s5 + $0x438] sm:$0xff]
  %v560 = vld [vmem:[%s5 + $0x440] sm:$0xff]
  %v561 = vld [vmem:[%s5 + $0x448] sm:$0xff]
  %v562 = vld [vmem:[%s5 + $0x450] sm:$0xff]
  %v563 = vld [vmem:[%s5 + $0x458] sm:$0xff]
  %v564 = vld [vmem:[%s5 + $0x460] sm:$0xff]
  %v565 = vld [vmem:[%s5 + $0x468] sm:$0xff]
  %v566 = vld [vmem:[%s5 + $0x470] sm:$0xff]
  %v567 = vld [vmem:[%s5 + $0x478] sm:$0xff]
  %v568 = vld [vmem:[%s5 + $0x480] sm:$0xff]
  %v569 = vld [vmem:[%s5 + $0x488] sm:$0xff]
  %v570 = vld [vmem:[%s5 + $0x490] sm:$0xff]
  %v571 = vld [vmem:[%s5 + $0x498] sm:$0xff]
  %v572 = vld [vmem:[%s5 + $0x4a0] sm:$0xff]
  %v573 = vld [vmem:[%s5 + $0x4a8] sm:$0xff]
  %v574 = vld [vmem:[%s5 + $0x4b0] sm:$0xff]
  %v575 = vld [vmem:[%s5 + $0x4b8] sm:$0xff]
  %v576 = vld [vmem:[%s5 + $0x4c0] sm:$0xff]
  %v577 = vld [vmem:[%s5 + $0x4c8] sm:$0xff]
  %v578 = vld [vmem:[%s5 + $0x4d0] sm:$0xff]
  %v579 = vld [vmem:[%s5 + $0x4d8] sm:$0xff]
  %v580 = vld [vmem:[%s5 + $0x4e0] sm:$0xff]
  %v581 = vld [vmem:[%s5 + $0x4e8] sm:$0xff]
  %v582 = vld [vmem:[%s5 + $0x4f0] sm:$0xff]
  %v583 = vld [vmem:[%s5 + $0x4f8] sm:$0xff]
  %v584 = vld [vmem:[%s5 + $0x500] sm:$0xff]
  %v585 = vld [vmem:[%s5 + $0x508] sm:$0xff]
  %v586 = vld [vmem:[%s5 + $0x510] sm:$0xff]
  %v587 = vld [vmem:[%s5 + $0x518] sm:$0xff]
  %v588 = vld [vmem:[%s5 + $0x520] sm:$0xff]
  %v589 = vld [vmem:[%s5 + $0x528] sm:$0xff]
  %v590 = vld [vmem:[%s5 + $0x530] sm:$0xff]
  %v591 = vld [vmem:[%s5 + $0x538] sm:$0xff]
  %v592 = vld [vmem:[%s5 + $0x540] sm:$0xff]
  %v593 = vld [vmem:[%s5 + $0x548] sm:$0xff]
  %v594 = vld [vmem:[%s5 + $0x550] sm:$0xff]
  %v595 = vld [vmem:[%s5 + $0x558] sm:$0xff]
  %v596 = vld [vmem:[%s5 + $0x560] sm:$0xff]
  %v597 = vld [vmem:[%s5 + $0x568] sm:$0xff]
  %v598 = vld [vmem:[%s5 + $0x570] sm:$0xff]
  %v599 = vld [vmem:[%s5 + $0x578] sm:$0xff]
  %v600 = vpack.c.bf16 %v410, %v400
  %v601 = vpack.c.bf16 %v411, %v401
  %v602 = vpack.c.bf16 %v412, %v402
  %v603 = vpack.c.bf16 %v413, %v403
  %v604 = vpack.c.bf16 %v414, %v404
  %v605 = vpack.c.bf16 %v415, %v405
  %v606 = vpack.c.bf16 %v416, %v406
  %v607 = vpack.c.bf16 %v417, %v407
  %v608 = vpack.c.bf16 %v418, %v408
  %v609 = vpack.c.bf16 %v419, %v409
  %v610 = vpack.c.bf16 %v430, %v420
  %v611 = vpack.c.bf16 %v431, %v421
  %v612 = vpack.c.bf16 %v432, %v422
  %v613 = vpack.c.bf16 %v433, %v423
  %v614 = vpack.c.bf16 %v434, %v424
  %v615 = vpack.c.bf16 %v435, %v425
  %v616 = vpack.c.bf16 %v436, %v426
  %v617 = vpack.c.bf16 %v437, %v427
  %v618 = vpack.c.bf16 %v438, %v428
  %v619 = vpack.c.bf16 %v439, %v429
  %v620 = vld [vmem:[%s5 + $0x580] sm:$0x11]
  %v621 = vunpack.c.l.bf16 %v620
  %v622 = vunpack.c.h.bf16 %v620
  %v623 = vlaneseq
  %v624 = vshrl.u32 %v623, 7
  %v625 = vsub.s32 0, %v624
  %v626 = vrot.slane %v621, %v625
  %v627 = vlaneseq
  %v628 = vshrl.u32 %v627, 7
  %v629 = vsub.s32 0, %v628
  %v630 = vrot.slane %v622, %v629
  %v791 = vunpack.c.l.b16 %v440
  %v792 = vunpack.c.h.b16 %v440
  %v793 = vunpack.c.l.b16 %v441
  %v794 = vunpack.c.h.b16 %v441
  %v795 = vunpack.c.l.b16 %v442
  %v796 = vunpack.c.h.b16 %v442
  %v797 = vunpack.c.l.b16 %v443
  %v798 = vunpack.c.h.b16 %v443
  %v799 = vunpack.c.l.b16 %v444
  %v800 = vunpack.c.h.b16 %v444
  %v801 = vunpack.c.l.b16 %v445
  %v802 = vunpack.c.h.b16 %v445
  %v803 = vunpack.c.l.b16 %v446
  %v804 = vunpack.c.h.b16 %v446
  %v805 = vunpack.c.l.b16 %v447
  %v806 = vunpack.c.h.b16 %v447
  %v807 = vunpack.c.l.b16 %v448
  %v808 = vunpack.c.h.b16 %v448
  %v809 = vunpack.c.l.b16 %v449
  %v810 = vunpack.c.h.b16 %v449
  %v811 = vunpack.c.l.b16 %v450
  %v812 = vunpack.c.h.b16 %v450
  %v813 = vunpack.c.l.b16 %v451
  %v814 = vunpack.c.h.b16 %v451
  %v815 = vunpack.c.l.b16 %v452
  %v816 = vunpack.c.h.b16 %v452
  %v817 = vunpack.c.l.b16 %v453
  %v818 = vunpack.c.h.b16 %v453
  %v819 = vunpack.c.l.b16 %v454
  %v820 = vunpack.c.h.b16 %v454
  %v821 = vunpack.c.l.b16 %v455
  %v822 = vunpack.c.h.b16 %v455
  %v823 = vunpack.c.l.b16 %v456
  %v824 = vunpack.c.h.b16 %v456
  %v825 = vunpack.c.l.b16 %v457
  %v826 = vunpack.c.h.b16 %v457
  %v827 = vunpack.c.l.b16 %v458
  %v828 = vunpack.c.h.b16 %v458
  %v829 = vunpack.c.l.b16 %v459
  %v830 = vunpack.c.h.b16 %v459
  %v831 = vunpack.c.l.b16 %v460
  %v832 = vunpack.c.h.b16 %v460
  %v833 = vunpack.c.l.b16 %v461
  %v834 = vunpack.c.h.b16 %v461
  %v835 = vunpack.c.l.b16 %v462
  %v836 = vunpack.c.h.b16 %v462
  %v837 = vunpack.c.l.b16 %v463
  %v838 = vunpack.c.h.b16 %v463
  %v839 = vunpack.c.l.b16 %v464
  %v840 = vunpack.c.h.b16 %v464
  %v841 = vunpack.c.l.b16 %v465
  %v842 = vunpack.c.h.b16 %v465
  %v843 = vunpack.c.l.b16 %v466
  %v844 = vunpack.c.h.b16 %v466
  %v845 = vunpack.c.l.b16 %v467
  %v846 = vunpack.c.h.b16 %v467
  %v847 = vunpack.c.l.b16 %v468
  %v848 = vunpack.c.h.b16 %v468
  %v849 = vunpack.c.l.b16 %v469
  %v850 = vunpack.c.h.b16 %v469
  %v851 = vunpack.c.l.b16 %v470
  %v852 = vunpack.c.h.b16 %v470
  %v853 = vunpack.c.l.b16 %v471
  %v854 = vunpack.c.h.b16 %v471
  %v855 = vunpack.c.l.b16 %v472
  %v856 = vunpack.c.h.b16 %v472
  %v857 = vunpack.c.l.b16 %v473
  %v858 = vunpack.c.h.b16 %v473
  %v859 = vunpack.c.l.b16 %v474
  %v860 = vunpack.c.h.b16 %v474
  %v861 = vunpack.c.l.b16 %v475
  %v862 = vunpack.c.h.b16 %v475
  %v863 = vunpack.c.l.b16 %v476
  %v864 = vunpack.c.h.b16 %v476
  %v865 = vunpack.c.l.b16 %v477
  %v866 = vunpack.c.h.b16 %v477
  %v867 = vunpack.c.l.b16 %v478
  %v868 = vunpack.c.h.b16 %v478
  %v869 = vunpack.c.l.b16 %v479
  %v870 = vunpack.c.h.b16 %v479
  %v871 = vunpack.c.l.b16 %v480
  %v872 = vunpack.c.h.b16 %v480
  %v873 = vunpack.c.l.b16 %v481
  %v874 = vunpack.c.h.b16 %v481
  %v875 = vunpack.c.l.b16 %v482
  %v876 = vunpack.c.h.b16 %v482
  %v877 = vunpack.c.l.b16 %v483
  %v878 = vunpack.c.h.b16 %v483
  %v879 = vunpack.c.l.b16 %v484
  %v880 = vunpack.c.h.b16 %v484
  %v881 = vunpack.c.l.b16 %v485
  %v882 = vunpack.c.h.b16 %v485
  %v883 = vunpack.c.l.b16 %v486
  %v884 = vunpack.c.h.b16 %v486
  %v885 = vunpack.c.l.b16 %v487
  %v886 = vunpack.c.h.b16 %v487
  %v887 = vunpack.c.l.b16 %v488
  %v888 = vunpack.c.h.b16 %v488
  %v889 = vunpack.c.l.b16 %v489
  %v890 = vunpack.c.h.b16 %v489
  %v891 = vunpack.c.l.b16 %v490
  %v892 = vunpack.c.h.b16 %v490
  %v893 = vunpack.c.l.b16 %v491
  %v894 = vunpack.c.h.b16 %v491
  %v895 = vunpack.c.l.b16 %v492
  %v896 = vunpack.c.h.b16 %v492
  %v897 = vunpack.c.l.b16 %v493
  %v898 = vunpack.c.h.b16 %v493
  %v899 = vunpack.c.l.b16 %v494
  %v900 = vunpack.c.h.b16 %v494
  %v901 = vunpack.c.l.b16 %v495
  %v902 = vunpack.c.h.b16 %v495
  %v903 = vunpack.c.l.b16 %v496
  %v904 = vunpack.c.h.b16 %v496
  %v905 = vunpack.c.l.b16 %v497
  %v906 = vunpack.c.h.b16 %v497
  %v907 = vunpack.c.l.b16 %v498
  %v908 = vunpack.c.h.b16 %v498
  %v909 = vunpack.c.l.b16 %v499
  %v910 = vunpack.c.h.b16 %v499
  %v911 = vunpack.c.l.b16 %v500
  %v912 = vunpack.c.h.b16 %v500
  %v913 = vunpack.c.l.b16 %v501
  %v914 = vunpack.c.h.b16 %v501
  %v915 = vunpack.c.l.b16 %v502
  %v916 = vunpack.c.h.b16 %v502
  %v917 = vunpack.c.l.b16 %v503
  %v918 = vunpack.c.h.b16 %v503
  %v919 = vunpack.c.l.b16 %v504
  %v920 = vunpack.c.h.b16 %v504
  %v921 = vunpack.c.l.b16 %v505
  %v922 = vunpack.c.h.b16 %v505
  %v923 = vunpack.c.l.b16 %v506
  %v924 = vunpack.c.h.b16 %v506
  %v925 = vunpack.c.l.b16 %v507
  %v926 = vunpack.c.h.b16 %v507
  %v927 = vunpack.c.l.b16 %v508
  %v928 = vunpack.c.h.b16 %v508
  %v929 = vunpack.c.l.b16 %v509
  %v930 = vunpack.c.h.b16 %v509
  %v931 = vunpack.c.l.b16 %v510
  %v932 = vunpack.c.h.b16 %v510
  %v933 = vunpack.c.l.b16 %v511
  %v934 = vunpack.c.h.b16 %v511
  %v935 = vunpack.c.l.b16 %v512
  %v936 = vunpack.c.h.b16 %v512
  %v937 = vunpack.c.l.b16 %v513
  %v938 = vunpack.c.h.b16 %v513
  %v939 = vunpack.c.l.b16 %v514
  %v940 = vunpack.c.h.b16 %v514
  %v941 = vunpack.c.l.b16 %v515
  %v942 = vunpack.c.h.b16 %v515
  %v943 = vunpack.c.l.b16 %v516
  %v944 = vunpack.c.h.b16 %v516
  %v945 = vunpack.c.l.b16 %v517
  %v946 = vunpack.c.h.b16 %v517
  %v947 = vunpack.c.l.b16 %v518
  %v948 = vunpack.c.h.b16 %v518
  %v949 = vunpack.c.l.b16 %v519
  %v950 = vunpack.c.h.b16 %v519
  %v951 = vunpack.c.l.b16 %v520
  %v952 = vunpack.c.h.b16 %v520
  %v953 = vunpack.c.l.b16 %v521
  %v954 = vunpack.c.h.b16 %v521
  %v955 = vunpack.c.l.b16 %v522
  %v956 = vunpack.c.h.b16 %v522
  %v957 = vunpack.c.l.b16 %v523
  %v958 = vunpack.c.h.b16 %v523
  %v959 = vunpack.c.l.b16 %v524
  %v960 = vunpack.c.h.b16 %v524
  %v961 = vunpack.c.l.b16 %v525
  %v962 = vunpack.c.h.b16 %v525
  %v963 = vunpack.c.l.b16 %v526
  %v964 = vunpack.c.h.b16 %v526
  %v965 = vunpack.c.l.b16 %v527
  %v966 = vunpack.c.h.b16 %v527
  %v967 = vunpack.c.l.b16 %v528
  %v968 = vunpack.c.h.b16 %v528
  %v969 = vunpack.c.l.b16 %v529
  %v970 = vunpack.c.h.b16 %v529
  %v971 = vunpack.c.l.b16 %v530
  %v972 = vunpack.c.h.b16 %v530
  %v973 = vunpack.c.l.b16 %v531
  %v974 = vunpack.c.h.b16 %v531
  %v975 = vunpack.c.l.b16 %v532
  %v976 = vunpack.c.h.b16 %v532
  %v977 = vunpack.c.l.b16 %v533
  %v978 = vunpack.c.h.b16 %v533
  %v979 = vunpack.c.l.b16 %v534
  %v980 = vunpack.c.h.b16 %v534
  %v981 = vunpack.c.l.b16 %v535
  %v982 = vunpack.c.h.b16 %v535
  %v983 = vunpack.c.l.b16 %v536
  %v984 = vunpack.c.h.b16 %v536
  %v985 = vunpack.c.l.b16 %v537
  %v986 = vunpack.c.h.b16 %v537
  %v987 = vunpack.c.l.b16 %v538
  %v988 = vunpack.c.h.b16 %v538
  %v989 = vunpack.c.l.b16 %v539
  %v990 = vunpack.c.h.b16 %v539
  %v991 = vunpack.c.l.b16 %v540
  %v992 = vunpack.c.h.b16 %v540
  %v993 = vunpack.c.l.b16 %v541
  %v994 = vunpack.c.h.b16 %v541
  %v995 = vunpack.c.l.b16 %v542
  %v996 = vunpack.c.h.b16 %v542
  %v997 = vunpack.c.l.b16 %v543
  %v998 = vunpack.c.h.b16 %v543
  %v999 = vunpack.c.l.b16 %v544
  %v1000 = vunpack.c.h.b16 %v544
  %v1001 = vunpack.c.l.b16 %v545
  %v1002 = vunpack.c.h.b16 %v545
  %v1003 = vunpack.c.l.b16 %v546
  %v1004 = vunpack.c.h.b16 %v546
  %v1005 = vunpack.c.l.b16 %v547
  %v1006 = vunpack.c.h.b16 %v547
  %v1007 = vunpack.c.l.b16 %v548
  %v1008 = vunpack.c.h.b16 %v548
  %v1009 = vunpack.c.l.b16 %v549
  %v1010 = vunpack.c.h.b16 %v549
  %v1011 = vunpack.c.l.b16 %v550
  %v1012 = vunpack.c.h.b16 %v550
  %v1013 = vunpack.c.l.b16 %v551
  %v1014 = vunpack.c.h.b16 %v551
  %v1015 = vunpack.c.l.b16 %v552
  %v1016 = vunpack.c.h.b16 %v552
  %v1017 = vunpack.c.l.b16 %v553
  %v1018 = vunpack.c.h.b16 %v553
  %v1019 = vunpack.c.l.b16 %v554
  %v1020 = vunpack.c.h.b16 %v554
  %v1021 = vunpack.c.l.b16 %v555
  %v1022 = vunpack.c.h.b16 %v555
  %v1023 = vunpack.c.l.b16 %v556
  %v1024 = vunpack.c.h.b16 %v556
  %v1025 = vunpack.c.l.b16 %v557
  %v1026 = vunpack.c.h.b16 %v557
  %v1027 = vunpack.c.l.b16 %v558
  %v1028 = vunpack.c.h.b16 %v558
  %v1029 = vunpack.c.l.b16 %v559
  %v1030 = vunpack.c.h.b16 %v559
  %v1031 = vunpack.c.l.b16 %v560
  %v1032 = vunpack.c.h.b16 %v560
  %v1033 = vunpack.c.l.b16 %v561
  %v1034 = vunpack.c.h.b16 %v561
  %v1035 = vunpack.c.l.b16 %v562
  %v1036 = vunpack.c.h.b16 %v562
  %v1037 = vunpack.c.l.b16 %v563
  %v1038 = vunpack.c.h.b16 %v563
  %v1039 = vunpack.c.l.b16 %v564
  %v1040 = vunpack.c.h.b16 %v564
  %v1041 = vunpack.c.l.b16 %v565
  %v1042 = vunpack.c.h.b16 %v565
  %v1043 = vunpack.c.l.b16 %v566
  %v1044 = vunpack.c.h.b16 %v566
  %v1045 = vunpack.c.l.b16 %v567
  %v1046 = vunpack.c.h.b16 %v567
  %v1047 = vunpack.c.l.b16 %v568
  %v1048 = vunpack.c.h.b16 %v568
  %v1049 = vunpack.c.l.b16 %v569
  %v1050 = vunpack.c.h.b16 %v569
  %v1051 = vunpack.c.l.b16 %v570
  %v1052 = vunpack.c.h.b16 %v570
  %v1053 = vunpack.c.l.b16 %v571
  %v1054 = vunpack.c.h.b16 %v571
  %v1055 = vunpack.c.l.b16 %v572
  %v1056 = vunpack.c.h.b16 %v572
  %v1057 = vunpack.c.l.b16 %v573
  %v1058 = vunpack.c.h.b16 %v573
  %v1059 = vunpack.c.l.b16 %v574
  %v1060 = vunpack.c.h.b16 %v574
  %v1061 = vunpack.c.l.b16 %v575
  %v1062 = vunpack.c.h.b16 %v575
  %v1063 = vunpack.c.l.b16 %v576
  %v1064 = vunpack.c.h.b16 %v576
  %v1065 = vunpack.c.l.b16 %v577
  %v1066 = vunpack.c.h.b16 %v577
  %v1067 = vunpack.c.l.b16 %v578
  %v1068 = vunpack.c.h.b16 %v578
  %v1069 = vunpack.c.l.b16 %v579
  %v1070 = vunpack.c.h.b16 %v579
  %v1071 = vunpack.c.l.b16 %v580
  %v1072 = vunpack.c.h.b16 %v580
  %v1073 = vunpack.c.l.b16 %v581
  %v1074 = vunpack.c.h.b16 %v581
  %v1075 = vunpack.c.l.b16 %v582
  %v1076 = vunpack.c.h.b16 %v582
  %v1077 = vunpack.c.l.b16 %v583
  %v1078 = vunpack.c.h.b16 %v583
  %v1079 = vunpack.c.l.b16 %v584
  %v1080 = vunpack.c.h.b16 %v584
  %v1081 = vunpack.c.l.b16 %v585
  %v1082 = vunpack.c.h.b16 %v585
  %v1083 = vunpack.c.l.b16 %v586
  %v1084 = vunpack.c.h.b16 %v586
  %v1085 = vunpack.c.l.b16 %v587
  %v1086 = vunpack.c.h.b16 %v587
  %v1087 = vunpack.c.l.b16 %v588
  %v1088 = vunpack.c.h.b16 %v588
  %v1089 = vunpack.c.l.b16 %v589
  %v1090 = vunpack.c.h.b16 %v589
  %v1091 = vunpack.c.l.b16 %v590
  %v1092 = vunpack.c.h.b16 %v590
  %v1093 = vunpack.c.l.b16 %v591
  %v1094 = vunpack.c.h.b16 %v591
  %v1095 = vunpack.c.l.b16 %v592
  %v1096 = vunpack.c.h.b16 %v592
  %v1097 = vunpack.c.l.b16 %v593
  %v1098 = vunpack.c.h.b16 %v593
  %v1099 = vunpack.c.l.b16 %v594
  %v1100 = vunpack.c.h.b16 %v594
  %v1101 = vunpack.c.l.b16 %v595
  %v1102 = vunpack.c.h.b16 %v595
  %v1103 = vunpack.c.l.b16 %v596
  %v1104 = vunpack.c.h.b16 %v596
  %v1105 = vunpack.c.l.b16 %v597
  %v1106 = vunpack.c.h.b16 %v597
  %v1107 = vunpack.c.l.b16 %v598
  %v1108 = vunpack.c.h.b16 %v598
  %v1109 = vunpack.c.l.b16 %v599
  %v1110 = vunpack.c.h.b16 %v599
  %v1111 = vpack.c.b16 %v793, %v791
  %v1112 = vpack.c.b16 %v794, %v792
  %v1113 = vpack.c.b16 %v797, %v795
  %v1114 = vpack.c.b16 %v798, %v796
  %v1115 = vpack.c.b16 %v801, %v799
  %v1116 = vpack.c.b16 %v802, %v800
  %v1117 = vpack.c.b16 %v805, %v803
  %v1118 = vpack.c.b16 %v806, %v804
  %v1119 = vpack.c.b16 %v809, %v807
  %v1120 = vpack.c.b16 %v810, %v808
  %v1121 = vpack.c.b16 %v813, %v811
  %v1122 = vpack.c.b16 %v814, %v812
  %v1123 = vpack.c.b16 %v817, %v815
  %v1124 = vpack.c.b16 %v818, %v816
  %v1125 = vpack.c.b16 %v821, %v819
  %v1126 = vpack.c.b16 %v822, %v820
  %v1127 = vpack.c.b16 %v825, %v823
  %v1128 = vpack.c.b16 %v826, %v824
  %v1129 = vpack.c.b16 %v829, %v827
  %v1130 = vpack.c.b16 %v830, %v828
  %v1131 = vpack.c.b16 %v833, %v831
  %v1132 = vpack.c.b16 %v834, %v832
  %v1133 = vpack.c.b16 %v837, %v835
  %v1134 = vpack.c.b16 %v838, %v836
  %v1135 = vpack.c.b16 %v841, %v839
  %v1136 = vpack.c.b16 %v842, %v840
  %v1137 = vpack.c.b16 %v845, %v843
  %v1138 = vpack.c.b16 %v846, %v844
  %v1139 = vpack.c.b16 %v849, %v847
  %v1140 = vpack.c.b16 %v850, %v848
  %v1141 = vpack.c.b16 %v853, %v851
  %v1142 = vpack.c.b16 %v854, %v852
  %v1143 = vpack.c.b16 %v857, %v855
  %v1144 = vpack.c.b16 %v858, %v856
  %v1145 = vpack.c.b16 %v861, %v859
  %v1146 = vpack.c.b16 %v862, %v860
  %v1147 = vpack.c.b16 %v865, %v863
  %v1148 = vpack.c.b16 %v866, %v864
  %v1149 = vpack.c.b16 %v869, %v867
  %v1150 = vpack.c.b16 %v870, %v868
  %v1151 = vpack.c.b16 %v873, %v871
  %v1152 = vpack.c.b16 %v874, %v872
  %v1153 = vpack.c.b16 %v877, %v875
  %v1154 = vpack.c.b16 %v878, %v876
  %v1155 = vpack.c.b16 %v881, %v879
  %v1156 = vpack.c.b16 %v882, %v880
  %v1157 = vpack.c.b16 %v885, %v883
  %v1158 = vpack.c.b16 %v886, %v884
  %v1159 = vpack.c.b16 %v889, %v887
  %v1160 = vpack.c.b16 %v890, %v888
  %v1161 = vpack.c.b16 %v893, %v891
  %v1162 = vpack.c.b16 %v894, %v892
  %v1163 = vpack.c.b16 %v897, %v895
  %v1164 = vpack.c.b16 %v898, %v896
  %v1165 = vpack.c.b16 %v901, %v899
  %v1166 = vpack.c.b16 %v902, %v900
  %v1167 = vpack.c.b16 %v905, %v903
  %v1168 = vpack.c.b16 %v906, %v904
  %v1169 = vpack.c.b16 %v909, %v907
  %v1170 = vpack.c.b16 %v910, %v908
  %v1171 = vpack.c.b16 %v913, %v911
  %v1172 = vpack.c.b16 %v914, %v912
  %v1173 = vpack.c.b16 %v917, %v915
  %v1174 = vpack.c.b16 %v918, %v916
  %v1175 = vpack.c.b16 %v921, %v919
  %v1176 = vpack.c.b16 %v922, %v920
  %v1177 = vpack.c.b16 %v925, %v923
  %v1178 = vpack.c.b16 %v926, %v924
  %v1179 = vpack.c.b16 %v929, %v927
  %v1180 = vpack.c.b16 %v930, %v928
  %v1181 = vpack.c.b16 %v933, %v931
  %v1182 = vpack.c.b16 %v934, %v932
  %v1183 = vpack.c.b16 %v937, %v935
  %v1184 = vpack.c.b16 %v938, %v936
  %v1185 = vpack.c.b16 %v941, %v939
  %v1186 = vpack.c.b16 %v942, %v940
  %v1187 = vpack.c.b16 %v945, %v943
  %v1188 = vpack.c.b16 %v946, %v944
  %v1189 = vpack.c.b16 %v949, %v947
  %v1190 = vpack.c.b16 %v950, %v948
  %v1191 = vpack.c.b16 %v953, %v951
  %v1192 = vpack.c.b16 %v954, %v952
  %v1193 = vpack.c.b16 %v957, %v955
  %v1194 = vpack.c.b16 %v958, %v956
  %v1195 = vpack.c.b16 %v961, %v959
  %v1196 = vpack.c.b16 %v962, %v960
  %v1197 = vpack.c.b16 %v965, %v963
  %v1198 = vpack.c.b16 %v966, %v964
  %v1199 = vpack.c.b16 %v969, %v967
  %v1200 = vpack.c.b16 %v970, %v968
  %v1201 = vpack.c.b16 %v973, %v971
  %v1202 = vpack.c.b16 %v974, %v972
  %v1203 = vpack.c.b16 %v977, %v975
  %v1204 = vpack.c.b16 %v978, %v976
  %v1205 = vpack.c.b16 %v981, %v979
  %v1206 = vpack.c.b16 %v982, %v980
  %v1207 = vpack.c.b16 %v985, %v983
  %v1208 = vpack.c.b16 %v986, %v984
  %v1209 = vpack.c.b16 %v989, %v987
  %v1210 = vpack.c.b16 %v990, %v988
  %v1211 = vpack.c.b16 %v993, %v991
  %v1212 = vpack.c.b16 %v994, %v992
  %v1213 = vpack.c.b16 %v997, %v995
  %v1214 = vpack.c.b16 %v998, %v996
  %v1215 = vpack.c.b16 %v1001, %v999
  %v1216 = vpack.c.b16 %v1002, %v1000
  %v1217 = vpack.c.b16 %v1005, %v1003
  %v1218 = vpack.c.b16 %v1006, %v1004
  %v1219 = vpack.c.b16 %v1009, %v1007
  %v1220 = vpack.c.b16 %v1010, %v1008
  %v1221 = vpack.c.b16 %v1013, %v1011
  %v1222 = vpack.c.b16 %v1014, %v1012
  %v1223 = vpack.c.b16 %v1017, %v1015
  %v1224 = vpack.c.b16 %v1018, %v1016
  %v1225 = vpack.c.b16 %v1021, %v1019
  %v1226 = vpack.c.b16 %v1022, %v1020
  %v1227 = vpack.c.b16 %v1025, %v1023
  %v1228 = vpack.c.b16 %v1026, %v1024
  %v1229 = vpack.c.b16 %v1029, %v1027
  %v1230 = vpack.c.b16 %v1030, %v1028
  %v1231 = vpack.c.b16 %v1033, %v1031
  %v1232 = vpack.c.b16 %v1034, %v1032
  %v1233 = vpack.c.b16 %v1037, %v1035
  %v1234 = vpack.c.b16 %v1038, %v1036
  %v1235 = vpack.c.b16 %v1041, %v1039
  %v1236 = vpack.c.b16 %v1042, %v1040
  %v1237 = vpack.c.b16 %v1045, %v1043
  %v1238 = vpack.c.b16 %v1046, %v1044
  %v1239 = vpack.c.b16 %v1049, %v1047
  %v1240 = vpack.c.b16 %v1050, %v1048
  %v1241 = vpack.c.b16 %v1053, %v1051
  %v1242 = vpack.c.b16 %v1054, %v1052
  %v1243 = vpack.c.b16 %v1057, %v1055
  %v1244 = vpack.c.b16 %v1058, %v1056
  %v1245 = vpack.c.b16 %v1061, %v1059
  %v1246 = vpack.c.b16 %v1062, %v1060
  %v1247 = vpack.c.b16 %v1065, %v1063
  %v1248 = vpack.c.b16 %v1066, %v1064
  %v1249 = vpack.c.b16 %v1069, %v1067
  %v1250 = vpack.c.b16 %v1070, %v1068
  %v1251 = vpack.c.b16 %v1073, %v1071
  %v1252 = vpack.c.b16 %v1074, %v1072
  %v1253 = vpack.c.b16 %v1077, %v1075
  %v1254 = vpack.c.b16 %v1078, %v1076
  %v1255 = vpack.c.b16 %v1081, %v1079
  %v1256 = vpack.c.b16 %v1082, %v1080
  %v1257 = vpack.c.b16 %v1085, %v1083
  %v1258 = vpack.c.b16 %v1086, %v1084
  %v1259 = vpack.c.b16 %v1089, %v1087
  %v1260 = vpack.c.b16 %v1090, %v1088
  %v1261 = vpack.c.b16 %v1093, %v1091
  %v1262 = vpack.c.b16 %v1094, %v1092
  %v1263 = vpack.c.b16 %v1097, %v1095
  %v1264 = vpack.c.b16 %v1098, %v1096
  %v1265 = vpack.c.b16 %v1101, %v1099
  %v1266 = vpack.c.b16 %v1102, %v1100
  %v1267 = vpack.c.b16 %v1105, %v1103
  %v1268 = vpack.c.b16 %v1106, %v1104
  %v1269 = vpack.c.b16 %v1109, %v1107
  %v1270 = vpack.c.b16 %v1110, %v1108
  %1431 = vmatprep.subr.bf16.mxu0 %v1112
  %1432 = vmatpush1.bf16.msra.mxu0 %v1111
  %1433 = vmatprep.subr.bf16.mxu0 %v1114
  %1434 = vmatpush1.bf16.msra.mxu0 %v1113
  %1435 = vmatprep.subr.bf16.mxu0 %v1116
  %1436 = vmatpush1.bf16.msra.mxu0 %v1115
  %1437 = vmatprep.subr.bf16.mxu0 %v1118
  %1438 = vmatpush1.bf16.msra.mxu0 %v1117
  %1439 = vmatprep.subr.bf16.mxu0 %v1120
  %1440 = vmatpush1.bf16.msra.mxu0 %v1119
  %1441 = vmatprep.subr.bf16.mxu0 %v1122
  %1442 = vmatpush1.bf16.msra.mxu0 %v1121
  %1443 = vmatprep.subr.bf16.mxu0 %v1124
  %1444 = vmatpush1.bf16.msra.mxu0 %v1123
  %1445 = vmatprep.subr.bf16.mxu0 %v1126
  %1446 = vmatpush1.bf16.msra.mxu0 %v1125
  %1447 = vmatprep.subr.bf16.mxu0 %v1128
  %1448 = vmatpush1.bf16.msra.mxu0 %v1127
  %1449 = vmatprep.subr.bf16.mxu0 %v1130
  %1450 = vmatpush1.bf16.msra.mxu0 %v1129
  %1451 = vmatprep.subr.bf16.mxu0 %v1132
  %1452 = vmatpush1.bf16.msra.mxu0 %v1131
  %1453 = vmatprep.subr.bf16.mxu0 %v1134
  %1454 = vmatpush1.bf16.msra.mxu0 %v1133
  %1455 = vmatprep.subr.bf16.mxu0 %v1136
  %1456 = vmatpush1.bf16.msra.mxu0 %v1135
  %1457 = vmatprep.subr.bf16.mxu0 %v1138
  %1458 = vmatpush1.bf16.msra.mxu0 %v1137
  %1459 = vmatprep.subr.bf16.mxu0 %v1140
  %1460 = vmatpush1.bf16.msra.mxu0 %v1139
  %1461 = vmatprep.subr.bf16.mxu0 %v1142
  %1462 = vmatpush1.bf16.msra.mxu0 %v1141
  %1463 = vmatprep.mubr.bf16.mxu0 %v601
  %1464 = vmatmul.mubr.bf16.gmra.mrb[0].mxu0 %v600
  %v1465 = vpop.f32.mrb[0].mxu0
  %v1466 = vadd.f32 %v626, %v1465
  %v1467 = vpop.f32.mrb[0].mxu0
  %v1468 = vadd.f32 %v630, %v1467
  %v1469 = vpop.f32.mrb[0].mxu0
  %v1470 = vadd.f32 %v626, %v1469
  %v1471 = vpop.f32.mrb[0].mxu0
  %v1472 = vadd.f32 %v630, %v1471
  %1473 = vmatprep.mubr.bf16.mxu0 %v611
  %1474 = vmatmul.mubr.bf16.gmra.mrb[0].mxu0 %v610
  %v1475 = vpop.f32.mrb[0].mxu0
  %v1476 = vadd.f32 %v626, %v1475
  %v1477 = vpop.f32.mrb[0].mxu0
  %v1478 = vadd.f32 %v630, %v1477
  %v1479 = vpop.f32.mrb[0].mxu0
  %v1480 = vadd.f32 %v626, %v1479
  %v1481 = vpop.f32.mrb[0].mxu0
  %v1482 = vadd.f32 %v630, %v1481
  %1483 = vdwg.mxu0
  %1484 = vmatprep.subr.bf16.mxu0 %v1144
  %1485 = vmatpush1.bf16.msra.mxu0 %v1143
  %1486 = vmatprep.subr.bf16.mxu0 %v1146
  %1487 = vmatpush1.bf16.msra.mxu0 %v1145
  %1488 = vmatprep.subr.bf16.mxu0 %v1148
  %1489 = vmatpush1.bf16.msra.mxu0 %v1147
  %1490 = vmatprep.subr.bf16.mxu0 %v1150
  %1491 = vmatpush1.bf16.msra.mxu0 %v1149
  %1492 = vmatprep.subr.bf16.mxu0 %v1152
  %1493 = vmatpush1.bf16.msra.mxu0 %v1151
  %1494 = vmatprep.subr.bf16.mxu0 %v1154
  %1495 = vmatpush1.bf16.msra.mxu0 %v1153
  %1496 = vmatprep.subr.bf16.mxu0 %v1156
  %1497 = vmatpush1.bf16.msra.mxu0 %v1155
  %1498 = vmatprep.subr.bf16.mxu0 %v1158
  %1499 = vmatpush1.bf16.msra.mxu0 %v1157
  %1500 = vmatprep.subr.bf16.mxu0 %v1160
  %1501 = vmatpush1.bf16.msra.mxu0 %v1159
  %1502 = vmatprep.subr.bf16.mxu0 %v1162
  %1503 = vmatpush1.bf16.msra.mxu0 %v1161
  %1504 = vmatprep.subr.bf16.mxu0 %v1164
  %1505 = vmatpush1.bf16.msra.mxu0 %v1163
  %1506 = vmatprep.subr.bf16.mxu0 %v1166
  %1507 = vmatpush1.bf16.msra.mxu0 %v1165
  %1508 = vmatprep.subr.bf16.mxu0 %v1168
  %1509 = vmatpush1.bf16.msra.mxu0 %v1167
  %1510 = vmatprep.subr.bf16.mxu0 %v1170
  %1511 = vmatpush1.bf16.msra.mxu0 %v1169
  %1512 = vmatprep.subr.bf16.mxu0 %v1172
  %1513 = vmatpush1.bf16.msra.mxu0 %v1171
  %1514 = vmatprep.subr.bf16.mxu0 %v1174
  %1515 = vmatpush1.bf16.msra.mxu0 %v1173
  %1516 = vmatprep.mubr.bf16.mxu0 %v603
  %1517 = vmatmul.mubr.bf16.gmra.mrb[0].mxu0 %v602
  %v1518 = vpop.f32.mrb[0].mxu0
  %v1519 = vadd.f32 %v1466, %v1518
  %v1520 = vpop.f32.mrb[0].mxu0
  %v1521 = vadd.f32 %v1468, %v1520
  %v1522 = vpop.f32.mrb[0].mxu0
  %v1523 = vadd.f32 %v1470, %v1522
  %v1524 = vpop.f32.mrb[0].mxu0
  %v1525 = vadd.f32 %v1472, %v1524
  %1526 = vmatprep.mubr.bf16.mxu0 %v613
  %1527 = vmatmul.mubr.bf16.gmra.mrb[0].mxu0 %v612
  %v1528 = vpop.f32.mrb[0].mxu0
  %v1529 = vadd.f32 %v1476, %v1528
  %v1530 = vpop.f32.mrb[0].mxu0
  %v1531 = vadd.f32 %v1478, %v1530
  %v1532 = vpop.f32.mrb[0].mxu0
  %v1533 = vadd.f32 %v1480, %v1532
  %v1534 = vpop.f32.mrb[0].mxu0
  %v1535 = vadd.f32 %v1482, %v1534
  %1536 = vdwg.mxu0
  %1537 = vmatprep.subr.bf16.mxu0 %v1176
  %1538 = vmatpush1.bf16.msra.mxu0 %v1175
  %1539 = vmatprep.subr.bf16.mxu0 %v1178
  %1540 = vmatpush1.bf16.msra.mxu0 %v1177
  %1541 = vmatprep.subr.bf16.mxu0 %v1180
  %1542 = vmatpush1.bf16.msra.mxu0 %v1179
  %1543 = vmatprep.subr.bf16.mxu0 %v1182
  %1544 = vmatpush1.bf16.msra.mxu0 %v1181
  %1545 = vmatprep.subr.bf16.mxu0 %v1184
  %1546 = vmatpush1.bf16.msra.mxu0 %v1183
  %1547 = vmatprep.subr.bf16.mxu0 %v1186
  %1548 = vmatpush1.bf16.msra.mxu0 %v1185
  %1549 = vmatprep.subr.bf16.mxu0 %v1188
  %1550 = vmatpush1.bf16.msra.mxu0 %v1187
  %1551 = vmatprep.subr.bf16.mxu0 %v1190
  %1552 = vmatpush1.bf16.msra.mxu0 %v1189
  %1553 = vmatprep.subr.bf16.mxu0 %v1192
  %1554 = vmatpush1.bf16.msra.mxu0 %v1191
  %1555 = vmatprep.subr.bf16.mxu0 %v1194
  %1556 = vmatpush1.bf16.msra.mxu0 %v1193
  %1557 = vmatprep.subr.bf16.mxu0 %v1196
  %1558 = vmatpush1.bf16.msra.mxu0 %v1195
  %1559 = vmatprep.subr.bf16.mxu0 %v1198
  %1560 = vmatpush1.bf16.msra.mxu0 %v1197
  %1561 = vmatprep.subr.bf16.mxu0 %v1200
  %1562 = vmatpush1.bf16.msra.mxu0 %v1199
  %1563 = vmatprep.subr.bf16.mxu0 %v1202
  %1564 = vmatpush1.bf16.msra.mxu0 %v1201
  %1565 = vmatprep.subr.bf16.mxu0 %v1204
  %1566 = vmatpush1.bf16.msra.mxu0 %v1203
  %1567 = vmatprep.subr.bf16.mxu0 %v1206
  %1568 = vmatpush1.bf16.msra.mxu0 %v1205
  %1569 = vmatprep.mubr.bf16.mxu0 %v605
  %1570 = vmatmul.mubr.bf16.gmra.mrb[0].mxu0 %v604
  %v1571 = vpop.f32.mrb[0].mxu0
  %v1572 = vadd.f32 %v1519, %v1571
  %v1573 = vpop.f32.mrb[0].mxu0
  %v1574 = vadd.f32 %v1521, %v1573
  %v1575 = vpop.f32.mrb[0].mxu0
  %v1576 = vadd.f32 %v1523, %v1575
  %v1577 = vpop.f32.mrb[0].mxu0
  %v1578 = vadd.f32 %v1525, %v1577
  %1579 = vmatprep.mubr.bf16.mxu0 %v615
  %1580 = vmatmul.mubr.bf16.gmra.mrb[0].mxu0 %v614
  %v1581 = vpop.f32.mrb[0].mxu0
  %v1582 = vadd.f32 %v1529, %v1581
  %v1583 = vpop.f32.mrb[0].mxu0
  %v1584 = vadd.f32 %v1531, %v1583
  %v1585 = vpop.f32.mrb[0].mxu0
  %v1586 = vadd.f32 %v1533, %v1585
  %v1587 = vpop.f32.mrb[0].mxu0
  %v1588 = vadd.f32 %v1535, %v1587
  %1589 = vdwg.mxu0
  %1590 = vmatprep.subr.bf16.mxu0 %v1208
  %1591 = vmatpush1.bf16.msra.mxu0 %v1207
  %1592 = vmatprep.subr.bf16.mxu0 %v1210
  %1593 = vmatpush1.bf16.msra.mxu0 %v1209
  %1594 = vmatprep.subr.bf16.mxu0 %v1212
  %1595 = vmatpush1.bf16.msra.mxu0 %v1211
  %1596 = vmatprep.subr.bf16.mxu0 %v1214
  %1597 = vmatpush1.bf16.msra.mxu0 %v1213
  %1598 = vmatprep.subr.bf16.mxu0 %v1216
  %1599 = vmatpush1.bf16.msra.mxu0 %v1215
  %1600 = vmatprep.subr.bf16.mxu0 %v1218
  %1601 = vmatpush1.bf16.msra.mxu0 %v1217
  %1602 = vmatprep.subr.bf16.mxu0 %v1220
  %1603 = vmatpush1.bf16.msra.mxu0 %v1219
  %1604 = vmatprep.subr.bf16.mxu0 %v1222
  %1605 = vmatpush1.bf16.msra.mxu0 %v1221
  %1606 = vmatprep.subr.bf16.mxu0 %v1224
  %1607 = vmatpush1.bf16.msra.mxu0 %v1223
  %1608 = vmatprep.subr.bf16.mxu0 %v1226
  %1609 = vmatpush1.bf16.msra.mxu0 %v1225
  %1610 = vmatprep.subr.bf16.mxu0 %v1228
  %1611 = vmatpush1.bf16.msra.mxu0 %v1227
  %1612 = vmatprep.subr.bf16.mxu0 %v1230
  %1613 = vmatpush1.bf16.msra.mxu0 %v1229
  %1614 = vmatprep.subr.bf16.mxu0 %v1232
  %1615 = vmatpush1.bf16.msra.mxu0 %v1231
  %1616 = vmatprep.subr.bf16.mxu0 %v1234
  %1617 = vmatpush1.bf16.msra.mxu0 %v1233
  %1618 = vmatprep.subr.bf16.mxu0 %v1236
  %1619 = vmatpush1.bf16.msra.mxu0 %v1235
  %1620 = vmatprep.subr.bf16.mxu0 %v1238
  %1621 = vmatpush1.bf16.msra.mxu0 %v1237
  %1622 = vmatprep.mubr.bf16.mxu0 %v607
  %1623 = vmatmul.mubr.bf16.gmra.mrb[0].mxu0 %v606
  %v1624 = vpop.f32.mrb[0].mxu0
  %v1625 = vadd.f32 %v1572, %v1624
  %v1626 = vpop.f32.mrb[0].mxu0
  %v1627 = vadd.f32 %v1574, %v1626
  %v1628 = vpop.f32.mrb[0].mxu0
  %v1629 = vadd.f32 %v1576, %v1628
  %v1630 = vpop.f32.mrb[0].mxu0
  %v1631 = vadd.f32 %v1578, %v1630
  %1632 = vmatprep.mubr.bf16.mxu0 %v617
  %1633 = vmatmul.mubr.bf16.gmra.mrb[0].mxu0 %v616
  %v1634 = vpop.f32.mrb[0].mxu0
  %v1635 = vadd.f32 %v1582, %v1634
  %v1636 = vpop.f32.mrb[0].mxu0
  %v1637 = vadd.f32 %v1584, %v1636
  %v1638 = vpop.f32.mrb[0].mxu0
  %v1639 = vadd.f32 %v1586, %v1638
  %v1640 = vpop.f32.mrb[0].mxu0
  %v1641 = vadd.f32 %v1588, %v1640
  %1642 = vdwg.mxu0
  %1643 = vmatprep.subr.bf16.mxu0 %v1240
  %1644 = vmatpush1.bf16.msra.mxu0 %v1239
  %1645 = vmatprep.subr.bf16.mxu0 %v1242
  %1646 = vmatpush1.bf16.msra.mxu0 %v1241
  %1647 = vmatprep.subr.bf16.mxu0 %v1244
  %1648 = vmatpush1.bf16.msra.mxu0 %v1243
  %1649 = vmatprep.subr.bf16.mxu0 %v1246
  %1650 = vmatpush1.bf16.msra.mxu0 %v1245
  %1651 = vmatprep.subr.bf16.mxu0 %v1248
  %1652 = vmatpush1.bf16.msra.mxu0 %v1247
  %1653 = vmatprep.subr.bf16.mxu0 %v1250
  %1654 = vmatpush1.bf16.msra.mxu0 %v1249
  %1655 = vmatprep.subr.bf16.mxu0 %v1252
  %1656 = vmatpush1.bf16.msra.mxu0 %v1251
  %1657 = vmatprep.subr.bf16.mxu0 %v1254
  %1658 = vmatpush1.bf16.msra.mxu0 %v1253
  %1659 = vmatprep.subr.bf16.mxu0 %v1256
  %1660 = vmatpush1.bf16.msra.mxu0 %v1255
  %1661 = vmatprep.subr.bf16.mxu0 %v1258
  %1662 = vmatpush1.bf16.msra.mxu0 %v1257
  %1663 = vmatprep.subr.bf16.mxu0 %v1260
  %1664 = vmatpush1.bf16.msra.mxu0 %v1259
  %1665 = vmatprep.subr.bf16.mxu0 %v1262
  %1666 = vmatpush1.bf16.msra.mxu0 %v1261
  %1667 = vmatprep.subr.bf16.mxu0 %v1264
  %1668 = vmatpush1.bf16.msra.mxu0 %v1263
  %1669 = vmatprep.subr.bf16.mxu0 %v1266
  %1670 = vmatpush1.bf16.msra.mxu0 %v1265
  %1671 = vmatprep.subr.bf16.mxu0 %v1268
  %1672 = vmatpush1.bf16.msra.mxu0 %v1267
  %1673 = vmatprep.subr.bf16.mxu0 %v1270
  %1674 = vmatpush1.bf16.msra.mxu0 %v1269
  %1675 = vmatprep.mubr.bf16.mxu0 %v609
  %1676 = vmatmul.mubr.bf16.gmra.mrb[0].mxu0 %v608
  %v1677 = vpop.f32.mrb[0].mxu0
  %v1678 = vadd.f32 %v1625, %v1677
  %v1679 = vpop.f32.mrb[0].mxu0
  %v1680 = vadd.f32 %v1627, %v1679
  %v1681 = vpop.f32.mrb[0].mxu0
  %v1682 = vadd.f32 %v1629, %v1681
  %v1683 = vpop.f32.mrb[0].mxu0
  %v1684 = vadd.f32 %v1631, %v1683
  %1685 = vmatprep.mubr.bf16.mxu0 %v619
  %1686 = vmatmul.mubr.bf16.gmra.mrb[0].mxu0 %v618
  %v1687 = vpop.f32.mrb[0].mxu0
  %v1688 = vadd.f32 %v1635, %v1687
  %v1689 = vpop.f32.mrb[0].mxu0
  %v1690 = vadd.f32 %v1637, %v1689
  %v1691 = vpop.f32.mrb[0].mxu0
  %v1692 = vadd.f32 %v1639, %v1691
  %v1693 = vpop.f32.mrb[0].mxu0
  %v1694 = vadd.f32 %v1641, %v1693
  %1695 = vdwg.mxu0
  %v1696 = vld [vmem:[%s3] sm:$0xff]
  %v1697 = vld [vmem:[%s3 + $0x8] sm:$0xff]
  %v1698 = vpack.c.bf16 %v1697, %v1696
  %v1699 = vpack.c.bf16 %v1682, %v1678
  %v1700 = vpack.c.bf16 %v1684, %v1680
  %v1701 = vpack.c.bf16 %v1692, %v1688
  %v1702 = vpack.c.bf16 %v1694, %v1690
  %vm1703 = vcmask 261120
  %v1705 = vsel %vm1703, %v1698, 0
  %1707 = vmatprep.subr.bf16.mxu0 %v1700
  %1708 = vmatpush1.bf16.msra.mxu0 %v1699
  %1709 = vmatprep.subr.bf16.mxu0 %v1702
  %1710 = vmatpush1.bf16.msra.mxu0 %v1701
  %1711 = vmatprep.subr.bf16.mxu0 0
  %1712 = vmatpush1.bf16.msra.mxu0 0
  %1713 = vmatprep.subr.bf16.mxu0 0
  %1714 = vmatpush1.bf16.msra.mxu0 0
  %1715 = vmatprep.subr.bf16.mxu0 0
  %1716 = vmatpush1.bf16.msra.mxu0 0
  %1717 = vmatprep.subr.bf16.mxu0 0
  %1718 = vmatpush1.bf16.msra.mxu0 0
  %1719 = vmatprep.subr.bf16.mxu0 0
  %1720 = vmatpush1.bf16.msra.mxu0 0
  %1721 = vmatprep.subr.bf16.mxu0 0
  %1722 = vmatpush1.bf16.msra.mxu0 0
  %1723 = vmatprep.subr.bf16.mxu0 0
  %1724 = vmatpush1.bf16.msra.mxu0 0
  %1725 = vmatprep.subr.bf16.mxu0 0
  %1726 = vmatpush1.bf16.msra.mxu0 0
  %1727 = vmatprep.subr.bf16.mxu0 0
  %1728 = vmatpush1.bf16.msra.mxu0 0
  %1729 = vmatprep.subr.bf16.mxu0 0
  %1730 = vmatpush1.bf16.msra.mxu0 0
  %1731 = vmatprep.subr.bf16.mxu0 0
  %1732 = vmatpush1.bf16.msra.mxu0 0
  %1733 = vmatprep.subr.bf16.mxu0 0
  %1734 = vmatpush1.bf16.msra.mxu0 0
  %1735 = vmatprep.subr.bf16.mxu0 0
  %1736 = vmatpush1.bf16.msra.mxu0 0
  %1737 = vmatprep.subr.bf16.mxu0 0
  %1738 = vmatpush1.bf16.msra.mxu0 0
  %1739 = vmatprep.mubr.bf16.mxu0 0
  %1740 = vmatmul.mubr.bf16.gmra.mrb[0].mxu0 %v1705
  %v1741 = vpop.f32.mrb[0].mxu0
  %v1742 = vadd.f32 0.0, %v1741
  %v1743 = vpop.f32.mrb[0].mxu0
  %v1744 = vadd.f32 0.0, %v1743
  %v1745 = vpop.f32.mrb[0].mxu0
  %v1746 = vadd.f32 0.0, %v1745
  %v1747 = vpop.f32.mrb[0].mxu0
  %v1748 = vadd.f32 0.0, %v1747
  %1749 = vdwg.mxu0
  %s1750 = scalar_lea.vmem %s3, 16
  %v1751 = vld [vmem:[%s1750] sm:$0xff]
  %v1752 = vld [vmem:[%s1750 + $0x8] sm:$0xff]
  %v1753 = vpack.c.bf16 %v1752, %v1751
  %v1755 = vsel %vm1703, %v1753, 0
  %1757 = vmatprep.subr.bf16.mxu0 %v1700
  %1758 = vmatpush1.bf16.msra.mxu0 %v1699
  %1759 = vmatprep.subr.bf16.mxu0 %v1702
  %1760 = vmatpush1.bf16.msra.mxu0 %v1701
  %1761 = vmatprep.subr.bf16.mxu0 0
  %1762 = vmatpush1.bf16.msra.mxu0 0
  %1763 = vmatprep.subr.bf16.mxu0 0
  %1764 = vmatpush1.bf16.msra.mxu0 0
  %1765 = vmatprep.subr.bf16.mxu0 0
  %1766 = vmatpush1.bf16.msra.mxu0 0
  %1767 = vmatprep.subr.bf16.mxu0 0
  %1768 = vmatpush1.bf16.msra.mxu0 0
  %1769 = vmatprep.subr.bf16.mxu0 0
  %1770 = vmatpush1.bf16.msra.mxu0 0
  %1771 = vmatprep.subr.bf16.mxu0 0
  %1772 = vmatpush1.bf16.msra.mxu0 0
  %1773 = vmatprep.subr.bf16.mxu0 0
  %1774 = vmatpush1.bf16.msra.mxu0 0
  %1775 = vmatprep.subr.bf16.mxu0 0
  %1776 = vmatpush1.bf16.msra.mxu0 0
  %1777 = vmatprep.subr.bf16.mxu0 0
  %1778 = vmatpush1.bf16.msra.mxu0 0
  %1779 = vmatprep.subr.bf16.mxu0 0
  %1780 = vmatpush1.bf16.msra.mxu0 0
  %1781 = vmatprep.subr.bf16.mxu0 0
  %1782 = vmatpush1.bf16.msra.mxu0 0
  %1783 = vmatprep.subr.bf16.mxu0 0
  %1784 = vmatpush1.bf16.msra.mxu0 0
  %1785 = vmatprep.subr.bf16.mxu0 0
  %1786 = vmatpush1.bf16.msra.mxu0 0
  %1787 = vmatprep.subr.bf16.mxu0 0
  %1788 = vmatpush1.bf16.msra.mxu0 0
  %1789 = vmatprep.mubr.bf16.mxu0 0
  %1790 = vmatmul.mubr.bf16.gmra.mrb[0].mxu0 %v1755
  %v1791 = vpop.f32.mrb[0].mxu0
  %v1792 = vadd.f32 0.0, %v1791
  %v1793 = vpop.f32.mrb[0].mxu0
  %v1794 = vadd.f32 0.0, %v1793
  %v1795 = vpop.f32.mrb[0].mxu0
  %v1796 = vadd.f32 0.0, %v1795
  %v1797 = vpop.f32.mrb[0].mxu0
  %v1798 = vadd.f32 0.0, %v1797
  %1799 = vdwg.mxu0
  %v1800 = vmax.f32 %v1742, %v1792
  %v1801 = vmax.f32 %v1744, %v1794
  %v1802 = vmax.f32 %v1746, %v1796
  %v1803 = vmax.f32 %v1748, %v1798
  %v1804 = vld [vmem:[%s6] sm:$0xf]
  %v1805 = vld [vmem:[%s6 + $0x4] sm:$0xf]
  %v1806 = vld [vmem:[%s6 + $0x8] sm:$0xf]
  %v1807 = vld [vmem:[%s6 + $0xc] sm:$0xf]
  %v1808 = vld [vmem:[%s6 + $0x10] sm:$0xf]
  %v1809 = vld [vmem:[%s6 + $0x14] sm:$0xf]
  %v1810 = vld [vmem:[%s6 + $0x18] sm:$0xf]
  %v1811 = vld [vmem:[%s6 + $0x1c] sm:$0xf]
  %v1812 = vld [vmem:[%s6 + $0x20] sm:$0xf]
  %v1813 = vld [vmem:[%s6 + $0x24] sm:$0xf]
  %v1814 = vld [vmem:[%s6 + $0x28] sm:$0xf]
  %v1815 = vld [vmem:[%s6 + $0x2c] sm:$0xf]
  %v1816 = vld [vmem:[%s6 + $0x30] sm:$0xf]
  %v1817 = vld [vmem:[%s6 + $0x34] sm:$0xf]
  %v1818 = vld [vmem:[%s6 + $0x38] sm:$0xf]
  %v1819 = vld [vmem:[%s6 + $0x3c] sm:$0xf]
  %v1820 = vld [vmem:[%s6 + $0x40] sm:$0xf]
  %v1821 = vld [vmem:[%s6 + $0x44] sm:$0xf]
  %v1822 = vld [vmem:[%s6 + $0x48] sm:$0xf]
  %v1823 = vld [vmem:[%s6 + $0x4c] sm:$0xf]
  %v1824 = vld [vmem:[%s6 + $0x50] sm:$0xf]
  %v1825 = vld [vmem:[%s6 + $0x54] sm:$0xf]
  %v1826 = vld [vmem:[%s6 + $0x58] sm:$0xf]
  %v1827 = vld [vmem:[%s6 + $0x5c] sm:$0xf]
  %v1828 = vld [vmem:[%s6 + $0x60] sm:$0xf]
  %v1829 = vld [vmem:[%s6 + $0x64] sm:$0xf]
  %v1830 = vld [vmem:[%s6 + $0x68] sm:$0xf]
  %v1831 = vld [vmem:[%s6 + $0x6c] sm:$0xf]
  %v1832 = vld [vmem:[%s6 + $0x70] sm:$0xf]
  %v1833 = vld [vmem:[%s6 + $0x74] sm:$0xf]
  %v1834 = vld [vmem:[%s6 + $0x78] sm:$0xf]
  %v1835 = vld [vmem:[%s6 + $0x7c] sm:$0xf]
  %v1836 = vpack.c.bf16 %v1802, %v1800
  %v1837 = vpack.c.bf16 %v1803, %v1801
  %v1870 = vunpack.c.l.b16 %v1804
  %v1871 = vunpack.c.l.b16 %v1805
  %v1872 = vunpack.c.l.b16 %v1806
  %v1873 = vunpack.c.l.b16 %v1807
  %v1874 = vunpack.c.l.b16 %v1808
  %v1875 = vunpack.c.l.b16 %v1809
  %v1876 = vunpack.c.l.b16 %v1810
  %v1877 = vunpack.c.l.b16 %v1811
  %v1878 = vunpack.c.l.b16 %v1812
  %v1879 = vunpack.c.l.b16 %v1813
  %v1880 = vunpack.c.l.b16 %v1814
  %v1881 = vunpack.c.l.b16 %v1815
  %v1882 = vunpack.c.l.b16 %v1816
  %v1883 = vunpack.c.l.b16 %v1817
  %v1884 = vunpack.c.l.b16 %v1818
  %v1885 = vunpack.c.l.b16 %v1819
  %v1886 = vunpack.c.l.b16 %v1820
  %v1887 = vunpack.c.l.b16 %v1821
  %v1888 = vunpack.c.l.b16 %v1822
  %v1889 = vunpack.c.l.b16 %v1823
  %v1890 = vunpack.c.l.b16 %v1824
  %v1891 = vunpack.c.l.b16 %v1825
  %v1892 = vunpack.c.l.b16 %v1826
  %v1893 = vunpack.c.l.b16 %v1827
  %v1894 = vunpack.c.l.b16 %v1828
  %v1895 = vunpack.c.l.b16 %v1829
  %v1896 = vunpack.c.l.b16 %v1830
  %v1897 = vunpack.c.l.b16 %v1831
  %v1898 = vunpack.c.l.b16 %v1832
  %v1899 = vunpack.c.l.b16 %v1833
  %v1900 = vunpack.c.l.b16 %v1834
  %v1901 = vunpack.c.l.b16 %v1835
  %v1902 = vpack.c.b16 %v1871, %v1870
  %v1903 = vpack.c.b16 %v1873, %v1872
  %v1904 = vpack.c.b16 %v1875, %v1874
  %v1905 = vpack.c.b16 %v1877, %v1876
  %v1906 = vpack.c.b16 %v1879, %v1878
  %v1907 = vpack.c.b16 %v1881, %v1880
  %v1908 = vpack.c.b16 %v1883, %v1882
  %v1909 = vpack.c.b16 %v1885, %v1884
  %v1910 = vpack.c.b16 %v1887, %v1886
  %v1911 = vpack.c.b16 %v1889, %v1888
  %v1912 = vpack.c.b16 %v1891, %v1890
  %v1913 = vpack.c.b16 %v1893, %v1892
  %v1914 = vpack.c.b16 %v1895, %v1894
  %v1915 = vpack.c.b16 %v1897, %v1896
  %v1916 = vpack.c.b16 %v1899, %v1898
  %v1917 = vpack.c.b16 %v1901, %v1900
  %1934 = vmatprep.subr.bf16.mxu0 0
  %1935 = vmatpush1.bf16.msra.mxu0 %v1902
  %1936 = vmatprep.subr.bf16.mxu0 0
  %1937 = vmatpush1.bf16.msra.mxu0 %v1903
  %1938 = vmatprep.subr.bf16.mxu0 0
  %1939 = vmatpush1.bf16.msra.mxu0 %v1904
  %1940 = vmatprep.subr.bf16.mxu0 0
  %1941 = vmatpush1.bf16.msra.mxu0 %v1905
  %1942 = vmatprep.subr.bf16.mxu0 0
  %1943 = vmatpush1.bf16.msra.mxu0 %v1906
  %1944 = vmatprep.subr.bf16.mxu0 0
  %1945 = vmatpush1.bf16.msra.mxu0 %v1907
  %1946 = vmatprep.subr.bf16.mxu0 0
  %1947 = vmatpush1.bf16.msra.mxu0 %v1908
  %1948 = vmatprep.subr.bf16.mxu0 0
  %1949 = vmatpush1.bf16.msra.mxu0 %v1909
  %1950 = vmatprep.subr.bf16.mxu0 0
  %1951 = vmatpush1.bf16.msra.mxu0 %v1910
  %1952 = vmatprep.subr.bf16.mxu0 0
  %1953 = vmatpush1.bf16.msra.mxu0 %v1911
  %1954 = vmatprep.subr.bf16.mxu0 0
  %1955 = vmatpush1.bf16.msra.mxu0 %v1912
  %1956 = vmatprep.subr.bf16.mxu0 0
  %1957 = vmatpush1.bf16.msra.mxu0 %v1913
  %1958 = vmatprep.subr.bf16.mxu0 0
  %1959 = vmatpush1.bf16.msra.mxu0 %v1914
  %1960 = vmatprep.subr.bf16.mxu0 0
  %1961 = vmatpush1.bf16.msra.mxu0 %v1915
  %1962 = vmatprep.subr.bf16.mxu0 0
  %1963 = vmatpush1.bf16.msra.mxu0 %v1916
  %1964 = vmatprep.subr.bf16.mxu0 0
  %1965 = vmatpush1.bf16.msra.mxu0 %v1917
  %1966 = vmatprep.mubr.bf16.mxu0 %v1837
  %1967 = vmatmul.mubr.bf16.gmra.mrb[0].mxu0 %v1836
  %v1968 = vpop.f32.mrb[0].mxu0
  %v1969 = vadd.f32 0.0, %v1968
  %v1970 = vpop.f32.mrb[0].mxu0
  %v1971 = vpop.f32.mrb[0].mxu0
  %v1972 = vadd.f32 0.0, %v1971
  %v1973 = vpop.f32.mrb[0].mxu0
  %1974 = vdwg.mxu0
  %v1975 = vld [vmem:[%s6 + $0x80] sm:$0xf]
  %v1976 = vld [vmem:[%s6 + $0x84] sm:$0xf]
  %v1977 = vld [vmem:[%s6 + $0x88] sm:$0xf]
  %v1978 = vld [vmem:[%s6 + $0x8c] sm:$0xf]
  %v1979 = vld [vmem:[%s6 + $0x90] sm:$0xf]
  %v1980 = vld [vmem:[%s6 + $0x94] sm:$0xf]
  %v1981 = vld [vmem:[%s6 + $0x98] sm:$0xf]
  %v1982 = vld [vmem:[%s6 + $0x9c] sm:$0xf]
  %v1983 = vld [vmem:[%s6 + $0xa0] sm:$0xf]
  %v1984 = vld [vmem:[%s6 + $0xa4] sm:$0xf]
  %v1985 = vld [vmem:[%s6 + $0xa8] sm:$0xf]
  %v1986 = vld [vmem:[%s6 + $0xac] sm:$0xf]
  %v1987 = vld [vmem:[%s6 + $0xb0] sm:$0xf]
  %v1988 = vld [vmem:[%s6 + $0xb4] sm:$0xf]
  %v1989 = vld [vmem:[%s6 + $0xb8] sm:$0xf]
  %v1990 = vld [vmem:[%s6 + $0xbc] sm:$0xf]
  %v1991 = vld [vmem:[%s6 + $0xc0] sm:$0xf]
  %v1992 = vld [vmem:[%s6 + $0xc4] sm:$0xf]
  %v1993 = vld [vmem:[%s6 + $0xc8] sm:$0xf]
  %v1994 = vld [vmem:[%s6 + $0xcc] sm:$0xf]
  %v1995 = vld [vmem:[%s6 + $0xd0] sm:$0xf]
  %v1996 = vld [vmem:[%s6 + $0xd4] sm:$0xf]
  %v1997 = vld [vmem:[%s6 + $0xd8] sm:$0xf]
  %v1998 = vld [vmem:[%s6 + $0xdc] sm:$0xf]
  %v1999 = vld [vmem:[%s6 + $0xe0] sm:$0xf]
  %v2000 = vld [vmem:[%s6 + $0xe4] sm:$0xf]
  %v2001 = vld [vmem:[%s6 + $0xe8] sm:$0xf]
  %v2002 = vld [vmem:[%s6 + $0xec] sm:$0xf]
  %v2003 = vld [vmem:[%s6 + $0xf0] sm:$0xf]
  %v2004 = vld [vmem:[%s6 + $0xf4] sm:$0xf]
  %v2005 = vld [vmem:[%s6 + $0xf8] sm:$0xf]
  %v2006 = vld [vmem:[%s6 + $0xfc] sm:$0xf]
  %v2039 = vunpack.c.l.b16 %v1975
  %v2040 = vunpack.c.l.b16 %v1976
  %v2041 = vunpack.c.l.b16 %v1977
  %v2042 = vunpack.c.l.b16 %v1978
  %v2043 = vunpack.c.l.b16 %v1979
  %v2044 = vunpack.c.l.b16 %v1980
  %v2045 = vunpack.c.l.b16 %v1981
  %v2046 = vunpack.c.l.b16 %v1982
  %v2047 = vunpack.c.l.b16 %v1983
  %v2048 = vunpack.c.l.b16 %v1984
  %v2049 = vunpack.c.l.b16 %v1985
  %v2050 = vunpack.c.l.b16 %v1986
  %v2051 = vunpack.c.l.b16 %v1987
  %v2052 = vunpack.c.l.b16 %v1988
  %v2053 = vunpack.c.l.b16 %v1989
  %v2054 = vunpack.c.l.b16 %v1990
  %v2055 = vunpack.c.l.b16 %v1991
  %v2056 = vunpack.c.l.b16 %v1992
  %v2057 = vunpack.c.l.b16 %v1993
  %v2058 = vunpack.c.l.b16 %v1994
  %v2059 = vunpack.c.l.b16 %v1995
  %v2060 = vunpack.c.l.b16 %v1996
  %v2061 = vunpack.c.l.b16 %v1997
  %v2062 = vunpack.c.l.b16 %v1998
  %v2063 = vunpack.c.l.b16 %v1999
  %v2064 = vunpack.c.l.b16 %v2000
  %v2065 = vunpack.c.l.b16 %v2001
  %v2066 = vunpack.c.l.b16 %v2002
  %v2067 = vunpack.c.l.b16 %v2003
  %v2068 = vunpack.c.l.b16 %v2004
  %v2069 = vunpack.c.l.b16 %v2005
  %v2070 = vunpack.c.l.b16 %v2006
  %v2071 = vpack.c.b16 %v2040, %v2039
  %v2072 = vpack.c.b16 %v2042, %v2041
  %v2073 = vpack.c.b16 %v2044, %v2043
  %v2074 = vpack.c.b16 %v2046, %v2045
  %v2075 = vpack.c.b16 %v2048, %v2047
  %v2076 = vpack.c.b16 %v2050, %v2049
  %v2077 = vpack.c.b16 %v2052, %v2051
  %v2078 = vpack.c.b16 %v2054, %v2053
  %v2079 = vpack.c.b16 %v2056, %v2055
  %v2080 = vpack.c.b16 %v2058, %v2057
  %v2081 = vpack.c.b16 %v2060, %v2059
  %v2082 = vpack.c.b16 %v2062, %v2061
  %v2083 = vpack.c.b16 %v2064, %v2063
  %v2084 = vpack.c.b16 %v2066, %v2065
  %v2085 = vpack.c.b16 %v2068, %v2067
  %v2086 = vpack.c.b16 %v2070, %v2069
  %2103 = vmatprep.subr.bf16.mxu0 0
  %2104 = vmatpush1.bf16.msra.mxu0 %v2071
  %2105 = vmatprep.subr.bf16.mxu0 0
  %2106 = vmatpush1.bf16.msra.mxu0 %v2072
  %2107 = vmatprep.subr.bf16.mxu0 0
  %2108 = vmatpush1.bf16.msra.mxu0 %v2073
  %2109 = vmatprep.subr.bf16.mxu0 0
  %2110 = vmatpush1.bf16.msra.mxu0 %v2074
  %2111 = vmatprep.subr.bf16.mxu0 0
  %2112 = vmatpush1.bf16.msra.mxu0 %v2075
  %2113 = vmatprep.subr.bf16.mxu0 0
  %2114 = vmatpush1.bf16.msra.mxu0 %v2076
  %2115 = vmatprep.subr.bf16.mxu0 0
  %2116 = vmatpush1.bf16.msra.mxu0 %v2077
  %2117 = vmatprep.subr.bf16.mxu0 0
  %2118 = vmatpush1.bf16.msra.mxu0 %v2078
  %2119 = vmatprep.subr.bf16.mxu0 0
  %2120 = vmatpush1.bf16.msra.mxu0 %v2079
  %2121 = vmatprep.subr.bf16.mxu0 0
  %2122 = vmatpush1.bf16.msra.mxu0 %v2080
  %2123 = vmatprep.subr.bf16.mxu0 0
  %2124 = vmatpush1.bf16.msra.mxu0 %v2081
  %2125 = vmatprep.subr.bf16.mxu0 0
  %2126 = vmatpush1.bf16.msra.mxu0 %v2082
  %2127 = vmatprep.subr.bf16.mxu0 0
  %2128 = vmatpush1.bf16.msra.mxu0 %v2083
  %2129 = vmatprep.subr.bf16.mxu0 0
  %2130 = vmatpush1.bf16.msra.mxu0 %v2084
  %2131 = vmatprep.subr.bf16.mxu0 0
  %2132 = vmatpush1.bf16.msra.mxu0 %v2085
  %2133 = vmatprep.subr.bf16.mxu0 0
  %2134 = vmatpush1.bf16.msra.mxu0 %v2086
  %2135 = vmatprep.mubr.bf16.mxu0 %v1837
  %2136 = vmatmul.mubr.bf16.gmra.mrb[0].mxu0 %v1836
  %v2137 = vpop.f32.mrb[0].mxu0
  %v2138 = vadd.f32 0.0, %v2137
  %v2139 = vpop.f32.mrb[0].mxu0
  %v2140 = vpop.f32.mrb[0].mxu0
  %v2141 = vadd.f32 0.0, %v2140
  %v2142 = vpop.f32.mrb[0].mxu0
  %2143 = vdwg.mxu0
  %v2144 = vmax.f32 %v1969, %v2138
  %v2145 = vmax.f32 %v1972, %v2141
  %v2146 = vld [vmem:[%s6 + $0x100] sm:$0xf]
  %v2147 = vld [vmem:[%s6 + $0x104] sm:$0xf]
  %v2148 = vld [vmem:[%s6 + $0x108] sm:$0xf]
  %v2149 = vld [vmem:[%s6 + $0x10c] sm:$0xf]
  %v2150 = vld [vmem:[%s6 + $0x110] sm:$0xf]
  %v2151 = vld [vmem:[%s6 + $0x114] sm:$0xf]
  %v2152 = vld [vmem:[%s6 + $0x118] sm:$0xf]
  %v2153 = vld [vmem:[%s6 + $0x11c] sm:$0xf]
  %v2154 = vld [vmem:[%s6 + $0x120] sm:$0xf]
  %v2155 = vld [vmem:[%s6 + $0x124] sm:$0xf]
  %v2156 = vld [vmem:[%s6 + $0x128] sm:$0xf]
  %v2157 = vld [vmem:[%s6 + $0x12c] sm:$0xf]
  %v2158 = vld [vmem:[%s6 + $0x130] sm:$0xf]
  %v2159 = vld [vmem:[%s6 + $0x134] sm:$0xf]
  %v2160 = vld [vmem:[%s6 + $0x138] sm:$0xf]
  %v2161 = vld [vmem:[%s6 + $0x13c] sm:$0xf]
  %v2162 = vld [vmem:[%s6 + $0x140] sm:$0xf]
  %v2163 = vld [vmem:[%s6 + $0x144] sm:$0xf]
  %v2164 = vld [vmem:[%s6 + $0x148] sm:$0xf]
  %v2165 = vld [vmem:[%s6 + $0x14c] sm:$0xf]
  %v2166 = vld [vmem:[%s6 + $0x150] sm:$0xf]
  %v2167 = vld [vmem:[%s6 + $0x154] sm:$0xf]
  %v2168 = vld [vmem:[%s6 + $0x158] sm:$0xf]
  %v2169 = vld [vmem:[%s6 + $0x15c] sm:$0xf]
  %v2170 = vld [vmem:[%s6 + $0x160] sm:$0xf]
  %v2171 = vld [vmem:[%s6 + $0x164] sm:$0xf]
  %v2172 = vld [vmem:[%s6 + $0x168] sm:$0xf]
  %v2173 = vld [vmem:[%s6 + $0x16c] sm:$0xf]
  %v2174 = vld [vmem:[%s6 + $0x170] sm:$0xf]
  %v2175 = vld [vmem:[%s6 + $0x174] sm:$0xf]
  %v2176 = vld [vmem:[%s6 + $0x178] sm:$0xf]
  %v2177 = vld [vmem:[%s6 + $0x17c] sm:$0xf]
  %v2178 = vpack.c.bf16 %v2145, %v2144
  %v2179 = vld [vmem:[%s6 + $0x180] sm:$0x1]
  %v2180 = vunpack.c.l.bf16 %v2179
  %v2181 = vlaneseq
  %v2182 = vshrl.u32 %v2181, 7
  %v2183 = vsub.s32 0, %v2182
  %v2184 = vrot.slane %v2180, %v2183
  %v2217 = vunpack.c.l.b16 %v2146
  %v2218 = vunpack.c.l.b16 %v2147
  %v2219 = vunpack.c.l.b16 %v2148
  %v2220 = vunpack.c.l.b16 %v2149
  %v2221 = vunpack.c.l.b16 %v2150
  %v2222 = vunpack.c.l.b16 %v2151
  %v2223 = vunpack.c.l.b16 %v2152
  %v2224 = vunpack.c.l.b16 %v2153
  %v2225 = vunpack.c.l.b16 %v2154
  %v2226 = vunpack.c.l.b16 %v2155
  %v2227 = vunpack.c.l.b16 %v2156
  %v2228 = vunpack.c.l.b16 %v2157
  %v2229 = vunpack.c.l.b16 %v2158
  %v2230 = vunpack.c.l.b16 %v2159
  %v2231 = vunpack.c.l.b16 %v2160
  %v2232 = vunpack.c.l.b16 %v2161
  %v2233 = vunpack.c.l.b16 %v2162
  %v2234 = vunpack.c.l.b16 %v2163
  %v2235 = vunpack.c.l.b16 %v2164
  %v2236 = vunpack.c.l.b16 %v2165
  %v2237 = vunpack.c.l.b16 %v2166
  %v2238 = vunpack.c.l.b16 %v2167
  %v2239 = vunpack.c.l.b16 %v2168
  %v2240 = vunpack.c.l.b16 %v2169
  %v2241 = vunpack.c.l.b16 %v2170
  %v2242 = vunpack.c.l.b16 %v2171
  %v2243 = vunpack.c.l.b16 %v2172
  %v2244 = vunpack.c.l.b16 %v2173
  %v2245 = vunpack.c.l.b16 %v2174
  %v2246 = vunpack.c.l.b16 %v2175
  %v2247 = vunpack.c.l.b16 %v2176
  %v2248 = vunpack.c.l.b16 %v2177
  %v2249 = vpack.c.b16 %v2218, %v2217
  %v2250 = vpack.c.b16 %v2220, %v2219
  %v2251 = vpack.c.b16 %v2222, %v2221
  %v2252 = vpack.c.b16 %v2224, %v2223
  %v2253 = vpack.c.b16 %v2226, %v2225
  %v2254 = vpack.c.b16 %v2228, %v2227
  %v2255 = vpack.c.b16 %v2230, %v2229
  %v2256 = vpack.c.b16 %v2232, %v2231
  %v2257 = vpack.c.b16 %v2234, %v2233
  %v2258 = vpack.c.b16 %v2236, %v2235
  %v2259 = vpack.c.b16 %v2238, %v2237
  %v2260 = vpack.c.b16 %v2240, %v2239
  %v2261 = vpack.c.b16 %v2242, %v2241
  %v2262 = vpack.c.b16 %v2244, %v2243
  %v2263 = vpack.c.b16 %v2246, %v2245
  %v2264 = vpack.c.b16 %v2248, %v2247
  %2281 = vmatprep.subr.bf16.mxu0 0
  %2282 = vmatpush1.bf16.msra.mxu0 %v2249
  %2283 = vmatprep.subr.bf16.mxu0 0
  %2284 = vmatpush1.bf16.msra.mxu0 %v2250
  %2285 = vmatprep.subr.bf16.mxu0 0
  %2286 = vmatpush1.bf16.msra.mxu0 %v2251
  %2287 = vmatprep.subr.bf16.mxu0 0
  %2288 = vmatpush1.bf16.msra.mxu0 %v2252
  %2289 = vmatprep.subr.bf16.mxu0 0
  %2290 = vmatpush1.bf16.msra.mxu0 %v2253
  %2291 = vmatprep.subr.bf16.mxu0 0
  %2292 = vmatpush1.bf16.msra.mxu0 %v2254
  %2293 = vmatprep.subr.bf16.mxu0 0
  %2294 = vmatpush1.bf16.msra.mxu0 %v2255
  %2295 = vmatprep.subr.bf16.mxu0 0
  %2296 = vmatpush1.bf16.msra.mxu0 %v2256
  %2297 = vmatprep.subr.bf16.mxu0 0
  %2298 = vmatpush1.bf16.msra.mxu0 %v2257
  %2299 = vmatprep.subr.bf16.mxu0 0
  %2300 = vmatpush1.bf16.msra.mxu0 %v2258
  %2301 = vmatprep.subr.bf16.mxu0 0
  %2302 = vmatpush1.bf16.msra.mxu0 %v2259
  %2303 = vmatprep.subr.bf16.mxu0 0
  %2304 = vmatpush1.bf16.msra.mxu0 %v2260
  %2305 = vmatprep.subr.bf16.mxu0 0
  %2306 = vmatpush1.bf16.msra.mxu0 %v2261
  %2307 = vmatprep.subr.bf16.mxu0 0
  %2308 = vmatpush1.bf16.msra.mxu0 %v2262
  %2309 = vmatprep.subr.bf16.mxu0 0
  %2310 = vmatpush1.bf16.msra.mxu0 %v2263
  %2311 = vmatprep.subr.bf16.mxu0 0
  %2312 = vmatpush1.bf16.msra.mxu0 %v2264
  %2313 = vmatprep.mubr.bf16.mxu0 %v2178
  %2314 = vmatmul.mubr.bf16.gmra.mrb[0].mxu0 %v38
  %v2315 = vpop.f32.mrb[0].mxu0
  %v2316 = vadd.f32 %v2184, %v2315
  %v2317 = vpop.f32.mrb[0].mxu0
  %v2318 = vpop.f32.mrb[0].mxu0
  %v2319 = vadd.f32 %v2184, %v2318
  %v2320 = vpop.f32.mrb[0].mxu0
  %2321 = vdwg.mxu0
  %v2322 = vld [vmem:[%s4] sm:$0xff]
  %v2323 = vpack.c.bf16 %v2322, %v2322
  %v2324 = vpack.c.bf16 %v2319, %v2316
  %v2326 = vsel %vm39, %v2323, 0
  %2328 = vmatprep.subr.bf16.mxu0 0
  %2329 = vmatpush1.bf16.msra.mxu0 %v2324
  %2330 = vmatprep.subr.bf16.mxu0 0
  %2331 = vmatpush1.bf16.msra.mxu0 0
  %2332 = vmatprep.subr.bf16.mxu0 0
  %2333 = vmatpush1.bf16.msra.mxu0 0
  %2334 = vmatprep.subr.bf16.mxu0 0
  %2335 = vmatpush1.bf16.msra.mxu0 0
  %2336 = vmatprep.subr.bf16.mxu0 0
  %2337 = vmatpush1.bf16.msra.mxu0 0
  %2338 = vmatprep.subr.bf16.mxu0 0
  %2339 = vmatpush1.bf16.msra.mxu0 0
  %2340 = vmatprep.subr.bf16.mxu0 0
  %2341 = vmatpush1.bf16.msra.mxu0 0
  %2342 = vmatprep.subr.bf16.mxu0 0
  %2343 = vmatpush1.bf16.msra.mxu0 0
  %2344 = vmatprep.subr.bf16.mxu0 0
  %2345 = vmatpush1.bf16.msra.mxu0 0
  %2346 = vmatprep.subr.bf16.mxu0 0
  %2347 = vmatpush1.bf16.msra.mxu0 0
  %2348 = vmatprep.subr.bf16.mxu0 0
  %2349 = vmatpush1.bf16.msra.mxu0 0
  %2350 = vmatprep.subr.bf16.mxu0 0
  %2351 = vmatpush1.bf16.msra.mxu0 0
  %2352 = vmatprep.subr.bf16.mxu0 0
  %2353 = vmatpush1.bf16.msra.mxu0 0
  %2354 = vmatprep.subr.bf16.mxu0 0
  %2355 = vmatpush1.bf16.msra.mxu0 0
  %2356 = vmatprep.subr.bf16.mxu0 0
  %2357 = vmatpush1.bf16.msra.mxu0 0
  %2358 = vmatprep.subr.bf16.mxu0 0
  %2359 = vmatpush1.bf16.msra.mxu0 0
  %2360 = vmatprep.mubr.bf16.mxu0 0
  %2361 = vmatmul.mubr.bf16.gmra.mrb[0].mxu0 %v2326
  %v2362 = vpop.f32.mrb[0].mxu0
  %v2363 = vadd.f32 0.0, %v2362
  %v2364 = vpop.f32.mrb[0].mxu0
  %v2365 = vpop.f32.mrb[0].mxu0
  %v2366 = vpop.f32.mrb[0].mxu0
  %2367 = vdwg.mxu0
  %s2368 = scalar_lea.vmem %s4, 8
  %v2369 = vld [vmem:[%s2368] sm:$0xff]
  %v2370 = vpack.c.bf16 %v2369, %v2369
  %v2372 = vsel %vm39, %v2370, 0
  %2374 = vmatprep.subr.bf16.mxu0 0
  %2375 = vmatpush1.bf16.msra.mxu0 %v2324
  %2376 = vmatprep.subr.bf16.mxu0 0
  %2377 = vmatpush1.bf16.msra.mxu0 0
  %2378 = vmatprep.subr.bf16.mxu0 0
  %2379 = vmatpush1.bf16.msra.mxu0 0
  %2380 = vmatprep.subr.bf16.mxu0 0
  %2381 = vmatpush1.bf16.msra.mxu0 0
  %2382 = vmatprep.subr.bf16.mxu0 0
  %2383 = vmatpush1.bf16.msra.mxu0 0
  %2384 = vmatprep.subr.bf16.mxu0 0
  %2385 = vmatpush1.bf16.msra.mxu0 0
  %2386 = vmatprep.subr.bf16.mxu0 0
  %2387 = vmatpush1.bf16.msra.mxu0 0
  %2388 = vmatprep.subr.bf16.mxu0 0
  %2389 = vmatpush1.bf16.msra.mxu0 0
  %2390 = vmatprep.subr.bf16.mxu0 0
  %2391 = vmatpush1.bf16.msra.mxu0 0
  %2392 = vmatprep.subr.bf16.mxu0 0
  %2393 = vmatpush1.bf16.msra.mxu0 0
  %2394 = vmatprep.subr.bf16.mxu0 0
  %2395 = vmatpush1.bf16.msra.mxu0 0
  %2396 = vmatprep.subr.bf16.mxu0 0
  %2397 = vmatpush1.bf16.msra.mxu0 0
  %2398 = vmatprep.subr.bf16.mxu0 0
  %2399 = vmatpush1.bf16.msra.mxu0 0
  %2400 = vmatprep.subr.bf16.mxu0 0
  %2401 = vmatpush1.bf16.msra.mxu0 0
  %2402 = vmatprep.subr.bf16.mxu0 0
  %2403 = vmatpush1.bf16.msra.mxu0 0
  %2404 = vmatprep.subr.bf16.mxu0 0
  %2405 = vmatpush1.bf16.msra.mxu0 0
  %2406 = vmatprep.mubr.bf16.mxu0 0
  %2407 = vmatmul.mubr.bf16.gmra.mrb[0].mxu0 %v2372
  %v2408 = vpop.f32.mrb[0].mxu0
  %v2409 = vadd.f32 0.0, %v2408
  %v2410 = vpop.f32.mrb[0].mxu0
  %v2411 = vpop.f32.mrb[0].mxu0
  %v2412 = vpop.f32.mrb[0].mxu0
  %2413 = vdwg.mxu0
  %v2414 = vmax.f32 %v2363, %v2409
  %v2415 = vld [vmem:[%s7] sm:$0xf]
  %v2416 = vld [vmem:[%s7 + $0x4] sm:$0xf]
  %v2417 = vld [vmem:[%s7 + $0x8] sm:$0xf]
  %v2418 = vld [vmem:[%s7 + $0xc] sm:$0xf]
  %v2419 = vld [vmem:[%s7 + $0x10] sm:$0xf]
  %v2420 = vld [vmem:[%s7 + $0x14] sm:$0xf]
  %v2421 = vld [vmem:[%s7 + $0x18] sm:$0xf]
  %v2422 = vld [vmem:[%s7 + $0x1c] sm:$0xf]
  %v2423 = vld [vmem:[%s7 + $0x20] sm:$0xf]
  %v2424 = vld [vmem:[%s7 + $0x24] sm:$0xf]
  %v2425 = vld [vmem:[%s7 + $0x28] sm:$0xf]
  %v2426 = vld [vmem:[%s7 + $0x2c] sm:$0xf]
  %v2427 = vld [vmem:[%s7 + $0x30] sm:$0xf]
  %v2428 = vld [vmem:[%s7 + $0x34] sm:$0xf]
  %v2429 = vld [vmem:[%s7 + $0x38] sm:$0xf]
  %v2430 = vld [vmem:[%s7 + $0x3c] sm:$0xf]
  %v2431 = vpack.c.bf16 %v2414, %v2414
  %v2448 = vunpack.c.l.b16 %v2415
  %v2449 = vunpack.c.l.b16 %v2416
  %v2450 = vunpack.c.l.b16 %v2417
  %v2451 = vunpack.c.l.b16 %v2418
  %v2452 = vunpack.c.l.b16 %v2419
  %v2453 = vunpack.c.l.b16 %v2420
  %v2454 = vunpack.c.l.b16 %v2421
  %v2455 = vunpack.c.l.b16 %v2422
  %v2456 = vunpack.c.l.b16 %v2423
  %v2457 = vunpack.c.l.b16 %v2424
  %v2458 = vunpack.c.l.b16 %v2425
  %v2459 = vunpack.c.l.b16 %v2426
  %v2460 = vunpack.c.l.b16 %v2427
  %v2461 = vunpack.c.l.b16 %v2428
  %v2462 = vunpack.c.l.b16 %v2429
  %v2463 = vunpack.c.l.b16 %v2430
  %v2464 = vpack.c.b16 %v2449, %v2448
  %v2465 = vpack.c.b16 %v2451, %v2450
  %v2466 = vpack.c.b16 %v2453, %v2452
  %v2467 = vpack.c.b16 %v2455, %v2454
  %v2468 = vpack.c.b16 %v2457, %v2456
  %v2469 = vpack.c.b16 %v2459, %v2458
  %v2470 = vpack.c.b16 %v2461, %v2460
  %v2471 = vpack.c.b16 %v2463, %v2462
  %2480 = vmatprep.subr.bf16.mxu0 0
  %2481 = vmatpush1.bf16.msra.mxu0 %v2464
  %2482 = vmatprep.subr.bf16.mxu0 0
  %2483 = vmatpush1.bf16.msra.mxu0 %v2465
  %2484 = vmatprep.subr.bf16.mxu0 0
  %2485 = vmatpush1.bf16.msra.mxu0 %v2466
  %2486 = vmatprep.subr.bf16.mxu0 0
  %2487 = vmatpush1.bf16.msra.mxu0 %v2467
  %2488 = vmatprep.subr.bf16.mxu0 0
  %2489 = vmatpush1.bf16.msra.mxu0 %v2468
  %2490 = vmatprep.subr.bf16.mxu0 0
  %2491 = vmatpush1.bf16.msra.mxu0 %v2469
  %2492 = vmatprep.subr.bf16.mxu0 0
  %2493 = vmatpush1.bf16.msra.mxu0 %v2470
  %2494 = vmatprep.subr.bf16.mxu0 0
  %2495 = vmatpush1.bf16.msra.mxu0 %v2471
  %2496 = vmatprep.subr.bf16.mxu0 0
  %2497 = vmatpush1.bf16.msra.mxu0 0
  %2498 = vmatprep.subr.bf16.mxu0 0
  %2499 = vmatpush1.bf16.msra.mxu0 0
  %2500 = vmatprep.subr.bf16.mxu0 0
  %2501 = vmatpush1.bf16.msra.mxu0 0
  %2502 = vmatprep.subr.bf16.mxu0 0
  %2503 = vmatpush1.bf16.msra.mxu0 0
  %2504 = vmatprep.subr.bf16.mxu0 0
  %2505 = vmatpush1.bf16.msra.mxu0 0
  %2506 = vmatprep.subr.bf16.mxu0 0
  %2507 = vmatpush1.bf16.msra.mxu0 0
  %2508 = vmatprep.subr.bf16.mxu0 0
  %2509 = vmatpush1.bf16.msra.mxu0 0
  %2510 = vmatprep.subr.bf16.mxu0 0
  %2511 = vmatpush1.bf16.msra.mxu0 0
  %2512 = vmatprep.mubr.bf16.mxu0 0
  %2513 = vmatmul.mubr.bf16.gmra.mrb[0].mxu0 %v2431
  %v2514 = vpop.f32.mrb[0].mxu0
  %v2515 = vadd.f32 0.0, %v2514
  %v2516 = vpop.f32.mrb[0].mxu0
  %v2517 = vpop.f32.mrb[0].mxu0
  %v2518 = vpop.f32.mrb[0].mxu0
  %2519 = vdwg.mxu0
  %v2520 = vld [vmem:[%s7 + $0x40] sm:$0xf]
  %v2521 = vld [vmem:[%s7 + $0x44] sm:$0xf]
  %v2522 = vld [vmem:[%s7 + $0x48] sm:$0xf]
  %v2523 = vld [vmem:[%s7 + $0x4c] sm:$0xf]
  %v2524 = vld [vmem:[%s7 + $0x50] sm:$0xf]
  %v2525 = vld [vmem:[%s7 + $0x54] sm:$0xf]
  %v2526 = vld [vmem:[%s7 + $0x58] sm:$0xf]
  %v2527 = vld [vmem:[%s7 + $0x5c] sm:$0xf]
  %v2528 = vld [vmem:[%s7 + $0x60] sm:$0xf]
  %v2529 = vld [vmem:[%s7 + $0x64] sm:$0xf]
  %v2530 = vld [vmem:[%s7 + $0x68] sm:$0xf]
  %v2531 = vld [vmem:[%s7 + $0x6c] sm:$0xf]
  %v2532 = vld [vmem:[%s7 + $0x70] sm:$0xf]
  %v2533 = vld [vmem:[%s7 + $0x74] sm:$0xf]
  %v2534 = vld [vmem:[%s7 + $0x78] sm:$0xf]
  %v2535 = vld [vmem:[%s7 + $0x7c] sm:$0xf]
  %v2552 = vunpack.c.l.b16 %v2520
  %v2553 = vunpack.c.l.b16 %v2521
  %v2554 = vunpack.c.l.b16 %v2522
  %v2555 = vunpack.c.l.b16 %v2523
  %v2556 = vunpack.c.l.b16 %v2524
  %v2557 = vunpack.c.l.b16 %v2525
  %v2558 = vunpack.c.l.b16 %v2526
  %v2559 = vunpack.c.l.b16 %v2527
  %v2560 = vunpack.c.l.b16 %v2528
  %v2561 = vunpack.c.l.b16 %v2529
  %v2562 = vunpack.c.l.b16 %v2530
  %v2563 = vunpack.c.l.b16 %v2531
  %v2564 = vunpack.c.l.b16 %v2532
  %v2565 = vunpack.c.l.b16 %v2533
  %v2566 = vunpack.c.l.b16 %v2534
  %v2567 = vunpack.c.l.b16 %v2535
  %v2568 = vpack.c.b16 %v2553, %v2552
  %v2569 = vpack.c.b16 %v2555, %v2554
  %v2570 = vpack.c.b16 %v2557, %v2556
  %v2571 = vpack.c.b16 %v2559, %v2558
  %v2572 = vpack.c.b16 %v2561, %v2560
  %v2573 = vpack.c.b16 %v2563, %v2562
  %v2574 = vpack.c.b16 %v2565, %v2564
  %v2575 = vpack.c.b16 %v2567, %v2566
  %2584 = vmatprep.subr.bf16.mxu0 0
  %2585 = vmatpush1.bf16.msra.mxu0 %v2568
  %2586 = vmatprep.subr.bf16.mxu0 0
  %2587 = vmatpush1.bf16.msra.mxu0 %v2569
  %2588 = vmatprep.subr.bf16.mxu0 0
  %2589 = vmatpush1.bf16.msra.mxu0 %v2570
  %2590 = vmatprep.subr.bf16.mxu0 0
  %2591 = vmatpush1.bf16.msra.mxu0 %v2571
  %2592 = vmatprep.subr.bf16.mxu0 0
  %2593 = vmatpush1.bf16.msra.mxu0 %v2572
  %2594 = vmatprep.subr.bf16.mxu0 0
  %2595 = vmatpush1.bf16.msra.mxu0 %v2573
  %2596 = vmatprep.subr.bf16.mxu0 0
  %2597 = vmatpush1.bf16.msra.mxu0 %v2574
  %2598 = vmatprep.subr.bf16.mxu0 0
  %2599 = vmatpush1.bf16.msra.mxu0 %v2575
  %2600 = vmatprep.subr.bf16.mxu0 0
  %2601 = vmatpush1.bf16.msra.mxu0 0
  %2602 = vmatprep.subr.bf16.mxu0 0
  %2603 = vmatpush1.bf16.msra.mxu0 0
  %2604 = vmatprep.subr.bf16.mxu0 0
  %2605 = vmatpush1.bf16.msra.mxu0 0
  %2606 = vmatprep.subr.bf16.mxu0 0
  %2607 = vmatpush1.bf16.msra.mxu0 0
  %2608 = vmatprep.subr.bf16.mxu0 0
  %2609 = vmatpush1.bf16.msra.mxu0 0
  %2610 = vmatprep.subr.bf16.mxu0 0
  %2611 = vmatpush1.bf16.msra.mxu0 0
  %2612 = vmatprep.subr.bf16.mxu0 0
  %2613 = vmatpush1.bf16.msra.mxu0 0
  %2614 = vmatprep.subr.bf16.mxu0 0
  %2615 = vmatpush1.bf16.msra.mxu0 0
  %2616 = vmatprep.mubr.bf16.mxu0 0
  %2617 = vmatmul.mubr.bf16.gmra.mrb[0].mxu0 %v2431
  %v2618 = vpop.f32.mrb[0].mxu0
  %v2619 = vadd.f32 0.0, %v2618
  %v2620 = vpop.f32.mrb[0].mxu0
  %v2621 = vpop.f32.mrb[0].mxu0
  %v2622 = vpop.f32.mrb[0].mxu0
  %2623 = vdwg.mxu0
  %v2624 = vmax.f32 %v2515, %v2619
  %vm2625 = vcmask 516096
  %2626 = vst.msk [vmem:[#allocation3] sm:$0x1] %vm2625, 0.0
  %v2628 = vrot.slane %v2624, 7
  %vm2630 = vcmask 523265
  %2631 = vst.msk [vmem:[#allocation3] sm:$0xfe] %vm2630, %v2628
  %2632 = vrot.lane.b32.xlu0 %v2624, 64
  %v2633 = vpop.permute.xlu0 %2632
  %vm2635 = vcmask 1048064
  %2636 = vst.msk [vmem:[#allocation3] sm:$0xff] %vm2635, %v2633
  %v2637 = vrot.slane %v2624, 1
  %vm2639 = vcmask 522240
  %2640 = vst.msk [vmem:[#allocation3 + $0x8] sm:$0x7f] %vm2639, %v2637
  %2641 = vst.msk [vmem:[#allocation3 + $0xf] sm:$0x1] %vm2625, 0.0
  %v2642 = vld [vmem:[#allocation3] sm:$0xff]
  %v2643 = vld [vmem:[#allocation3 + $0x8] sm:$0xff]
  %v2644 = vld [vmem:[%s7 + $0x80] sm:$0xf]
  %v2645 = vld [vmem:[%s7 + $0x84] sm:$0xf]
  %v2646 = vld [vmem:[%s7 + $0x88] sm:$0xf]
  %v2647 = vld [vmem:[%s7 + $0x8c] sm:$0xf]
  %v2648 = vld [vmem:[%s7 + $0x90] sm:$0xf]
  %v2649 = vld [vmem:[%s7 + $0x94] sm:$0xf]
  %v2650 = vld [vmem:[%s7 + $0x98] sm:$0xf]
  %v2651 = vld [vmem:[%s7 + $0x9c] sm:$0xf]
  %v2652 = vld [vmem:[%s7 + $0xa0] sm:$0xf]
  %v2653 = vld [vmem:[%s7 + $0xa4] sm:$0xf]
  %v2654 = vld [vmem:[%s7 + $0xa8] sm:$0xf]
  %v2655 = vld [vmem:[%s7 + $0xac] sm:$0xf]
  %v2656 = vld [vmem:[%s7 + $0xb0] sm:$0xf]
  %v2657 = vld [vmem:[%s7 + $0xb4] sm:$0xf]
  %v2658 = vld [vmem:[%s7 + $0xb8] sm:$0xf]
  %v2659 = vld [vmem:[%s7 + $0xbc] sm:$0xf]
  %v2660 = vld [vmem:[%s7 + $0xc0] sm:$0xf]
  %v2661 = vld [vmem:[%s7 + $0xc4] sm:$0xf]
  %v2662 = vld [vmem:[%s7 + $0xc8] sm:$0xf]
  %v2663 = vld [vmem:[%s7 + $0xcc] sm:$0xf]
  %v2664 = vld [vmem:[%s7 + $0xd0] sm:$0xf]
  %v2665 = vld [vmem:[%s7 + $0xd4] sm:$0xf]
  %v2666 = vld [vmem:[%s7 + $0xd8] sm:$0xf]
  %v2667 = vld [vmem:[%s7 + $0xdc] sm:$0xf]
  %v2668 = vpack.c.bf16 %v2642, %v2642
  %v2669 = vpack.c.bf16 %v2643, %v2643
  %v2670 = vld [vmem:[%s7 + $0xe0] sm:$0x1]
  %v2671 = vunpack.c.l.bf16 %v2670
  %v2672 = vlaneseq
  %v2673 = vshrl.u32 %v2672, 7
  %v2674 = vsub.s32 0, %v2673
  %v2675 = vrot.slane %v2671, %v2674
  %v2700 = vunpack.c.l.b16 %v2644
  %v2701 = vunpack.c.l.b16 %v2645
  %v2702 = vunpack.c.l.b16 %v2646
  %v2703 = vunpack.c.l.b16 %v2647
  %v2704 = vunpack.c.l.b16 %v2648
  %v2705 = vunpack.c.l.b16 %v2649
  %v2706 = vunpack.c.l.b16 %v2650
  %v2707 = vunpack.c.l.b16 %v2651
  %v2708 = vunpack.c.l.b16 %v2652
  %v2709 = vunpack.c.l.b16 %v2653
  %v2710 = vunpack.c.l.b16 %v2654
  %v2711 = vunpack.c.l.b16 %v2655
  %v2712 = vunpack.c.l.b16 %v2656
  %v2713 = vunpack.c.l.b16 %v2657
  %v2714 = vunpack.c.l.b16 %v2658
  %v2715 = vunpack.c.l.b16 %v2659
  %v2716 = vunpack.c.l.b16 %v2660
  %v2717 = vunpack.c.l.b16 %v2661
  %v2718 = vunpack.c.l.b16 %v2662
  %v2719 = vunpack.c.l.b16 %v2663
  %v2720 = vunpack.c.l.b16 %v2664
  %v2721 = vunpack.c.l.b16 %v2665
  %v2722 = vunpack.c.l.b16 %v2666
  %v2723 = vunpack.c.l.b16 %v2667
  %v2724 = vpack.c.b16 %v2701, %v2700
  %v2725 = vpack.c.b16 %v2703, %v2702
  %v2726 = vpack.c.b16 %v2705, %v2704
  %v2727 = vpack.c.b16 %v2707, %v2706
  %v2728 = vpack.c.b16 %v2709, %v2708
  %v2729 = vpack.c.b16 %v2711, %v2710
  %v2730 = vpack.c.b16 %v2713, %v2712
  %v2731 = vpack.c.b16 %v2715, %v2714
  %v2732 = vpack.c.b16 %v2717, %v2716
  %v2733 = vpack.c.b16 %v2719, %v2718
  %v2734 = vpack.c.b16 %v2721, %v2720
  %v2735 = vpack.c.b16 %v2723, %v2722
  %vm2748 = vcmask 523264
  %v2750 = vsel %vm2748, %v2669, 0
  %2752 = vmatprep.subr.bf16.mxu0 0
  %2753 = vmatpush1.bf16.msra.mxu0 %v2724
  %2754 = vmatprep.subr.bf16.mxu0 0
  %2755 = vmatpush1.bf16.msra.mxu0 %v2725
  %2756 = vmatprep.subr.bf16.mxu0 0
  %2757 = vmatpush1.bf16.msra.mxu0 %v2726
  %2758 = vmatprep.subr.bf16.mxu0 0
  %2759 = vmatpush1.bf16.msra.mxu0 %v2727
  %2760 = vmatprep.subr.bf16.mxu0 0
  %2761 = vmatpush1.bf16.msra.mxu0 %v2728
  %2762 = vmatprep.subr.bf16.mxu0 0
  %2763 = vmatpush1.bf16.msra.mxu0 %v2729
  %2764 = vmatprep.subr.bf16.mxu0 0
  %2765 = vmatpush1.bf16.msra.mxu0 %v2730
  %2766 = vmatprep.subr.bf16.mxu0 0
  %2767 = vmatpush1.bf16.msra.mxu0 %v2731
  %2768 = vmatprep.subr.bf16.mxu0 0
  %2769 = vmatpush1.bf16.msra.mxu0 %v2732
  %2770 = vmatprep.subr.bf16.mxu0 0
  %2771 = vmatpush1.bf16.msra.mxu0 %v2733
  %2772 = vmatprep.subr.bf16.mxu0 0
  %2773 = vmatpush1.bf16.msra.mxu0 %v2734
  %2774 = vmatprep.subr.bf16.mxu0 0
  %2775 = vmatpush1.bf16.msra.mxu0 %v2735
  %2776 = vmatprep.subr.bf16.mxu0 0
  %2777 = vmatpush1.bf16.msra.mxu0 0
  %2778 = vmatprep.subr.bf16.mxu0 0
  %2779 = vmatpush1.bf16.msra.mxu0 0
  %2780 = vmatprep.subr.bf16.mxu0 0
  %2781 = vmatpush1.bf16.msra.mxu0 0
  %2782 = vmatprep.subr.bf16.mxu0 0
  %2783 = vmatpush1.bf16.msra.mxu0 0
  %2784 = vmatprep.mubr.bf16.mxu0 %v2750
  %2785 = vmatmul.mubr.bf16.gmra.mrb[0].mxu0 %v2668
  %v2786 = vpop.f32.mrb[0].mxu0
  %v2787 = vadd.f32 %v2675, %v2786
  %v2788 = vpop.f32.mrb[0].mxu0
  %v2789 = vpop.f32.mrb[0].mxu0
  %v2790 = vpop.f32.mrb[0].mxu0
  %2791 = vdwg.mxu0
  %v2792 = vld [vmem:[%s2] sm:$0xff]
  %v2793 = vld [vmem:[%s2 + $0x8] sm:$0xff]
  %v2794 = vpack.c.bf16 %v2793, %v2792
  %v2795 = vpack.c.bf16 %v2787, %v2787
  %vm2796 = vcmask 64512
  %v2798 = vsel %vm2796, %v2794, 0
  %vm2800 = vcmask 1043456
  %v2802 = vsel %vm2800, %v2795, 0
  %2804 = vmatprep.subr.bf16.mxu0 0
  %2805 = vmatpush1.bf16.msra.mxu0 %v2802
  %2806 = vmatprep.subr.bf16.mxu0 0
  %2807 = vmatpush1.bf16.msra.mxu0 0
  %2808 = vmatprep.subr.bf16.mxu0 0
  %2809 = vmatpush1.bf16.msra.mxu0 0
  %2810 = vmatprep.subr.bf16.mxu0 0
  %2811 = vmatpush1.bf16.msra.mxu0 0
  %2812 = vmatprep.subr.bf16.mxu0 0
  %2813 = vmatpush1.bf16.msra.mxu0 0
  %2814 = vmatprep.subr.bf16.mxu0 0
  %2815 = vmatpush1.bf16.msra.mxu0 0
  %2816 = vmatprep.subr.bf16.mxu0 0
  %2817 = vmatpush1.bf16.msra.mxu0 0
  %2818 = vmatprep.subr.bf16.mxu0 0
  %2819 = vmatpush1.bf16.msra.mxu0 0
  %2820 = vmatprep.subr.bf16.mxu0 0
  %2821 = vmatpush1.bf16.msra.mxu0 0
  %2822 = vmatprep.subr.bf16.mxu0 0
  %2823 = vmatpush1.bf16.msra.mxu0 0
  %2824 = vmatprep.subr.bf16.mxu0 0
  %2825 = vmatpush1.bf16.msra.mxu0 0
  %2826 = vmatprep.subr.bf16.mxu0 0
  %2827 = vmatpush1.bf16.msra.mxu0 0
  %2828 = vmatprep.subr.bf16.mxu0 0
  %2829 = vmatpush1.bf16.msra.mxu0 0
  %2830 = vmatprep.subr.bf16.mxu0 0
  %2831 = vmatpush1.bf16.msra.mxu0 0
  %2832 = vmatprep.subr.bf16.mxu0 0
  %2833 = vmatpush1.bf16.msra.mxu0 0
  %2834 = vmatprep.subr.bf16.mxu0 0
  %2835 = vmatpush1.bf16.msra.mxu0 0
  %2836 = vmatprep.mubr.bf16.mxu0 0
  %2837 = vmatmul.mubr.bf16.gmra.mrb[0].mxu0 %v2798
  %v2838 = vpop.f32.mrb[0].mxu0
  %v2839 = vadd.f32 0.0, %v2838
  %v2840 = vpop.f32.mrb[0].mxu0
  %v2841 = vpop.f32.mrb[0].mxu0
  %v2842 = vadd.f32 0.0, %v2841
  %v2843 = vpop.f32.mrb[0].mxu0
  %2844 = vdwg.mxu0
  %v2845 = vld [vmem:[%s6 + $0x188] sm:$0xf]
  %v2846 = vld [vmem:[%s6 + $0x18c] sm:$0xf]
  %v2847 = vld [vmem:[%s6 + $0x190] sm:$0xf]
  %v2848 = vld [vmem:[%s6 + $0x194] sm:$0xf]
  %v2849 = vld [vmem:[%s6 + $0x198] sm:$0xf]
  %v2850 = vld [vmem:[%s6 + $0x19c] sm:$0xf]
  %v2851 = vld [vmem:[%s6 + $0x1a0] sm:$0xf]
  %v2852 = vld [vmem:[%s6 + $0x1a4] sm:$0xf]
  %v2853 = vpack.c.bf16 %v2842, %v2839
  %v2862 = vunpack.c.l.b16 %v2845
  %v2863 = vunpack.c.l.b16 %v2846
  %v2864 = vunpack.c.l.b16 %v2847
  %v2865 = vunpack.c.l.b16 %v2848
  %v2866 = vunpack.c.l.b16 %v2849
  %v2867 = vunpack.c.l.b16 %v2850
  %v2868 = vunpack.c.l.b16 %v2851
  %v2869 = vunpack.c.l.b16 %v2852
  %v2870 = vpack.c.b16 %v2863, %v2862
  %v2871 = vpack.c.b16 %v2865, %v2864
  %v2872 = vpack.c.b16 %v2867, %v2866
  %v2873 = vpack.c.b16 %v2869, %v2868
  %v2879 = vsel %vm2748, %v2853, 0
  %2881 = vmatprep.subr.bf16.mxu0 0
  %2882 = vmatpush1.bf16.msra.mxu0 %v2870
  %2883 = vmatprep.subr.bf16.mxu0 0
  %2884 = vmatpush1.bf16.msra.mxu0 %v2871
  %2885 = vmatprep.subr.bf16.mxu0 0
  %2886 = vmatpush1.bf16.msra.mxu0 %v2872
  %2887 = vmatprep.subr.bf16.mxu0 0
  %2888 = vmatpush1.bf16.msra.mxu0 %v2873
  %2889 = vmatprep.subr.bf16.mxu0 0
  %2890 = vmatpush1.bf16.msra.mxu0 0
  %2891 = vmatprep.subr.bf16.mxu0 0
  %2892 = vmatpush1.bf16.msra.mxu0 0
  %2893 = vmatprep.subr.bf16.mxu0 0
  %2894 = vmatpush1.bf16.msra.mxu0 0
  %2895 = vmatprep.subr.bf16.mxu0 0
  %2896 = vmatpush1.bf16.msra.mxu0 0
  %2897 = vmatprep.subr.bf16.mxu0 0
  %2898 = vmatpush1.bf16.msra.mxu0 0
  %2899 = vmatprep.subr.bf16.mxu0 0
  %2900 = vmatpush1.bf16.msra.mxu0 0
  %2901 = vmatprep.subr.bf16.mxu0 0
  %2902 = vmatpush1.bf16.msra.mxu0 0
  %2903 = vmatprep.subr.bf16.mxu0 0
  %2904 = vmatpush1.bf16.msra.mxu0 0
  %2905 = vmatprep.subr.bf16.mxu0 0
  %2906 = vmatpush1.bf16.msra.mxu0 0
  %2907 = vmatprep.subr.bf16.mxu0 0
  %2908 = vmatpush1.bf16.msra.mxu0 0
  %2909 = vmatprep.subr.bf16.mxu0 0
  %2910 = vmatpush1.bf16.msra.mxu0 0
  %2911 = vmatprep.subr.bf16.mxu0 0
  %2912 = vmatpush1.bf16.msra.mxu0 0
  %2913 = vmatprep.mubr.bf16.mxu0 0
  %2914 = vmatmul.mubr.bf16.gmra.mrb[0].mxu0 %v2879
  %v2915 = vpop.f32.mrb[0].mxu0
  %v2916 = vadd.f32 0.0, %v2915
  %v2917 = vpop.f32.mrb[0].mxu0
  %v2918 = vpop.f32.mrb[0].mxu0
  %v2919 = vadd.f32 0.0, %v2918
  %v2920 = vpop.f32.mrb[0].mxu0
  %2921 = vdwg.mxu0
  %2922 = vst [vmem:[#allocation4] sm:$0x1] 0.0
  %v2925 = vrot.slane %v30, 7
  %v2926 = vrot.slane %v31, 7
  %v2927 = vsel %vm294, %v2925, %v2926
  %2930 = vst [vmem:[#allocation4] sm:$0xfe] %v2925
  %2931 = vst [vmem:[#allocation4 + $0x48] sm:$0xff] %v2927
  %2932 = vst [vmem:[#allocation4 + $0x8] sm:$0xff] %v30
  %2933 = vst [vmem:[#allocation4 + $0x50] sm:$0xff] %v31
  %v2934 = vrot.slane %v30, 1
  %v2935 = vrot.slane %v31, 1
  %v2936 = vsel %vm333, %v2934, %v2935
  %2939 = vst [vmem:[#allocation4 + $0x10] sm:$0xff] %v2936
  %2940 = vst [vmem:[#allocation4 + $0x58] sm:$0x7f] %v2935
  %2941 = vst [vmem:[#allocation4 + $0x5f] sm:$0x1] 0.0
  %2942 = vst [vmem:[#allocation4 + $0x18] sm:$0x1] 0.0
  %v2945 = vrot.slane %v2144, 7
  %v2946 = vrot.slane %v2145, 7
  %v2947 = vsel %vm294, %v2945, %v2946
  %2950 = vst [vmem:[#allocation4 + $0x18] sm:$0xfe] %v2945
  %2951 = vst [vmem:[#allocation4 + $0x60] sm:$0xff] %v2947
  %2952 = vst [vmem:[#allocation4 + $0x20] sm:$0xff] %v2144
  %2953 = vst [vmem:[#allocation4 + $0x68] sm:$0xff] %v2145
  %v2954 = vrot.slane %v2144, 1
  %v2955 = vrot.slane %v2145, 1
  %v2956 = vsel %vm333, %v2954, %v2955
  %2959 = vst [vmem:[#allocation4 + $0x28] sm:$0xff] %v2956
  %2960 = vst [vmem:[#allocation4 + $0x70] sm:$0x7f] %v2955
  %2961 = vst [vmem:[#allocation4 + $0x77] sm:$0x1] 0.0
  %2962 = vst [vmem:[#allocation4 + $0x30] sm:$0x1] 0.0
  %v2965 = vrot.slane %v2916, 7
  %v2966 = vrot.slane %v2919, 7
  %v2967 = vsel %vm294, %v2965, %v2966
  %2970 = vst [vmem:[#allocation4 + $0x30] sm:$0xfe] %v2965
  %2971 = vst [vmem:[#allocation4 + $0x78] sm:$0xff] %v2967
  %2972 = vst [vmem:[#allocation4 + $0x38] sm:$0xff] %v2916
  %2973 = vst [vmem:[#allocation4 + $0x80] sm:$0xff] %v2919
  %v2974 = vrot.slane %v2916, 1
  %v2975 = vrot.slane %v2919, 1
  %v2976 = vsel %vm333, %v2974, %v2975
  %2979 = vst [vmem:[#allocation4 + $0x40] sm:$0xff] %v2976
  %2980 = vst [vmem:[#allocation4 + $0x88] sm:$0x7f] %v2975
  %2981 = vst [vmem:[#allocation4 + $0x8f] sm:$0x1] 0.0
  %v2982 = vld [vmem:[#allocation4] sm:$0xff]
  %v2983 = vld [vmem:[#allocation4 + $0x8] sm:$0xff]
  %v2984 = vld [vmem:[#allocation4 + $0x10] sm:$0xff]
  %v2985 = vld [vmem:[#allocation4 + $0x18] sm:$0xff]
  %v2986 = vld [vmem:[#allocation4 + $0x20] sm:$0xff]
  %v2987 = vld [vmem:[#allocation4 + $0x28] sm:$0xff]
  %v2988 = vld [vmem:[#allocation4 + $0x30] sm:$0xff]
  %v2989 = vld [vmem:[#allocation4 + $0x38] sm:$0xff]
  %v2990 = vld [vmem:[#allocation4 + $0x40] sm:$0xff]
  %v2991 = vld [vmem:[#allocation4 + $0x48] sm:$0xff]
  %v2992 = vld [vmem:[#allocation4 + $0x50] sm:$0xff]
  %v2993 = vld [vmem:[#allocation4 + $0x58] sm:$0xff]
  %v2994 = vld [vmem:[#allocation4 + $0x60] sm:$0xff]
  %v2995 = vld [vmem:[#allocation4 + $0x68] sm:$0xff]
  %v2996 = vld [vmem:[#allocation4 + $0x70] sm:$0xff]
  %v2997 = vld [vmem:[#allocation4 + $0x78] sm:$0xff]
  %v2998 = vld [vmem:[#allocation4 + $0x80] sm:$0xff]
  %v2999 = vld [vmem:[#allocation4 + $0x88] sm:$0xff]
  %v3000 = vld [vmem:[%s6 + $0x1a8] sm:$0xf]
  %v3001 = vld [vmem:[%s6 + $0x1ac] sm:$0xf]
  %v3002 = vld [vmem:[%s6 + $0x1b0] sm:$0xf]
  %v3003 = vld [vmem:[%s6 + $0x1b4] sm:$0xf]
  %v3004 = vld [vmem:[%s6 + $0x1b8] sm:$0xf]
  %v3005 = vld [vmem:[%s6 + $0x1bc] sm:$0xf]
  %v3006 = vld [vmem:[%s6 + $0x1c0] sm:$0xf]
  %v3007 = vld [vmem:[%s6 + $0x1c4] sm:$0xf]
  %v3008 = vld [vmem:[%s6 + $0x1c8] sm:$0xf]
  %v3009 = vld [vmem:[%s6 + $0x1cc] sm:$0xf]
  %v3010 = vld [vmem:[%s6 + $0x1d0] sm:$0xf]
  %v3011 = vld [vmem:[%s6 + $0x1d4] sm:$0xf]
  %v3012 = vld [vmem:[%s6 + $0x1d8] sm:$0xf]
  %v3013 = vld [vmem:[%s6 + $0x1dc] sm:$0xf]
  %v3014 = vld [vmem:[%s6 + $0x1e0] sm:$0xf]
  %v3015 = vld [vmem:[%s6 + $0x1e4] sm:$0xf]
  %v3016 = vld [vmem:[%s6 + $0x1e8] sm:$0xf]
  %v3017 = vld [vmem:[%s6 + $0x1ec] sm:$0xf]
  %v3018 = vld [vmem:[%s6 + $0x1f0] sm:$0xf]
  %v3019 = vld [vmem:[%s6 + $0x1f4] sm:$0xf]
  %v3020 = vld [vmem:[%s6 + $0x1f8] sm:$0xf]
  %v3021 = vld [vmem:[%s6 + $0x1fc] sm:$0xf]
  %v3022 = vld [vmem:[%s6 + $0x200] sm:$0xf]
  %v3023 = vld [vmem:[%s6 + $0x204] sm:$0xf]
  %v3024 = vld [vmem:[%s6 + $0x208] sm:$0xf]
  %v3025 = vld [vmem:[%s6 + $0x20c] sm:$0xf]
  %v3026 = vld [vmem:[%s6 + $0x210] sm:$0xf]
  %v3027 = vld [vmem:[%s6 + $0x214] sm:$0xf]
  %v3028 = vld [vmem:[%s6 + $0x218] sm:$0xf]
  %v3029 = vld [vmem:[%s6 + $0x21c] sm:$0xf]
  %v3030 = vld [vmem:[%s6 + $0x220] sm:$0xf]
  %v3031 = vld [vmem:[%s6 + $0x224] sm:$0xf]
  %v3032 = vld [vmem:[%s6 + $0x228] sm:$0xf]
  %v3033 = vld [vmem:[%s6 + $0x22c] sm:$0xf]
  %v3034 = vld [vmem:[%s6 + $0x230] sm:$0xf]
  %v3035 = vld [vmem:[%s6 + $0x234] sm:$0xf]
  %v3036 = vld [vmem:[%s6 + $0x238] sm:$0xf]
  %v3037 = vld [vmem:[%s6 + $0x23c] sm:$0xf]
  %v3038 = vld [vmem:[%s6 + $0x240] sm:$0xf]
  %v3039 = vld [vmem:[%s6 + $0x244] sm:$0xf]
  %v3040 = vld [vmem:[%s6 + $0x248] sm:$0xf]
  %v3041 = vld [vmem:[%s6 + $0x24c] sm:$0xf]
  %v3042 = vld [vmem:[%s6 + $0x250] sm:$0xf]
  %v3043 = vld [vmem:[%s6 + $0x254] sm:$0xf]
  %v3044 = vld [vmem:[%s6 + $0x258] sm:$0xf]
  %v3045 = vld [vmem:[%s6 + $0x25c] sm:$0xf]
  %v3046 = vld [vmem:[%s6 + $0x260] sm:$0xf]
  %v3047 = vld [vmem:[%s6 + $0x264] sm:$0xf]
  %v3048 = vld [vmem:[%s6 + $0x268] sm:$0xf]
  %v3049 = vld [vmem:[%s6 + $0x26c] sm:$0xf]
  %v3050 = vld [vmem:[%s6 + $0x270] sm:$0xf]
  %v3051 = vld [vmem:[%s6 + $0x274] sm:$0xf]
  %v3052 = vld [vmem:[%s6 + $0x278] sm:$0xf]
  %v3053 = vld [vmem:[%s6 + $0x27c] sm:$0xf]
  %v3054 = vld [vmem:[%s6 + $0x280] sm:$0xf]
  %v3055 = vld [vmem:[%s6 + $0x284] sm:$0xf]
  %v3056 = vld [vmem:[%s6 + $0x288] sm:$0xf]
  %v3057 = vld [vmem:[%s6 + $0x28c] sm:$0xf]
  %v3058 = vld [vmem:[%s6 + $0x290] sm:$0xf]
  %v3059 = vld [vmem:[%s6 + $0x294] sm:$0xf]
  %v3060 = vld [vmem:[%s6 + $0x298] sm:$0xf]
  %v3061 = vld [vmem:[%s6 + $0x29c] sm:$0xf]
  %v3062 = vld [vmem:[%s6 + $0x2a0] sm:$0xf]
  %v3063 = vld [vmem:[%s6 + $0x2a4] sm:$0xf]
  %v3064 = vld [vmem:[%s6 + $0x2a8] sm:$0xf]
  %v3065 = vld [vmem:[%s6 + $0x2ac] sm:$0xf]
  %v3066 = vld [vmem:[%s6 + $0x2b0] sm:$0xf]
  %v3067 = vld [vmem:[%s6 + $0x2b4] sm:$0xf]
  %v3068 = vld [vmem:[%s6 + $0x2b8] sm:$0xf]
  %v3069 = vld [vmem:[%s6 + $0x2bc] sm:$0xf]
  %v3070 = vld [vmem:[%s6 + $0x2c0] sm:$0xf]
  %v3071 = vld [vmem:[%s6 + $0x2c4] sm:$0xf]
  %v3072 = vld [vmem:[%s6 + $0x2c8] sm:$0xf]
  %v3073 = vld [vmem:[%s6 + $0x2cc] sm:$0xf]
  %v3074 = vld [vmem:[%s6 + $0x2d0] sm:$0xf]
  %v3075 = vld [vmem:[%s6 + $0x2d4] sm:$0xf]
  %v3076 = vld [vmem:[%s6 + $0x2d8] sm:$0xf]
  %v3077 = vld [vmem:[%s6 + $0x2dc] sm:$0xf]
  %v3078 = vld [vmem:[%s6 + $0x2e0] sm:$0xf]
  %v3079 = vld [vmem:[%s6 + $0x2e4] sm:$0xf]
  %v3080 = vld [vmem:[%s6 + $0x2e8] sm:$0xf]
  %v3081 = vld [vmem:[%s6 + $0x2ec] sm:$0xf]
  %v3082 = vld [vmem:[%s6 + $0x2f0] sm:$0xf]
  %v3083 = vld [vmem:[%s6 + $0x2f4] sm:$0xf]
  %v3084 = vld [vmem:[%s6 + $0x2f8] sm:$0xf]
  %v3085 = vld [vmem:[%s6 + $0x2fc] sm:$0xf]
  %v3086 = vld [vmem:[%s6 + $0x300] sm:$0xf]
  %v3087 = vld [vmem:[%s6 + $0x304] sm:$0xf]
  %v3088 = vld [vmem:[%s6 + $0x308] sm:$0xf]
  %v3089 = vld [vmem:[%s6 + $0x30c] sm:$0xf]
  %v3090 = vld [vmem:[%s6 + $0x310] sm:$0xf]
  %v3091 = vld [vmem:[%s6 + $0x314] sm:$0xf]
  %v3092 = vld [vmem:[%s6 + $0x318] sm:$0xf]
  %v3093 = vld [vmem:[%s6 + $0x31c] sm:$0xf]
  %v3094 = vld [vmem:[%s6 + $0x320] sm:$0xf]
  %v3095 = vld [vmem:[%s6 + $0x324] sm:$0xf]
  %v3096 = vld [vmem:[%s6 + $0x328] sm:$0xf]
  %v3097 = vld [vmem:[%s6 + $0x32c] sm:$0xf]
  %v3098 = vld [vmem:[%s6 + $0x330] sm:$0xf]
  %v3099 = vld [vmem:[%s6 + $0x334] sm:$0xf]
  %v3100 = vld [vmem:[%s6 + $0x338] sm:$0xf]
  %v3101 = vld [vmem:[%s6 + $0x33c] sm:$0xf]
  %v3102 = vld [vmem:[%s6 + $0x340] sm:$0xf]
  %v3103 = vld [vmem:[%s6 + $0x344] sm:$0xf]
  %v3104 = vld [vmem:[%s6 + $0x348] sm:$0xf]
  %v3105 = vld [vmem:[%s6 + $0x34c] sm:$0xf]
  %v3106 = vld [vmem:[%s6 + $0x350] sm:$0xf]
  %v3107 = vld [vmem:[%s6 + $0x354] sm:$0xf]
  %v3108 = vld [vmem:[%s6 + $0x358] sm:$0xf]
  %v3109 = vld [vmem:[%s6 + $0x35c] sm:$0xf]
  %v3110 = vld [vmem:[%s6 + $0x360] sm:$0xf]
  %v3111 = vld [vmem:[%s6 + $0x364] sm:$0xf]
  %v3112 = vld [vmem:[%s6 + $0x368] sm:$0xf]
  %v3113 = vld [vmem:[%s6 + $0x36c] sm:$0xf]
  %v3114 = vld [vmem:[%s6 + $0x370] sm:$0xf]
  %v3115 = vld [vmem:[%s6 + $0x374] sm:$0xf]
  %v3116 = vld [vmem:[%s6 + $0x378] sm:$0xf]
  %v3117 = vld [vmem:[%s6 + $0x37c] sm:$0xf]
  %v3118 = vld [vmem:[%s6 + $0x380] sm:$0xf]
  %v3119 = vld [vmem:[%s6 + $0x384] sm:$0xf]
  %v3120 = vld [vmem:[%s6 + $0x388] sm:$0xf]
  %v3121 = vld [vmem:[%s6 + $0x38c] sm:$0xf]
  %v3122 = vld [vmem:[%s6 + $0x390] sm:$0xf]
  %v3123 = vld [vmem:[%s6 + $0x394] sm:$0xf]
  %v3124 = vld [vmem:[%s6 + $0x398] sm:$0xf]
  %v3125 = vld [vmem:[%s6 + $0x39c] sm:$0xf]
  %v3126 = vld [vmem:[%s6 + $0x3a0] sm:$0xf]
  %v3127 = vld [vmem:[%s6 + $0x3a4] sm:$0xf]
  %v3128 = vld [vmem:[%s6 + $0x3a8] sm:$0xf]
  %v3129 = vld [vmem:[%s6 + $0x3ac] sm:$0xf]
  %v3130 = vld [vmem:[%s6 + $0x3b0] sm:$0xf]
  %v3131 = vld [vmem:[%s6 + $0x3b4] sm:$0xf]
  %v3132 = vld [vmem:[%s6 + $0x3b8] sm:$0xf]
  %v3133 = vld [vmem:[%s6 + $0x3bc] sm:$0xf]
  %v3134 = vld [vmem:[%s6 + $0x3c0] sm:$0xf]
  %v3135 = vld [vmem:[%s6 + $0x3c4] sm:$0xf]
  %v3136 = vld [vmem:[%s6 + $0x3c8] sm:$0xf]
  %v3137 = vld [vmem:[%s6 + $0x3cc] sm:$0xf]
  %v3138 = vld [vmem:[%s6 + $0x3d0] sm:$0xf]
  %v3139 = vld [vmem:[%s6 + $0x3d4] sm:$0xf]
  %v3140 = vld [vmem:[%s6 + $0x3d8] sm:$0xf]
  %v3141 = vld [vmem:[%s6 + $0x3dc] sm:$0xf]
  %v3142 = vld [vmem:[%s6 + $0x3e0] sm:$0xf]
  %v3143 = vld [vmem:[%s6 + $0x3e4] sm:$0xf]
  %v3144 = vpack.c.bf16 %v2991, %v2982
  %v3145 = vpack.c.bf16 %v2992, %v2983
  %v3146 = vpack.c.bf16 %v2993, %v2984
  %v3147 = vpack.c.bf16 %v2994, %v2985
  %v3148 = vpack.c.bf16 %v2995, %v2986
  %v3149 = vpack.c.bf16 %v2996, %v2987
  %v3150 = vpack.c.bf16 %v2997, %v2988
  %v3151 = vpack.c.bf16 %v2998, %v2989
  %v3152 = vpack.c.bf16 %v2999, %v2990
  %v3153 = vld [vmem:[%s6 + $0x3e8] sm:$0x1]
  %v3154 = vunpack.c.l.bf16 %v3153
  %v3155 = vlaneseq
  %v3156 = vshrl.u32 %v3155, 7
  %v3157 = vsub.s32 0, %v3156
  %v3158 = vrot.slane %v3154, %v3157
  %v3303 = vunpack.c.l.b16 %v3000
  %v3304 = vunpack.c.l.b16 %v3001
  %v3305 = vunpack.c.l.b16 %v3002
  %v3306 = vunpack.c.l.b16 %v3003
  %v3307 = vunpack.c.l.b16 %v3004
  %v3308 = vunpack.c.l.b16 %v3005
  %v3309 = vunpack.c.l.b16 %v3006
  %v3310 = vunpack.c.l.b16 %v3007
  %v3311 = vunpack.c.l.b16 %v3008
  %v3312 = vunpack.c.l.b16 %v3009
  %v3313 = vunpack.c.l.b16 %v3010
  %v3314 = vunpack.c.l.b16 %v3011
  %v3315 = vunpack.c.l.b16 %v3012
  %v3316 = vunpack.c.l.b16 %v3013
  %v3317 = vunpack.c.l.b16 %v3014
  %v3318 = vunpack.c.l.b16 %v3015
  %v3319 = vunpack.c.l.b16 %v3016
  %v3320 = vunpack.c.l.b16 %v3017
  %v3321 = vunpack.c.l.b16 %v3018
  %v3322 = vunpack.c.l.b16 %v3019
  %v3323 = vunpack.c.l.b16 %v3020
  %v3324 = vunpack.c.l.b16 %v3021
  %v3325 = vunpack.c.l.b16 %v3022
  %v3326 = vunpack.c.l.b16 %v3023
  %v3327 = vunpack.c.l.b16 %v3024
  %v3328 = vunpack.c.l.b16 %v3025
  %v3329 = vunpack.c.l.b16 %v3026
  %v3330 = vunpack.c.l.b16 %v3027
  %v3331 = vunpack.c.l.b16 %v3028
  %v3332 = vunpack.c.l.b16 %v3029
  %v3333 = vunpack.c.l.b16 %v3030
  %v3334 = vunpack.c.l.b16 %v3031
  %v3335 = vunpack.c.l.b16 %v3032
  %v3336 = vunpack.c.l.b16 %v3033
  %v3337 = vunpack.c.l.b16 %v3034
  %v3338 = vunpack.c.l.b16 %v3035
  %v3339 = vunpack.c.l.b16 %v3036
  %v3340 = vunpack.c.l.b16 %v3037
  %v3341 = vunpack.c.l.b16 %v3038
  %v3342 = vunpack.c.l.b16 %v3039
  %v3343 = vunpack.c.l.b16 %v3040
  %v3344 = vunpack.c.l.b16 %v3041
  %v3345 = vunpack.c.l.b16 %v3042
  %v3346 = vunpack.c.l.b16 %v3043
  %v3347 = vunpack.c.l.b16 %v3044
  %v3348 = vunpack.c.l.b16 %v3045
  %v3349 = vunpack.c.l.b16 %v3046
  %v3350 = vunpack.c.l.b16 %v3047
  %v3351 = vunpack.c.l.b16 %v3048
  %v3352 = vunpack.c.l.b16 %v3049
  %v3353 = vunpack.c.l.b16 %v3050
  %v3354 = vunpack.c.l.b16 %v3051
  %v3355 = vunpack.c.l.b16 %v3052
  %v3356 = vunpack.c.l.b16 %v3053
  %v3357 = vunpack.c.l.b16 %v3054
  %v3358 = vunpack.c.l.b16 %v3055
  %v3359 = vunpack.c.l.b16 %v3056
  %v3360 = vunpack.c.l.b16 %v3057
  %v3361 = vunpack.c.l.b16 %v3058
  %v3362 = vunpack.c.l.b16 %v3059
  %v3363 = vunpack.c.l.b16 %v3060
  %v3364 = vunpack.c.l.b16 %v3061
  %v3365 = vunpack.c.l.b16 %v3062
  %v3366 = vunpack.c.l.b16 %v3063
  %v3367 = vunpack.c.l.b16 %v3064
  %v3368 = vunpack.c.l.b16 %v3065
  %v3369 = vunpack.c.l.b16 %v3066
  %v3370 = vunpack.c.l.b16 %v3067
  %v3371 = vunpack.c.l.b16 %v3068
  %v3372 = vunpack.c.l.b16 %v3069
  %v3373 = vunpack.c.l.b16 %v3070
  %v3374 = vunpack.c.l.b16 %v3071
  %v3375 = vunpack.c.l.b16 %v3072
  %v3376 = vunpack.c.l.b16 %v3073
  %v3377 = vunpack.c.l.b16 %v3074
  %v3378 = vunpack.c.l.b16 %v3075
  %v3379 = vunpack.c.l.b16 %v3076
  %v3380 = vunpack.c.l.b16 %v3077
  %v3381 = vunpack.c.l.b16 %v3078
  %v3382 = vunpack.c.l.b16 %v3079
  %v3383 = vunpack.c.l.b16 %v3080
  %v3384 = vunpack.c.l.b16 %v3081
  %v3385 = vunpack.c.l.b16 %v3082
  %v3386 = vunpack.c.l.b16 %v3083
  %v3387 = vunpack.c.l.b16 %v3084
  %v3388 = vunpack.c.l.b16 %v3085
  %v3389 = vunpack.c.l.b16 %v3086
  %v3390 = vunpack.c.l.b16 %v3087
  %v3391 = vunpack.c.l.b16 %v3088
  %v3392 = vunpack.c.l.b16 %v3089
  %v3393 = vunpack.c.l.b16 %v3090
  %v3394 = vunpack.c.l.b16 %v3091
  %v3395 = vunpack.c.l.b16 %v3092
  %v3396 = vunpack.c.l.b16 %v3093
  %v3397 = vunpack.c.l.b16 %v3094
  %v3398 = vunpack.c.l.b16 %v3095
  %v3399 = vunpack.c.l.b16 %v3096
  %v3400 = vunpack.c.l.b16 %v3097
  %v3401 = vunpack.c.l.b16 %v3098
  %v3402 = vunpack.c.l.b16 %v3099
  %v3403 = vunpack.c.l.b16 %v3100
  %v3404 = vunpack.c.l.b16 %v3101
  %v3405 = vunpack.c.l.b16 %v3102
  %v3406 = vunpack.c.l.b16 %v3103
  %v3407 = vunpack.c.l.b16 %v3104
  %v3408 = vunpack.c.l.b16 %v3105
  %v3409 = vunpack.c.l.b16 %v3106
  %v3410 = vunpack.c.l.b16 %v3107
  %v3411 = vunpack.c.l.b16 %v3108
  %v3412 = vunpack.c.l.b16 %v3109
  %v3413 = vunpack.c.l.b16 %v3110
  %v3414 = vunpack.c.l.b16 %v3111
  %v3415 = vunpack.c.l.b16 %v3112
  %v3416 = vunpack.c.l.b16 %v3113
  %v3417 = vunpack.c.l.b16 %v3114
  %v3418 = vunpack.c.l.b16 %v3115
  %v3419 = vunpack.c.l.b16 %v3116
  %v3420 = vunpack.c.l.b16 %v3117
  %v3421 = vunpack.c.l.b16 %v3118
  %v3422 = vunpack.c.l.b16 %v3119
  %v3423 = vunpack.c.l.b16 %v3120
  %v3424 = vunpack.c.l.b16 %v3121
  %v3425 = vunpack.c.l.b16 %v3122
  %v3426 = vunpack.c.l.b16 %v3123
  %v3427 = vunpack.c.l.b16 %v3124
  %v3428 = vunpack.c.l.b16 %v3125
  %v3429 = vunpack.c.l.b16 %v3126
  %v3430 = vunpack.c.l.b16 %v3127
  %v3431 = vunpack.c.l.b16 %v3128
  %v3432 = vunpack.c.l.b16 %v3129
  %v3433 = vunpack.c.l.b16 %v3130
  %v3434 = vunpack.c.l.b16 %v3131
  %v3435 = vunpack.c.l.b16 %v3132
  %v3436 = vunpack.c.l.b16 %v3133
  %v3437 = vunpack.c.l.b16 %v3134
  %v3438 = vunpack.c.l.b16 %v3135
  %v3439 = vunpack.c.l.b16 %v3136
  %v3440 = vunpack.c.l.b16 %v3137
  %v3441 = vunpack.c.l.b16 %v3138
  %v3442 = vunpack.c.l.b16 %v3139
  %v3443 = vunpack.c.l.b16 %v3140
  %v3444 = vunpack.c.l.b16 %v3141
  %v3445 = vunpack.c.l.b16 %v3142
  %v3446 = vunpack.c.l.b16 %v3143
  %v3447 = vpack.c.b16 %v3304, %v3303
  %v3448 = vpack.c.b16 %v3306, %v3305
  %v3449 = vpack.c.b16 %v3308, %v3307
  %v3450 = vpack.c.b16 %v3310, %v3309
  %v3451 = vpack.c.b16 %v3312, %v3311
  %v3452 = vpack.c.b16 %v3314, %v3313
  %v3453 = vpack.c.b16 %v3316, %v3315
  %v3454 = vpack.c.b16 %v3318, %v3317
  %v3455 = vpack.c.b16 %v3320, %v3319
  %v3456 = vpack.c.b16 %v3322, %v3321
  %v3457 = vpack.c.b16 %v3324, %v3323
  %v3458 = vpack.c.b16 %v3326, %v3325
  %v3459 = vpack.c.b16 %v3328, %v3327
  %v3460 = vpack.c.b16 %v3330, %v3329
  %v3461 = vpack.c.b16 %v3332, %v3331
  %v3462 = vpack.c.b16 %v3334, %v3333
  %v3463 = vpack.c.b16 %v3336, %v3335
  %v3464 = vpack.c.b16 %v3338, %v3337
  %v3465 = vpack.c.b16 %v3340, %v3339
  %v3466 = vpack.c.b16 %v3342, %v3341
  %v3467 = vpack.c.b16 %v3344, %v3343
  %v3468 = vpack.c.b16 %v3346, %v3345
  %v3469 = vpack.c.b16 %v3348, %v3347
  %v3470 = vpack.c.b16 %v3350, %v3349
  %v3471 = vpack.c.b16 %v3352, %v3351
  %v3472 = vpack.c.b16 %v3354, %v3353
  %v3473 = vpack.c.b16 %v3356, %v3355
  %v3474 = vpack.c.b16 %v3358, %v3357
  %v3475 = vpack.c.b16 %v3360, %v3359
  %v3476 = vpack.c.b16 %v3362, %v3361
  %v3477 = vpack.c.b16 %v3364, %v3363
  %v3478 = vpack.c.b16 %v3366, %v3365
  %v3479 = vpack.c.b16 %v3368, %v3367
  %v3480 = vpack.c.b16 %v3370, %v3369
  %v3481 = vpack.c.b16 %v3372, %v3371
  %v3482 = vpack.c.b16 %v3374, %v3373
  %v3483 = vpack.c.b16 %v3376, %v3375
  %v3484 = vpack.c.b16 %v3378, %v3377
  %v3485 = vpack.c.b16 %v3380, %v3379
  %v3486 = vpack.c.b16 %v3382, %v3381
  %v3487 = vpack.c.b16 %v3384, %v3383
  %v3488 = vpack.c.b16 %v3386, %v3385
  %v3489 = vpack.c.b16 %v3388, %v3387
  %v3490 = vpack.c.b16 %v3390, %v3389
  %v3491 = vpack.c.b16 %v3392, %v3391
  %v3492 = vpack.c.b16 %v3394, %v3393
  %v3493 = vpack.c.b16 %v3396, %v3395
  %v3494 = vpack.c.b16 %v3398, %v3397
  %v3495 = vpack.c.b16 %v3400, %v3399
  %v3496 = vpack.c.b16 %v3402, %v3401
  %v3497 = vpack.c.b16 %v3404, %v3403
  %v3498 = vpack.c.b16 %v3406, %v3405
  %v3499 = vpack.c.b16 %v3408, %v3407
  %v3500 = vpack.c.b16 %v3410, %v3409
  %v3501 = vpack.c.b16 %v3412, %v3411
  %v3502 = vpack.c.b16 %v3414, %v3413
  %v3503 = vpack.c.b16 %v3416, %v3415
  %v3504 = vpack.c.b16 %v3418, %v3417
  %v3505 = vpack.c.b16 %v3420, %v3419
  %v3506 = vpack.c.b16 %v3422, %v3421
  %v3507 = vpack.c.b16 %v3424, %v3423
  %v3508 = vpack.c.b16 %v3426, %v3425
  %v3509 = vpack.c.b16 %v3428, %v3427
  %v3510 = vpack.c.b16 %v3430, %v3429
  %v3511 = vpack.c.b16 %v3432, %v3431
  %v3512 = vpack.c.b16 %v3434, %v3433
  %v3513 = vpack.c.b16 %v3436, %v3435
  %v3514 = vpack.c.b16 %v3438, %v3437
  %v3515 = vpack.c.b16 %v3440, %v3439
  %v3516 = vpack.c.b16 %v3442, %v3441
  %v3517 = vpack.c.b16 %v3444, %v3443
  %v3518 = vpack.c.b16 %v3446, %v3445
  %3591 = vmatprep.subr.bf16.mxu0 0
  %3592 = vmatpush1.bf16.msra.mxu0 %v3447
  %3593 = vmatprep.subr.bf16.mxu0 0
  %3594 = vmatpush1.bf16.msra.mxu0 %v3448
  %3595 = vmatprep.subr.bf16.mxu0 0
  %3596 = vmatpush1.bf16.msra.mxu0 %v3449
  %3597 = vmatprep.subr.bf16.mxu0 0
  %3598 = vmatpush1.bf16.msra.mxu0 %v3450
  %3599 = vmatprep.subr.bf16.mxu0 0
  %3600 = vmatpush1.bf16.msra.mxu0 %v3451
  %3601 = vmatprep.subr.bf16.mxu0 0
  %3602 = vmatpush1.bf16.msra.mxu0 %v3452
  %3603 = vmatprep.subr.bf16.mxu0 0
  %3604 = vmatpush1.bf16.msra.mxu0 %v3453
  %3605 = vmatprep.subr.bf16.mxu0 0
  %3606 = vmatpush1.bf16.msra.mxu0 %v3454
  %3607 = vmatprep.subr.bf16.mxu0 0
  %3608 = vmatpush1.bf16.msra.mxu0 %v3455
  %3609 = vmatprep.subr.bf16.mxu0 0
  %3610 = vmatpush1.bf16.msra.mxu0 %v3456
  %3611 = vmatprep.subr.bf16.mxu0 0
  %3612 = vmatpush1.bf16.msra.mxu0 %v3457
  %3613 = vmatprep.subr.bf16.mxu0 0
  %3614 = vmatpush1.bf16.msra.mxu0 %v3458
  %3615 = vmatprep.subr.bf16.mxu0 0
  %3616 = vmatpush1.bf16.msra.mxu0 %v3459
  %3617 = vmatprep.subr.bf16.mxu0 0
  %3618 = vmatpush1.bf16.msra.mxu0 %v3460
  %3619 = vmatprep.subr.bf16.mxu0 0
  %3620 = vmatpush1.bf16.msra.mxu0 %v3461
  %3621 = vmatprep.subr.bf16.mxu0 0
  %3622 = vmatpush1.bf16.msra.mxu0 %v3462
  %3623 = vmatprep.mubr.bf16.mxu0 %v3145
  %3624 = vmatmul.mubr.bf16.gmra.mrb[0].mxu0 %v3144
  %v3625 = vpop.f32.mrb[0].mxu0
  %v3626 = vadd.f32 %v3158, %v3625
  %v3627 = vpop.f32.mrb[0].mxu0
  %v3628 = vpop.f32.mrb[0].mxu0
  %v3629 = vadd.f32 %v3158, %v3628
  %v3630 = vpop.f32.mrb[0].mxu0
  %3631 = vdwg.mxu0
  %3632 = vmatprep.subr.bf16.mxu0 0
  %3633 = vmatpush1.bf16.msra.mxu0 %v3463
  %3634 = vmatprep.subr.bf16.mxu0 0
  %3635 = vmatpush1.bf16.msra.mxu0 %v3464
  %3636 = vmatprep.subr.bf16.mxu0 0
  %3637 = vmatpush1.bf16.msra.mxu0 %v3465
  %3638 = vmatprep.subr.bf16.mxu0 0
  %3639 = vmatpush1.bf16.msra.mxu0 %v3466
  %3640 = vmatprep.subr.bf16.mxu0 0
  %3641 = vmatpush1.bf16.msra.mxu0 %v3467
  %3642 = vmatprep.subr.bf16.mxu0 0
  %3643 = vmatpush1.bf16.msra.mxu0 %v3468
  %3644 = vmatprep.subr.bf16.mxu0 0
  %3645 = vmatpush1.bf16.msra.mxu0 %v3469
  %3646 = vmatprep.subr.bf16.mxu0 0
  %3647 = vmatpush1.bf16.msra.mxu0 %v3470
  %3648 = vmatprep.subr.bf16.mxu0 0
  %3649 = vmatpush1.bf16.msra.mxu0 %v3471
  %3650 = vmatprep.subr.bf16.mxu0 0
  %3651 = vmatpush1.bf16.msra.mxu0 %v3472
  %3652 = vmatprep.subr.bf16.mxu0 0
  %3653 = vmatpush1.bf16.msra.mxu0 %v3473
  %3654 = vmatprep.subr.bf16.mxu0 0
  %3655 = vmatpush1.bf16.msra.mxu0 %v3474
  %3656 = vmatprep.subr.bf16.mxu0 0
  %3657 = vmatpush1.bf16.msra.mxu0 %v3475
  %3658 = vmatprep.subr.bf16.mxu0 0
  %3659 = vmatpush1.bf16.msra.mxu0 %v3476
  %3660 = vmatprep.subr.bf16.mxu0 0
  %3661 = vmatpush1.bf16.msra.mxu0 %v3477
  %3662 = vmatprep.subr.bf16.mxu0 0
  %3663 = vmatpush1.bf16.msra.mxu0 %v3478
  %3664 = vmatprep.mubr.bf16.mxu0 %v3147
  %3665 = vmatmul.mubr.bf16.gmra.mrb[0].mxu0 %v3146
  %v3666 = vpop.f32.mrb[0].mxu0
  %v3667 = vadd.f32 %v3626, %v3666
  %v3668 = vpop.f32.mrb[0].mxu0
  %v3669 = vpop.f32.mrb[0].mxu0
  %v3670 = vadd.f32 %v3629, %v3669
  %v3671 = vpop.f32.mrb[0].mxu0
  %3672 = vdwg.mxu0
  %3673 = vmatprep.subr.bf16.mxu0 0
  %3674 = vmatpush1.bf16.msra.mxu0 %v3479
  %3675 = vmatprep.subr.bf16.mxu0 0
  %3676 = vmatpush1.bf16.msra.mxu0 %v3480
  %3677 = vmatprep.subr.bf16.mxu0 0
  %3678 = vmatpush1.bf16.msra.mxu0 %v3481
  %3679 = vmatprep.subr.bf16.mxu0 0
  %3680 = vmatpush1.bf16.msra.mxu0 %v3482
  %3681 = vmatprep.subr.bf16.mxu0 0
  %3682 = vmatpush1.bf16.msra.mxu0 %v3483
  %3683 = vmatprep.subr.bf16.mxu0 0
  %3684 = vmatpush1.bf16.msra.mxu0 %v3484
  %3685 = vmatprep.subr.bf16.mxu0 0
  %3686 = vmatpush1.bf16.msra.mxu0 %v3485
  %3687 = vmatprep.subr.bf16.mxu0 0
  %3688 = vmatpush1.bf16.msra.mxu0 %v3486
  %3689 = vmatprep.subr.bf16.mxu0 0
  %3690 = vmatpush1.bf16.msra.mxu0 %v3487
  %3691 = vmatprep.subr.bf16.mxu0 0
  %3692 = vmatpush1.bf16.msra.mxu0 %v3488
  %3693 = vmatprep.subr.bf16.mxu0 0
  %3694 = vmatpush1.bf16.msra.mxu0 %v3489
  %3695 = vmatprep.subr.bf16.mxu0 0
  %3696 = vmatpush1.bf16.msra.mxu0 %v3490
  %3697 = vmatprep.subr.bf16.mxu0 0
  %3698 = vmatpush1.bf16.msra.mxu0 %v3491
  %3699 = vmatprep.subr.bf16.mxu0 0
  %3700 = vmatpush1.bf16.msra.mxu0 %v3492
  %3701 = vmatprep.subr.bf16.mxu0 0
  %3702 = vmatpush1.bf16.msra.mxu0 %v3493
  %3703 = vmatprep.subr.bf16.mxu0 0
  %3704 = vmatpush1.bf16.msra.mxu0 %v3494
  %3705 = vmatprep.mubr.bf16.mxu0 %v3149
  %3706 = vmatmul.mubr.bf16.gmra.mrb[0].mxu0 %v3148
  %v3707 = vpop.f32.mrb[0].mxu0
  %v3708 = vadd.f32 %v3667, %v3707
  %v3709 = vpop.f32.mrb[0].mxu0
  %v3710 = vpop.f32.mrb[0].mxu0
  %v3711 = vadd.f32 %v3670, %v3710
  %v3712 = vpop.f32.mrb[0].mxu0
  %3713 = vdwg.mxu0
  %3714 = vmatprep.subr.bf16.mxu0 0
  %3715 = vmatpush1.bf16.msra.mxu0 %v3495
  %3716 = vmatprep.subr.bf16.mxu0 0
  %3717 = vmatpush1.bf16.msra.mxu0 %v3496
  %3718 = vmatprep.subr.bf16.mxu0 0
  %3719 = vmatpush1.bf16.msra.mxu0 %v3497
  %3720 = vmatprep.subr.bf16.mxu0 0
  %3721 = vmatpush1.bf16.msra.mxu0 %v3498
  %3722 = vmatprep.subr.bf16.mxu0 0
  %3723 = vmatpush1.bf16.msra.mxu0 %v3499
  %3724 = vmatprep.subr.bf16.mxu0 0
  %3725 = vmatpush1.bf16.msra.mxu0 %v3500
  %3726 = vmatprep.subr.bf16.mxu0 0
  %3727 = vmatpush1.bf16.msra.mxu0 %v3501
  %3728 = vmatprep.subr.bf16.mxu0 0
  %3729 = vmatpush1.bf16.msra.mxu0 %v3502
  %3730 = vmatprep.subr.bf16.mxu0 0
  %3731 = vmatpush1.bf16.msra.mxu0 %v3503
  %3732 = vmatprep.subr.bf16.mxu0 0
  %3733 = vmatpush1.bf16.msra.mxu0 %v3504
  %3734 = vmatprep.subr.bf16.mxu0 0
  %3735 = vmatpush1.bf16.msra.mxu0 %v3505
  %3736 = vmatprep.subr.bf16.mxu0 0
  %3737 = vmatpush1.bf16.msra.mxu0 %v3506
  %3738 = vmatprep.subr.bf16.mxu0 0
  %3739 = vmatpush1.bf16.msra.mxu0 %v3507
  %3740 = vmatprep.subr.bf16.mxu0 0
  %3741 = vmatpush1.bf16.msra.mxu0 %v3508
  %3742 = vmatprep.subr.bf16.mxu0 0
  %3743 = vmatpush1.bf16.msra.mxu0 %v3509
  %3744 = vmatprep.subr.bf16.mxu0 0
  %3745 = vmatpush1.bf16.msra.mxu0 %v3510
  %3746 = vmatprep.mubr.bf16.mxu0 %v3151
  %3747 = vmatmul.mubr.bf16.gmra.mrb[0].mxu0 %v3150
  %v3748 = vpop.f32.mrb[0].mxu0
  %v3749 = vadd.f32 %v3708, %v3748
  %v3750 = vpop.f32.mrb[0].mxu0
  %v3751 = vpop.f32.mrb[0].mxu0
  %v3752 = vadd.f32 %v3711, %v3751
  %v3753 = vpop.f32.mrb[0].mxu0
  %3754 = vdwg.mxu0
  %3755 = vmatprep.subr.bf16.mxu0 0
  %3756 = vmatpush1.bf16.msra.mxu0 %v3511
  %3757 = vmatprep.subr.bf16.mxu0 0
  %3758 = vmatpush1.bf16.msra.mxu0 %v3512
  %3759 = vmatprep.subr.bf16.mxu0 0
  %3760 = vmatpush1.bf16.msra.mxu0 %v3513
  %3761 = vmatprep.subr.bf16.mxu0 0
  %3762 = vmatpush1.bf16.msra.mxu0 %v3514
  %3763 = vmatprep.subr.bf16.mxu0 0
  %3764 = vmatpush1.bf16.msra.mxu0 %v3515
  %3765 = vmatprep.subr.bf16.mxu0 0
  %3766 = vmatpush1.bf16.msra.mxu0 %v3516
  %3767 = vmatprep.subr.bf16.mxu0 0
  %3768 = vmatpush1.bf16.msra.mxu0 %v3517
  %3769 = vmatprep.subr.bf16.mxu0 0
  %3770 = vmatpush1.bf16.msra.mxu0 %v3518
  %3771 = vmatprep.subr.bf16.mxu0 0
  %3772 = vmatpush1.bf16.msra.mxu0 0
  %3773 = vmatprep.subr.bf16.mxu0 0
  %3774 = vmatpush1.bf16.msra.mxu0 0
  %3775 = vmatprep.subr.bf16.mxu0 0
  %3776 = vmatpush1.bf16.msra.mxu0 0
  %3777 = vmatprep.subr.bf16.mxu0 0
  %3778 = vmatpush1.bf16.msra.mxu0 0
  %3779 = vmatprep.subr.bf16.mxu0 0
  %3780 = vmatpush1.bf16.msra.mxu0 0
  %3781 = vmatprep.subr.bf16.mxu0 0
  %3782 = vmatpush1.bf16.msra.mxu0 0
  %3783 = vmatprep.subr.bf16.mxu0 0
  %3784 = vmatpush1.bf16.msra.mxu0 0
  %3785 = vmatprep.subr.bf16.mxu0 0
  %3786 = vmatpush1.bf16.msra.mxu0 0
  %3787 = vmatprep.mubr.bf16.mxu0 0
  %3788 = vmatmul.mubr.bf16.gmra.mrb[0].mxu0 %v3152
  %v3789 = vpop.f32.mrb[0].mxu0
  %v3790 = vadd.f32 %v3749, %v3789
  %v3791 = vpop.f32.mrb[0].mxu0
  %v3792 = vpop.f32.mrb[0].mxu0
  %v3793 = vadd.f32 %v3752, %v3792
  %v3794 = vpop.f32.mrb[0].mxu0
  %3795 = vdwg.mxu0
  %v3796 = vadd.f32 %v3790, %v3793
  %v3797 = vrot.slane %v3796, 4
  %v3798 = vadd.f32 %v3796, %v3797
  %v3799 = vrot.slane %v3798, 2
  %v3800 = vadd.f32 %v3798, %v3799
  %v3801 = vrot.slane %v3800, 1
  %v3802 = vadd.f32 %v3800, %v3801
  %v3803 = vmul.f32 %v3790, %v3790
  %v3804 = vmul.f32 %v3793, %v3793
  %v3805 = vadd.f32 %v3803, %v3804
  %v3806 = vrot.slane %v3805, 4
  %v3807 = vadd.f32 %v3805, %v3806
  %v3808 = vrot.slane %v3807, 2
  %v3809 = vadd.f32 %v3807, %v3808
  %v3810 = vrot.slane %v3809, 1
  %v3811 = vadd.f32 %v3809, %v3810
  %v3812 = vsel %vm294, %v3802, %v3811
  %v3813 = vld [vmem:[%s6 + $0x3f0] sm:$0xf]
  %v3814 = vld [vmem:[%s6 + $0x3f4] sm:$0xf]
  %v3815 = vld [vmem:[%s6 + $0x3f8] sm:$0xf]
  %v3816 = vld [vmem:[%s6 + $0x3fc] sm:$0xf]
  %v3817 = vld [vmem:[%s6 + $0x400] sm:$0xf]
  %v3818 = vld [vmem:[%s6 + $0x404] sm:$0xf]
  %v3819 = vld [vmem:[%s6 + $0x408] sm:$0xf]
  %v3820 = vld [vmem:[%s6 + $0x40c] sm:$0xf]
  %v3821 = vld [vmem:[%s6 + $0x410] sm:$0xf]
  %v3822 = vld [vmem:[%s6 + $0x414] sm:$0xf]
  %v3823 = vld [vmem:[%s6 + $0x418] sm:$0xf]
  %v3824 = vld [vmem:[%s6 + $0x41c] sm:$0xf]
  %v3825 = vld [vmem:[%s6 + $0x420] sm:$0xf]
  %v3826 = vld [vmem:[%s6 + $0x424] sm:$0xf]
  %v3827 = vld [vmem:[%s6 + $0x428] sm:$0xf]
  %v3828 = vld [vmem:[%s6 + $0x42c] sm:$0xf]
  %v3829 = vpack.c.bf16 %v3812, %v3812
  %v3846 = vunpack.c.l.b16 %v3813
  %v3847 = vunpack.c.l.b16 %v3814
  %v3848 = vunpack.c.l.b16 %v3815
  %v3849 = vunpack.c.l.b16 %v3816
  %v3850 = vunpack.c.l.b16 %v3817
  %v3851 = vunpack.c.l.b16 %v3818
  %v3852 = vunpack.c.l.b16 %v3819
  %v3853 = vunpack.c.l.b16 %v3820
  %v3854 = vunpack.c.l.b16 %v3821
  %v3855 = vunpack.c.l.b16 %v3822
  %v3856 = vunpack.c.l.b16 %v3823
  %v3857 = vunpack.c.l.b16 %v3824
  %v3858 = vunpack.c.l.b16 %v3825
  %v3859 = vunpack.c.l.b16 %v3826
  %v3860 = vunpack.c.l.b16 %v3827
  %v3861 = vunpack.c.l.b16 %v3828
  %v3862 = vpack.c.b16 %v3847, %v3846
  %v3863 = vpack.c.b16 %v3849, %v3848
  %v3864 = vpack.c.b16 %v3851, %v3850
  %v3865 = vpack.c.b16 %v3853, %v3852
  %v3866 = vpack.c.b16 %v3855, %v3854
  %v3867 = vpack.c.b16 %v3857, %v3856
  %v3868 = vpack.c.b16 %v3859, %v3858
  %v3869 = vpack.c.b16 %v3861, %v3860
  %3878 = vmatprep.subr.bf16.mxu0 0
  %3879 = vmatpush1.bf16.msra.mxu0 %v3862
  %3880 = vmatprep.subr.bf16.mxu0 0
  %3881 = vmatpush1.bf16.msra.mxu0 %v3863
  %3882 = vmatprep.subr.bf16.mxu0 0
  %3883 = vmatpush1.bf16.msra.mxu0 %v3864
  %3884 = vmatprep.subr.bf16.mxu0 0
  %3885 = vmatpush1.bf16.msra.mxu0 %v3865
  %3886 = vmatprep.subr.bf16.mxu0 0
  %3887 = vmatpush1.bf16.msra.mxu0 %v3866
  %3888 = vmatprep.subr.bf16.mxu0 0
  %3889 = vmatpush1.bf16.msra.mxu0 %v3867
  %3890 = vmatprep.subr.bf16.mxu0 0
  %3891 = vmatpush1.bf16.msra.mxu0 %v3868
  %3892 = vmatprep.subr.bf16.mxu0 0
  %3893 = vmatpush1.bf16.msra.mxu0 %v3869
  %3894 = vmatprep.subr.bf16.mxu0 0
  %3895 = vmatpush1.bf16.msra.mxu0 0
  %3896 = vmatprep.subr.bf16.mxu0 0
  %3897 = vmatpush1.bf16.msra.mxu0 0
  %3898 = vmatprep.subr.bf16.mxu0 0
  %3899 = vmatpush1.bf16.msra.mxu0 0
  %3900 = vmatprep.subr.bf16.mxu0 0
  %3901 = vmatpush1.bf16.msra.mxu0 0
  %3902 = vmatprep.subr.bf16.mxu0 0
  %3903 = vmatpush1.bf16.msra.mxu0 0
  %3904 = vmatprep.subr.bf16.mxu0 0
  %3905 = vmatpush1.bf16.msra.mxu0 0
  %3906 = vmatprep.subr.bf16.mxu0 0
  %3907 = vmatpush1.bf16.msra.mxu0 0
  %3908 = vmatprep.subr.bf16.mxu0 0
  %3909 = vmatpush1.bf16.msra.mxu0 0
  %3910 = vmatprep.mubr.bf16.mxu0 0
  %3911 = vmatmul.mubr.bf16.gmra.mrb[0].mxu0 %v3829
  %v3912 = vpop.f32.mrb[0].mxu0
  %v3913 = vadd.f32 0.0, %v3912
  %v3914 = vpop.f32.mrb[0].mxu0
  %v3915 = vpop.f32.mrb[0].mxu0
  %v3916 = vpop.f32.mrb[0].mxu0
  %3917 = vdwg.mxu0
  %v3918 = vmul.f32 %v3913, %v3913
  %v3920 = vrot.slane %v3918, 7
  %v3922 = vsub.f32 %v3913, %v3920
  %v3923 = vadd.f32 %v3922, 1e-05
  %v3924 = vrsqrt.pop %v3923
  %v3925 = vld [vmem:[%s6 + $0x430] sm:$0x1]
  %v3926 = vunpack.c.l.bf16 %v3925
  %v3927 = vlaneseq
  %v3928 = vshrl.u32 %v3927, 7
  %v3929 = vsub.s32 0, %v3928
  %v3930 = vrot.slane %v3913, %v3929
  %v3931 = vsub.f32 %v3790, %v3930
  %v3932 = vsub.f32 %v3793, %v3930
  %v3933 = vlaneseq
  %v3934 = vshrl.u32 %v3933, 7
  %v3935 = vsub.s32 1, %v3934
  %v3936 = vrot.slane %v3924, %v3935
  %v3937 = vmul.f32 %v3931, %v3936
  %v3938 = vmul.f32 %v3932, %v3936
  %v3939 = vlaneseq
  %v3940 = vshrl.u32 %v3939, 7
  %v3941 = vsub.s32 0, %v3940
  %v3942 = vrot.slane %v3926, %v3941
  %v3943 = vmul.f32 %v3937, %v3942
  %v3944 = vmul.f32 %v3938, %v3942
  %v3945 = vlaneseq
  %v3946 = vshrl.u32 %v3945, 7
  %v3947 = vsub.s32 1, %v3946
  %v3948 = vrot.slane %v3926, %v3947
  %v3949 = vadd.f32 %v3943, %v3948
  %v3950 = vadd.f32 %v3944, %v3948
  %v3951 = vmax.f32 %v3949, 0.0
  %v3952 = vmax.f32 %v3950, 0.0
  %3953 = vst [vmem:[%s8] sm:$0xff] %v3951
  %3954 = vst [vmem:[%s8 + $0x8] sm:$0xff] %v3952
  // Predicated region
  $region34: #{forward.1} parent=0 // pred_check
    _
  $region35: #{forward.1} parent=0 // pred_check_branch
    %3956 = sbr.rel (0) target = $region37
  $region36: #{forward.1} parent=0 // pred_region
    _
  $region37: #{forward.1} parent=0 // pred_fallthru
    _
  // Predicated region
  $region38: #{forward.1} parent=0 // pred_check
    _
  $region39: #{forward.1} parent=0 // pred_check_branch
    %3958 = sbr.rel (0) target = $region41
  $region40: #{forward.1} parent=0 // pred_region
    _
  $region41: #{forward.1} parent=0 // pred_fallthru
    _

</llo_original>
